<compile_context>
chip_gen: v7x
topology: tpu7x:2x2x1
jax: 0.10.0
libtpu: 0.0.40
codegen_flags: <defaults>
</compile_context>

<pallas_src>
import math

import jax
import jax.numpy as jnp
from jax.experimental import pallas as pl
from jax.experimental.pallas import tpu as pltpu

SI_DIMS = [3, 128, 128, 128, 128]
ENC_DIMS = [[130, 128, 128, 128], [256, 128, 128, 128], [256, 128, 128, 16]]
DEC_DIMS = [145, 128, 128, 1]
BN_EPS = 1e-5
LATENT_C = 16

N_SI_W = 8     # 4 layers * (W, b)
N_ENC_W = 18   # 3 blocks * 3 layers * (W, b)   (BatchNorm folded into W, b)
N_DEC_W = 6    # 3 layers * (W, b)

# ---- packed-weight slab indices -------------------------------------------
(M_SI_W2, M_SI_W3, M_SI_W4,
 M_ENC00_SI, M_ENC01, M_ENC02,
 M_ENC10_LAT, M_ENC10_LOC, M_ENC11, M_ENC12,
 M_ENC20_LAT, M_ENC20_LOC, M_ENC21, M_ENC22,
 M_DEC0_SI, M_DEC0_LAT, M_DEC1) = range(17)
N_MATS = 17

R_SI_W1 = 0                      # rows 0..2 hold the (3,128) first SI weight
(R_SI_B1, R_SI_B2, R_SI_B3, R_SI_B4,
 R_ENC00_B, R_ENC00_BVAL, R_ENC00_SIG,
 R_ENC01_B, R_ENC02_B,
 R_ENC10_B, R_ENC11_B, R_ENC12_B,
 R_ENC20_B, R_ENC21_B, R_ENC22_B,
 R_DEC0_B, R_DEC0_BVAL, R_DEC1_B,
 R_DEC2_W, R_DEC2_B) = range(3, 23)
N_ROWS = 23


# --------------------------------------------------------------------------
# deterministic parameter init (synthetic weights)
# --------------------------------------------------------------------------
def _conv(key, cin, cout):
    kw, kb = jax.random.split(key)
    w = jax.random.normal(kw, (cin, cout), jnp.float32) / math.sqrt(cin)
    b = 0.05 * jax.random.normal(kb, (1, cout), jnp.float32)
    return w, b


def _bn_affine(key, c):
    k1, k2, k3, k4 = jax.random.split(key, 4)
    gamma = 1.0 + 0.1 * jax.random.normal(k1, (1, c), jnp.float32)
    beta = 0.1 * jax.random.normal(k2, (1, c), jnp.float32)
    mean = 0.1 * jax.random.normal(k3, (1, c), jnp.float32)
    var = 1.0 + 0.1 * jax.random.uniform(k4, (1, c), dtype=jnp.float32)
    scale = gamma / jnp.sqrt(var + BN_EPS)
    shift = beta - mean * scale
    return scale, shift


def init_params(key):
    """Flat list of weight arrays in (W, b) order per layer."""
    params = []
    for i in range(4):                                # side-information MLP
        key, k = jax.random.split(key)
        w, b = _conv(k, SI_DIMS[i], SI_DIMS[i + 1])
        params += [w, b]
    # encoder: 1x1 conv + BatchNorm.
    # TODO(synk): PyTorch default is train-mode BN (batch statistics); here BN
    # is applied in inference mode (running stats folded into the conv W, b).
    for blk in range(3):
        dims = ENC_DIMS[blk]
        for lyr in range(3):
            key, k1, k2 = jax.random.split(key, 3)
            w, b = _conv(k1, dims[lyr], dims[lyr + 1])
            scale, shift = _bn_affine(k2, dims[lyr + 1])
            params += [w * scale, b * scale + shift]
    for lyr in range(3):                              # decoder (no BN)
        key, k = jax.random.split(key)
        w, b = _conv(k, DEC_DIMS[lyr], DEC_DIMS[lyr + 1])
        params += [w, b]
    return params


# --------------------------------------------------------------------------
# weight packing: 32 tensors -> one bf16 matrix slab + one f32 row slab
# --------------------------------------------------------------------------
def pack_params(params):
    (si_w1, si_b1, si_w2, si_b2, si_w3, si_b3, si_w4, si_b4,
     e00w, e00b, e01w, e01b, e02w, e02b,
     e10w, e10b, e11w, e11b, e12w, e12b,
     e20w, e20b, e21w, e21b, e22w, e22b,
     d0w, d0b, d1w, d1b, d2w, d2b) = params

    pad_cols = lambda a: jnp.pad(a, ((0, 0), (0, 128 - a.shape[1])))
    pad_rows = lambda a: jnp.pad(a, ((0, 128 - a.shape[0]), (0, 0)))
    # bf16-round the columns that the MXU-side reference rounds, so the
    # kernel's f32 VPU rank-1 path uses identical weight values.
    rb = lambda a: a.astype(jnp.bfloat16).astype(jnp.float32)

    mats = jnp.stack([
        si_w2, si_w3, si_w4,
        e00w[:128], e01w, e02w,
        e10w[:128], e10w[128:], e11w, e12w,
        e20w[:128], e20w[128:], e21w, pad_cols(e22w),    # (128,16) -> (128,128)
        d0w[16:144], pad_rows(d0w[:16]), d1w,            # (16,128) -> (128,128)
    ]).astype(jnp.bfloat16)                              # (17, 128, 128)

    rows = jnp.concatenate([
        si_w1,                                           # rows 0..2
        si_b1, si_b2, si_b3, si_b4,
        e00b, rb(e00w[128:129]), rb(e00w[129:130]),
        e01b, e02b,
        e10b, e11b, e12b,
        e20b, e21b, pad_cols(e22b),
        d0b, rb(d0w[144:145]), d1b,
        rb(d2w.T), jnp.full((1, 128), d2b[0, 0], jnp.float32),
    ], axis=0).astype(jnp.float32)                       # (23, 128)
    return mats, rows


# --------------------------------------------------------------------------
# Pallas kernel: TB batch elements per grid step
# --------------------------------------------------------------------------
def discus_kernel(obs_bvecs_ref, obs_bvals_ref, obs_signals_ref, mask_ref,
                  q_bvecs_ref, q_bvals_ref, mats_ref, rows_ref,
                  latent_ref, signals_ref):
    f32, bf16 = jnp.float32, jnp.bfloat16
    tb, n_obs, _ = obs_bvecs_ref.shape
    _, n_q, _ = q_bvecs_ref.shape
    m_obs, m_q = tb * n_obs, tb * n_q
    m_all = m_obs + m_q

    mat = lambda i: mats_ref[i]                       # (128, 128) bf16
    row = lambda i: rows_ref[i:i + 1, :]              # (1, 128)   f32
    relu = lambda v: jnp.maximum(v, 0.0)

    def dot(a, b):                                    # MXU: bf16 in, f32 acc
        return jnp.dot(a.astype(bf16), b.astype(bf16),
                       preferred_element_type=f32)

    def pdot(x3, w):                                  # (tb, n, 128)@(128, c)
        n = x3.shape[1]
        return dot(x3.reshape(tb * n, x3.shape[2]), w).reshape(tb, n, -1)

    # ---- side-information MLP on [obs ; query] bvecs, x/-x share layer 1 ----
    bvec = jnp.concatenate(
        [obs_bvecs_ref[...].reshape(m_obs, 3),
         q_bvecs_ref[...].reshape(m_q, 3)], axis=0)                 # (m_all, 3)
    t = dot(bvec, rows_ref[R_SI_W1:R_SI_W1 + 3, :])                 # (m_all,128)
    b1 = row(R_SI_B1)
    h = jnp.concatenate([relu(t + b1), relu(-t + b1)], axis=0)      # (2*m_all,·)
    for li in range(3):
        h = relu(dot(h, mat(M_SI_W2 + li)) + row(R_SI_B2 + li))
    si_all = h[:m_all] + h[m_all:]                                  # (m_all,128)
    obs_si = si_all[:m_obs]                                         # (m_obs,128)
    q_si3 = si_all[m_obs:].reshape(tb, n_q, 128)

    # ---- encoder -------------------------------------------------------------
    # block 0 layer 0: K=130 split -> K=128 MXU pass + two rank-1 VPU updates
    pre = dot(obs_si, mat(M_ENC00_SI)).reshape(tb, n_obs, 128)
    pre = (pre + obs_bvals_ref[...] * row(R_ENC00_BVAL)
               + obs_signals_ref[...] * row(R_ENC00_SIG) + row(R_ENC00_B))
    x3 = jnp.tanh(pre)
    x3 = jnp.tanh(pdot(x3, mat(M_ENC01)) + row(R_ENC01_B))
    x3 = jnp.tanh(pdot(x3, mat(M_ENC02)) + row(R_ENC02_B))
    mask3 = mask_ref[...]                                           # (tb,n_obs,1)
    latent = jnp.max(x3 - 2.0 * mask3, axis=1)                      # (tb, 128)

    # block 1: latent contribution computed once per batch element, added as bias
    lat_c = dot(latent, mat(M_ENC10_LAT))                           # (tb, 128)
    x3 = jnp.tanh(pdot(x3, mat(M_ENC10_LOC)) + lat_c[:, None, :] + row(R_ENC10_B))
    x3 = jnp.tanh(pdot(x3, mat(M_ENC11)) + row(R_ENC11_B))
    x3 = jnp.tanh(pdot(x3, mat(M_ENC12)) + row(R_ENC12_B))
    latent = jnp.max(x3 - 2.0 * mask3, axis=1)

    # block 2 (last layer's 16 outputs zero-padded to 128 lanes; pad lanes stay 0
    # before the max-pool and are killed by zero rows in the decoder weight)
    lat_c = dot(latent, mat(M_ENC20_LAT))
    x3 = jnp.tanh(pdot(x3, mat(M_ENC20_LOC)) + lat_c[:, None, :] + row(R_ENC20_B))
    x3 = jnp.tanh(pdot(x3, mat(M_ENC21)) + row(R_ENC21_B))
    x3 = jnp.tanh(pdot(x3, mat(M_ENC22)) + row(R_ENC22_B))
    latent = jnp.max(x3 - 2.0 * mask3, axis=1)                      # (tb, 128)
    latent_ref[0] = latent[:, :LATENT_C]

    # ---- decoder -------------------------------------------------------------
    lat_c = dot(latent, mat(M_DEC0_LAT))           # rows >=16 of the weight are 0
    y3 = relu(pdot(q_si3, mat(M_DEC0_SI)) + lat_c[:, None, :]
              + q_bvals_ref[...] * row(R_DEC0_BVAL) + row(R_DEC0_B))
    y3 = relu(pdot(y3, mat(M_DEC1)) + row(R_DEC1_B))
    # final Cout=1 layer as VPU multiply + lane reduce -> lane-dense (tb, n_q)
    sig = jnp.sum(y3 * row(R_DEC2_W), axis=-1)
    sig = sig + rows_ref[R_DEC2_B:R_DEC2_B + 1, 0:1]
    signals_ref[0] = sig


# --------------------------------------------------------------------------
# wrapper: NCL (PyTorch) -> (B, N, C), pallas_call, reshape-only back to NCL
# --------------------------------------------------------------------------
def discus_forward(params, observation_bvecs, observation_bvals,
                   observation_signals, mask, query_bvecs, query_bvals,
                   batch_tile=None):
    f32 = jnp.float32
    mats, rows = pack_params(params)

    obs_bvecs = jnp.transpose(observation_bvecs, (0, 2, 1)).astype(f32)
    q_bvecs = jnp.transpose(query_bvecs, (0, 2, 1)).astype(f32)
    # C==1 tensors: (B,1,N) -> (B,N,1) is a pure reshape, no transpose op
    r1 = lambda a: jnp.reshape(a.astype(f32), (a.shape[0], a.shape[2], 1))
    obs_bvals, obs_signals = r1(observation_bvals), r1(observation_signals)
    mask_b, q_bvals = r1(mask), r1(query_bvals)

    B, n_obs, _ = obs_bvecs.shape
    _, n_q, _ = q_bvecs.shape
    # default: whole batch in one grid step (single-TC chips). On v7x, pass
    # batch_tile = B // 2 so the grid has >= 2 steps and both TensorCores work.
    tb = batch_tile if batch_tile is not None else B
    assert B % tb == 0, "batch_tile must divide the batch size"
    G = B // tb

    dspec = lambda n, c: pl.BlockSpec((tb, n, c), lambda g: (g, 0, 0))
    in_specs = [dspec(n_obs, 3), dspec(n_obs, 1), dspec(n_obs, 1), dspec(n_obs, 1),
                dspec(n_q, 3), dspec(n_q, 1),
                pl.BlockSpec(mats.shape, lambda g: (0, 0, 0)),
                pl.BlockSpec(rows.shape, lambda g: (0, 0))]
    out_shape = (jax.ShapeDtypeStruct((G, tb, LATENT_C), f32),
                 jax.ShapeDtypeStruct((G, tb, n_q), f32))
    out_specs = (pl.BlockSpec((1, tb, LATENT_C), lambda g: (g, 0, 0)),
                 pl.BlockSpec((1, tb, n_q), lambda g: (g, 0, 0)))

    latent, signals = pl.pallas_call(
        discus_kernel,
        out_shape=out_shape,
        grid_spec=pltpu.PrefetchScalarGridSpec(
            num_scalar_prefetch=0,
            grid=(G,),
            in_specs=in_specs,
            out_specs=out_specs,
        ),
        compiler_params=pltpu.CompilerParams(
            dimension_semantics=("parallel",)),
    )(obs_bvecs, obs_bvals, obs_signals, mask_b, q_bvecs, q_bvals, mats, rows)

    # back to PyTorch conventions — both are pure reshapes, no transposes
    return latent.reshape(B, LATENT_C, 1), signals.reshape(B, 1, n_q)


# --------------------------------------------------------------------------
# plain-JAX reference: original concat/broadcast structure of the module,
# with the same bf16-operand / f32-accumulate matmul policy as the kernel.
# --------------------------------------------------------------------------
def discus_reference(params, observation_bvecs, observation_bvals,
                     observation_signals, mask, query_bvecs, query_bvals):
    to_bnc = lambda a: jnp.transpose(a, (0, 2, 1)).astype(jnp.float32)
    obs_bvecs, obs_bvals = to_bnc(observation_bvecs), to_bnc(observation_bvals)
    obs_signals, m = to_bnc(observation_signals), to_bnc(mask)
    q_bvecs, q_bvals = to_bnc(query_bvecs), to_bnc(query_bvals)
    si_w = params[:N_SI_W]
    enc_w = params[N_SI_W:N_SI_W + N_ENC_W]
    dec_w = params[N_SI_W + N_ENC_W:]

    def dot(a, b):
        return jnp.dot(a.astype(jnp.bfloat16), b.astype(jnp.bfloat16),
                       preferred_element_type=jnp.float32)

    def si(x):
        def branch(h):
            for i in range(4):
                h = jnp.maximum(dot(h, si_w[2 * i]) + si_w[2 * i + 1], 0.0)
            return h
        return branch(x) + branch(-x)

    x = jnp.concatenate([si(obs_bvecs), obs_bvals, obs_signals], axis=-1)
    latent = None
    for blk in range(3):
        for lyr in range(3):
            idx = 2 * (blk * 3 + lyr)
            x = jnp.tanh(dot(x, enc_w[idx]) + enc_w[idx + 1])
        local = x
        latent = jnp.max(local - 2.0 * m, axis=1, keepdims=True)
        x = jnp.concatenate([jnp.broadcast_to(latent, local.shape), local],
                            axis=-1)
    query = jnp.concatenate([si(q_bvecs), q_bvals], axis=-1)
    nq = query.shape[1]
    y = jnp.concatenate(
        [jnp.broadcast_to(latent, (latent.shape[0], nq, latent.shape[2])),
         query], axis=-1)
    y = jnp.maximum(dot(y, dec_w[0]) + dec_w[1], 0.0)
    y = jnp.maximum(dot(y, dec_w[2]) + dec_w[3], 0.0)
    y = dot(y, dec_w[4]) + dec_w[5]
    return jnp.transpose(latent, (0, 2, 1)), jnp.transpose(y, (0, 2, 1))


if __name__ == "__main__":
    key = jax.random.PRNGKey(0)
    kp, kd = jax.random.split(key)
    params = init_params(kp)

    B, N_OBS, N_Q = 2, 16, 8
    ks = jax.random.split(kd, 6)
    observation_bvecs = jax.random.normal(ks[0], (B, 3, N_OBS), jnp.float32)
    observation_bvals = jax.random.normal(ks[1], (B, 1, N_OBS), jnp.float32)
    observation_signals = jax.random.normal(ks[2], (B, 1, N_OBS), jnp.float32)
    mask = (jax.random.uniform(ks[3], (B, 1, N_OBS)) < 0.25).astype(jnp.float32)
    query_bvecs = jax.random.normal(ks[4], (B, 3, N_Q), jnp.float32)
    query_bvals = jax.random.normal(ks[5], (B, 1, N_Q), jnp.float32)

    latent, signals = discus_forward(
        params, observation_bvecs, observation_bvals, observation_signals,
        mask, query_bvecs, query_bvals)
    jax.block_until_ready((latent, signals))

    ref_latent, ref_signals = discus_reference(
        params, observation_bvecs, observation_bvals, observation_signals,
        mask, query_bvecs, query_bvals)

    assert latent.shape == (B, LATENT_C, 1), latent.shape
    assert signals.shape == (B, 1, N_Q), signals.shape
    assert jnp.allclose(latent, ref_latent, atol=1e-2, rtol=1e-2)
    assert jnp.allclose(signals, ref_signals, atol=1e-2, rtol=1e-2)
    print("KERNEL_OK")
</pallas_src>

<mosaic_0001>
module attributes {stable_mosaic.version = 11 : i64} {
  func.func @discus_kernel(%arg0: i32, %arg1: memref<2x16x3xf32, #tpu.memory_space<vmem>>, %arg2: memref<2x16x1xf32, #tpu.memory_space<vmem>>, %arg3: memref<2x16x1xf32, #tpu.memory_space<vmem>>, %arg4: memref<2x16x1xf32, #tpu.memory_space<vmem>>, %arg5: memref<2x8x3xf32, #tpu.memory_space<vmem>>, %arg6: memref<2x8x1xf32, #tpu.memory_space<vmem>>, %arg7: memref<17x128x128xbf16, #tpu.memory_space<vmem>>, %arg8: memref<23x128xf32, #tpu.memory_space<vmem>>, %arg9: memref<1x2x16xf32, #tpu.memory_space<vmem>>, %arg10: memref<1x2x8xf32, #tpu.memory_space<vmem>>) attributes {dimension_semantics = [#tpu.dimension_semantics<parallel>], iteration_bounds = array<i64: 1>, scalar_prefetch = 0 : i64, scratch_operands = 0 : i64, tpu.core_type = #tpu.core_type<tc>, window_params = [{transform_indices = @transform_0, window_bounds = array<i64: 2, 16, 3>}, {transform_indices = @transform_1, window_bounds = array<i64: 2, 16, 1>}, {transform_indices = @transform_2, window_bounds = array<i64: 2, 16, 1>}, {transform_indices = @transform_3, window_bounds = array<i64: 2, 16, 1>}, {transform_indices = @transform_4, window_bounds = array<i64: 2, 8, 3>}, {transform_indices = @transform_5, window_bounds = array<i64: 2, 8, 1>}, {pipeline_mode = #tpu.pipeline_mode<synchronous>, transform_indices = @transform_6, window_bounds = array<i64: 17, 128, 128>}, {pipeline_mode = #tpu.pipeline_mode<synchronous>, transform_indices = @transform_7, window_bounds = array<i64: 23, 128>}, {transform_indices = @transform_8, window_bounds = array<i64: 1, 2, 16>}, {transform_indices = @transform_9, window_bounds = array<i64: 1, 2, 8>}]} {
    %c0 = arith.constant 0 : index
    %c0_0 = arith.constant 0 : index
    %c0_1 = arith.constant 0 : index
    %0 = vector.load %arg1[%c0, %c0_0, %c0_1] : memref<2x16x3xf32, #tpu.memory_space<vmem>>, vector<2x16x3xf32>
    %1 = vector.shape_cast %0 : vector<2x16x3xf32> to vector<32x3xf32>
    %c0_2 = arith.constant 0 : index
    %c0_3 = arith.constant 0 : index
    %c0_4 = arith.constant 0 : index
    %2 = vector.load %arg5[%c0_2, %c0_3, %c0_4] : memref<2x8x3xf32, #tpu.memory_space<vmem>>, vector<2x8x3xf32>
    %3 = vector.shape_cast %2 : vector<2x8x3xf32> to vector<16x3xf32>
    %4 = tpu.concatenate %1, %3 in 0 : vector<32x3xf32>, vector<16x3xf32> -> vector<48x3xf32>
    %c0_5 = arith.constant 0 : index
    %c0_6 = arith.constant 0 : index
    %5 = vector.load %arg8[%c0_5, %c0_6] : memref<23x128xf32, #tpu.memory_space<vmem>>, vector<3x128xf32>
    %6 = arith.truncf %4 : vector<48x3xf32> to vector<48x3xbf16>
    %7 = arith.truncf %5 : vector<3x128xf32> to vector<3x128xbf16>
    %cst = arith.constant dense<0.000000e+00> : vector<48x128xf32>
    %8 = tpu.matmul %6, %7, %cst {dimension_numbers = #tpu.dot_dimension_numbers<[1], [0], [0], [1], [0, 0, 1, 1], [], []>} : vector<48x3xbf16>, vector<3x128xbf16>, vector<48x128xf32> -> vector<48x128xf32>
    %c3 = arith.constant 3 : index
    %c0_7 = arith.constant 0 : index
    %9 = vector.load %arg8[%c3, %c0_7] : memref<23x128xf32, #tpu.memory_space<vmem>>, vector<1x128xf32>
    %10 = vector.broadcast %9 : vector<1x128xf32> to vector<48x128xf32>
    %11 = arith.addf %8, %10 : vector<48x128xf32>
    %cst_8 = arith.constant 0.000000e+00 : f32
    %12 = vector.broadcast %cst_8 : f32 to vector<48x128xf32>
    %13 = arith.maximumf %11, %12 : vector<48x128xf32>
    %cst_9 = arith.constant 0.000000e+00 : f32
    %14 = vector.broadcast %cst_9 : f32 to vector<48x128xf32>
    %15 = arith.subf %14, %8 : vector<48x128xf32>
    %16 = vector.broadcast %9 : vector<1x128xf32> to vector<48x128xf32>
    %17 = arith.addf %15, %16 : vector<48x128xf32>
    %cst_10 = arith.constant 0.000000e+00 : f32
    %18 = vector.broadcast %cst_10 : f32 to vector<48x128xf32>
    %19 = arith.maximumf %17, %18 : vector<48x128xf32>
    %20 = tpu.concatenate %13, %19 in 0 : vector<48x128xf32>, vector<48x128xf32> -> vector<96x128xf32>
    %c0_11 = arith.constant 0 : index
    %c0_12 = arith.constant 0 : index
    %c0_13 = arith.constant 0 : index
    %21 = vector.load %arg7[%c0_11, %c0_12, %c0_13] : memref<17x128x128xbf16, #tpu.memory_space<vmem>>, vector<1x128x128xbf16>
    %22 = vector.shape_cast %21 : vector<1x128x128xbf16> to vector<128x128xbf16>
    %23 = arith.truncf %20 : vector<96x128xf32> to vector<96x128xbf16>
    %cst_14 = arith.constant dense<0.000000e+00> : vector<96x128xf32>
    %24 = tpu.matmul %23, %22, %cst_14 {dimension_numbers = #tpu.dot_dimension_numbers<[1], [0], [0], [1], [0, 0, 1, 1], [], []>} : vector<96x128xbf16>, vector<128x128xbf16>, vector<96x128xf32> -> vector<96x128xf32>
    %c4 = arith.constant 4 : index
    %c0_15 = arith.constant 0 : index
    %25 = vector.load %arg8[%c4, %c0_15] : memref<23x128xf32, #tpu.memory_space<vmem>>, vector<1x128xf32>
    %26 = vector.broadcast %25 : vector<1x128xf32> to vector<96x128xf32>
    %27 = arith.addf %24, %26 : vector<96x128xf32>
    %cst_16 = arith.constant 0.000000e+00 : f32
    %28 = vector.broadcast %cst_16 : f32 to vector<96x128xf32>
    %29 = arith.maximumf %27, %28 : vector<96x128xf32>
    %c1 = arith.constant 1 : index
    %c0_17 = arith.constant 0 : index
    %c0_18 = arith.constant 0 : index
    %30 = vector.load %arg7[%c1, %c0_17, %c0_18] : memref<17x128x128xbf16, #tpu.memory_space<vmem>>, vector<1x128x128xbf16>
    %31 = vector.shape_cast %30 : vector<1x128x128xbf16> to vector<128x128xbf16>
    %32 = arith.truncf %29 : vector<96x128xf32> to vector<96x128xbf16>
    %cst_19 = arith.constant dense<0.000000e+00> : vector<96x128xf32>
    %33 = tpu.matmul %32, %31, %cst_19 {dimension_numbers = #tpu.dot_dimension_numbers<[1], [0], [0], [1], [0, 0, 1, 1], [], []>} : vector<96x128xbf16>, vector<128x128xbf16>, vector<96x128xf32> -> vector<96x128xf32>
    %c5 = arith.constant 5 : index
    %c0_20 = arith.constant 0 : index
    %34 = vector.load %arg8[%c5, %c0_20] : memref<23x128xf32, #tpu.memory_space<vmem>>, vector<1x128xf32>
    %35 = vector.broadcast %34 : vector<1x128xf32> to vector<96x128xf32>
    %36 = arith.addf %33, %35 : vector<96x128xf32>
    %cst_21 = arith.constant 0.000000e+00 : f32
    %37 = vector.broadcast %cst_21 : f32 to vector<96x128xf32>
    %38 = arith.maximumf %36, %37 : vector<96x128xf32>
    %c2 = arith.constant 2 : index
    %c0_22 = arith.constant 0 : index
    %c0_23 = arith.constant 0 : index
    %39 = vector.load %arg7[%c2, %c0_22, %c0_23] : memref<17x128x128xbf16, #tpu.memory_space<vmem>>, vector<1x128x128xbf16>
    %40 = vector.shape_cast %39 : vector<1x128x128xbf16> to vector<128x128xbf16>
    %41 = arith.truncf %38 : vector<96x128xf32> to vector<96x128xbf16>
    %cst_24 = arith.constant dense<0.000000e+00> : vector<96x128xf32>
    %42 = tpu.matmul %41, %40, %cst_24 {dimension_numbers = #tpu.dot_dimension_numbers<[1], [0], [0], [1], [0, 0, 1, 1], [], []>} : vector<96x128xbf16>, vector<128x128xbf16>, vector<96x128xf32> -> vector<96x128xf32>
    %c6 = arith.constant 6 : index
    %c0_25 = arith.constant 0 : index
    %43 = vector.load %arg8[%c6, %c0_25] : memref<23x128xf32, #tpu.memory_space<vmem>>, vector<1x128xf32>
    %44 = vector.broadcast %43 : vector<1x128xf32> to vector<96x128xf32>
    %45 = arith.addf %42, %44 : vector<96x128xf32>
    %cst_26 = arith.constant 0.000000e+00 : f32
    %46 = vector.broadcast %cst_26 : f32 to vector<96x128xf32>
    %47 = arith.maximumf %45, %46 : vector<96x128xf32>
    %48 = vector.extract_strided_slice %47 {offsets = [0, 0], sizes = [48, 128], strides = [1, 1]} : vector<96x128xf32> to vector<48x128xf32>
    %49 = vector.extract_strided_slice %47 {offsets = [48, 0], sizes = [48, 128], strides = [1, 1]} : vector<96x128xf32> to vector<48x128xf32>
    %50 = arith.addf %48, %49 : vector<48x128xf32>
    %51 = vector.extract_strided_slice %50 {offsets = [0, 0], sizes = [32, 128], strides = [1, 1]} : vector<48x128xf32> to vector<32x128xf32>
    %52 = vector.extract_strided_slice %50 {offsets = [32, 0], sizes = [16, 128], strides = [1, 1]} : vector<48x128xf32> to vector<16x128xf32>
    %53 = vector.shape_cast %52 : vector<16x128xf32> to vector<2x8x128xf32>
    %c3_27 = arith.constant 3 : index
    %c0_28 = arith.constant 0 : index
    %c0_29 = arith.constant 0 : index
    %54 = vector.load %arg7[%c3_27, %c0_28, %c0_29] : memref<17x128x128xbf16, #tpu.memory_space<vmem>>, vector<1x128x128xbf16>
    %55 = vector.shape_cast %54 : vector<1x128x128xbf16> to vector<128x128xbf16>
    %56 = arith.truncf %51 : vector<32x128xf32> to vector<32x128xbf16>
    %cst_30 = arith.constant dense<0.000000e+00> : vector<32x128xf32>
    %57 = tpu.matmul %56, %55, %cst_30 {dimension_numbers = #tpu.dot_dimension_numbers<[1], [0], [0], [1], [0, 0, 1, 1], [], []>} : vector<32x128xbf16>, vector<128x128xbf16>, vector<32x128xf32> -> vector<32x128xf32>
    %58 = vector.shape_cast %57 : vector<32x128xf32> to vector<2x16x128xf32>
    %c0_31 = arith.constant 0 : index
    %c0_32 = arith.constant 0 : index
    %c0_33 = arith.constant 0 : index
    %59 = vector.load %arg2[%c0_31, %c0_32, %c0_33] : memref<2x16x1xf32, #tpu.memory_space<vmem>>, vector<2x16x1xf32>
    %c8 = arith.constant 8 : index
    %c0_34 = arith.constant 0 : index
    %60 = vector.load %arg8[%c8, %c0_34] : memref<23x128xf32, #tpu.memory_space<vmem>>, vector<1x128xf32>
    %61 = vector.shape_cast %60 : vector<1x128xf32> to vector<1x1x128xf32>
    %62 = vector.broadcast %59 : vector<2x16x1xf32> to vector<2x16x128xf32>
    %63 = vector.broadcast %61 : vector<1x1x128xf32> to vector<2x16x128xf32>
    %64 = arith.mulf %62, %63 : vector<2x16x128xf32>
    %65 = arith.addf %58, %64 : vector<2x16x128xf32>
    %c0_35 = arith.constant 0 : index
    %c0_36 = arith.constant 0 : index
    %c0_37 = arith.constant 0 : index
    %66 = vector.load %arg3[%c0_35, %c0_36, %c0_37] : memref<2x16x1xf32, #tpu.memory_space<vmem>>, vector<2x16x1xf32>
    %c9 = arith.constant 9 : index
    %c0_38 = arith.constant 0 : index
    %67 = vector.load %arg8[%c9, %c0_38] : memref<23x128xf32, #tpu.memory_space<vmem>>, vector<1x128xf32>
    %68 = vector.shape_cast %67 : vector<1x128xf32> to vector<1x1x128xf32>
    %69 = vector.broadcast %66 : vector<2x16x1xf32> to vector<2x16x128xf32>
    %70 = vector.broadcast %68 : vector<1x1x128xf32> to vector<2x16x128xf32>
    %71 = arith.mulf %69, %70 : vector<2x16x128xf32>
    %72 = arith.addf %65, %71 : vector<2x16x128xf32>
    %c7 = arith.constant 7 : index
    %c0_39 = arith.constant 0 : index
    %73 = vector.load %arg8[%c7, %c0_39] : memref<23x128xf32, #tpu.memory_space<vmem>>, vector<1x128xf32>
    %74 = vector.shape_cast %73 : vector<1x128xf32> to vector<1x1x128xf32>
    %75 = vector.broadcast %74 : vector<1x1x128xf32> to vector<2x16x128xf32>
    %76 = arith.addf %72, %75 : vector<2x16x128xf32>
    %77 = math.tanh %76 : vector<2x16x128xf32>
    %c4_40 = arith.constant 4 : index
    %c0_41 = arith.constant 0 : index
    %c0_42 = arith.constant 0 : index
    %78 = vector.load %arg7[%c4_40, %c0_41, %c0_42] : memref<17x128x128xbf16, #tpu.memory_space<vmem>>, vector<1x128x128xbf16>
    %79 = vector.shape_cast %78 : vector<1x128x128xbf16> to vector<128x128xbf16>
    %80 = vector.shape_cast %77 : vector<2x16x128xf32> to vector<32x128xf32>
    %81 = arith.truncf %80 : vector<32x128xf32> to vector<32x128xbf16>
    %cst_43 = arith.constant dense<0.000000e+00> : vector<32x128xf32>
    %82 = tpu.matmul %81, %79, %cst_43 {dimension_numbers = #tpu.dot_dimension_numbers<[1], [0], [0], [1], [0, 0, 1, 1], [], []>} : vector<32x128xbf16>, vector<128x128xbf16>, vector<32x128xf32> -> vector<32x128xf32>
    %83 = vector.shape_cast %82 : vector<32x128xf32> to vector<2x16x128xf32>
    %c10 = arith.constant 10 : index
    %c0_44 = arith.constant 0 : index
    %84 = vector.load %arg8[%c10, %c0_44] : memref<23x128xf32, #tpu.memory_space<vmem>>, vector<1x128xf32>
    %85 = vector.shape_cast %84 : vector<1x128xf32> to vector<1x1x128xf32>
    %86 = vector.broadcast %85 : vector<1x1x128xf32> to vector<2x16x128xf32>
    %87 = arith.addf %83, %86 : vector<2x16x128xf32>
    %88 = math.tanh %87 : vector<2x16x128xf32>
    %c5_45 = arith.constant 5 : index
    %c0_46 = arith.constant 0 : index
    %c0_47 = arith.constant 0 : index
    %89 = vector.load %arg7[%c5_45, %c0_46, %c0_47] : memref<17x128x128xbf16, #tpu.memory_space<vmem>>, vector<1x128x128xbf16>
    %90 = vector.shape_cast %89 : vector<1x128x128xbf16> to vector<128x128xbf16>
    %91 = vector.shape_cast %88 : vector<2x16x128xf32> to vector<32x128xf32>
    %92 = arith.truncf %91 : vector<32x128xf32> to vector<32x128xbf16>
    %cst_48 = arith.constant dense<0.000000e+00> : vector<32x128xf32>
    %93 = tpu.matmul %92, %90, %cst_48 {dimension_numbers = #tpu.dot_dimension_numbers<[1], [0], [0], [1], [0, 0, 1, 1], [], []>} : vector<32x128xbf16>, vector<128x128xbf16>, vector<32x128xf32> -> vector<32x128xf32>
    %94 = vector.shape_cast %93 : vector<32x128xf32> to vector<2x16x128xf32>
    %c11 = arith.constant 11 : index
    %c0_49 = arith.constant 0 : index
    %95 = vector.load %arg8[%c11, %c0_49] : memref<23x128xf32, #tpu.memory_space<vmem>>, vector<1x128xf32>
    %96 = vector.shape_cast %95 : vector<1x128xf32> to vector<1x1x128xf32>
    %97 = vector.broadcast %96 : vector<1x1x128xf32> to vector<2x16x128xf32>
    %98 = arith.addf %94, %97 : vector<2x16x128xf32>
    %99 = math.tanh %98 : vector<2x16x128xf32>
    %c0_50 = arith.constant 0 : index
    %c0_51 = arith.constant 0 : index
    %c0_52 = arith.constant 0 : index
    %100 = vector.load %arg4[%c0_50, %c0_51, %c0_52] : memref<2x16x1xf32, #tpu.memory_space<vmem>>, vector<2x16x1xf32>
    %cst_53 = arith.constant 2.000000e+00 : f32
    %101 = vector.broadcast %cst_53 : f32 to vector<2x16x1xf32>
    %102 = arith.mulf %101, %100 : vector<2x16x1xf32>
    %103 = vector.broadcast %102 : vector<2x16x1xf32> to vector<2x16x128xf32>
    %104 = arith.subf %99, %103 : vector<2x16x128xf32>
    %cst_54 = arith.constant dense<0xFF800000> : vector<2x128xf32>
    %105 = vector.multi_reduction <maximumf>, %104, %cst_54 [1] : vector<2x16x128xf32> to vector<2x128xf32>
    %c6_55 = arith.constant 6 : index
    %c0_56 = arith.constant 0 : index
    %c0_57 = arith.constant 0 : index
    %106 = vector.load %arg7[%c6_55, %c0_56, %c0_57] : memref<17x128x128xbf16, #tpu.memory_space<vmem>>, vector<1x128x128xbf16>
    %107 = vector.shape_cast %106 : vector<1x128x128xbf16> to vector<128x128xbf16>
    %108 = arith.truncf %105 : vector<2x128xf32> to vector<2x128xbf16>
    %cst_58 = arith.constant dense<0.000000e+00> : vector<2x128xf32>
    %109 = tpu.matmul %108, %107, %cst_58 {dimension_numbers = #tpu.dot_dimension_numbers<[1], [0], [0], [1], [0, 0, 1, 1], [], []>} : vector<2x128xbf16>, vector<128x128xbf16>, vector<2x128xf32> -> vector<2x128xf32>
    %c7_59 = arith.constant 7 : index
    %c0_60 = arith.constant 0 : index
    %c0_61 = arith.constant 0 : index
    %110 = vector.load %arg7[%c7_59, %c0_60, %c0_61] : memref<17x128x128xbf16, #tpu.memory_space<vmem>>, vector<1x128x128xbf16>
    %111 = vector.shape_cast %110 : vector<1x128x128xbf16> to vector<128x128xbf16>
    %112 = vector.shape_cast %99 : vector<2x16x128xf32> to vector<32x128xf32>
    %113 = arith.truncf %112 : vector<32x128xf32> to vector<32x128xbf16>
    %cst_62 = arith.constant dense<0.000000e+00> : vector<32x128xf32>
    %114 = tpu.matmul %113, %111, %cst_62 {dimension_numbers = #tpu.dot_dimension_numbers<[1], [0], [0], [1], [0, 0, 1, 1], [], []>} : vector<32x128xbf16>, vector<128x128xbf16>, vector<32x128xf32> -> vector<32x128xf32>
    %115 = vector.shape_cast %114 : vector<32x128xf32> to vector<2x16x128xf32>
    %116 = vector.shape_cast %109 : vector<2x128xf32> to vector<2x1x128xf32>
    %117 = vector.broadcast %116 : vector<2x1x128xf32> to vector<2x16x128xf32>
    %118 = arith.addf %115, %117 : vector<2x16x128xf32>
    %c12 = arith.constant 12 : index
    %c0_63 = arith.constant 0 : index
    %119 = vector.load %arg8[%c12, %c0_63] : memref<23x128xf32, #tpu.memory_space<vmem>>, vector<1x128xf32>
    %120 = vector.shape_cast %119 : vector<1x128xf32> to vector<1x1x128xf32>
    %121 = vector.broadcast %120 : vector<1x1x128xf32> to vector<2x16x128xf32>
    %122 = arith.addf %118, %121 : vector<2x16x128xf32>
    %123 = math.tanh %122 : vector<2x16x128xf32>
    %c8_64 = arith.constant 8 : index
    %c0_65 = arith.constant 0 : index
    %c0_66 = arith.constant 0 : index
    %124 = vector.load %arg7[%c8_64, %c0_65, %c0_66] : memref<17x128x128xbf16, #tpu.memory_space<vmem>>, vector<1x128x128xbf16>
    %125 = vector.shape_cast %124 : vector<1x128x128xbf16> to vector<128x128xbf16>
    %126 = vector.shape_cast %123 : vector<2x16x128xf32> to vector<32x128xf32>
    %127 = arith.truncf %126 : vector<32x128xf32> to vector<32x128xbf16>
    %cst_67 = arith.constant dense<0.000000e+00> : vector<32x128xf32>
    %128 = tpu.matmul %127, %125, %cst_67 {dimension_numbers = #tpu.dot_dimension_numbers<[1], [0], [0], [1], [0, 0, 1, 1], [], []>} : vector<32x128xbf16>, vector<128x128xbf16>, vector<32x128xf32> -> vector<32x128xf32>
    %129 = vector.shape_cast %128 : vector<32x128xf32> to vector<2x16x128xf32>
    %c13 = arith.constant 13 : index
    %c0_68 = arith.constant 0 : index
    %130 = vector.load %arg8[%c13, %c0_68] : memref<23x128xf32, #tpu.memory_space<vmem>>, vector<1x128xf32>
    %131 = vector.shape_cast %130 : vector<1x128xf32> to vector<1x1x128xf32>
    %132 = vector.broadcast %131 : vector<1x1x128xf32> to vector<2x16x128xf32>
    %133 = arith.addf %129, %132 : vector<2x16x128xf32>
    %134 = math.tanh %133 : vector<2x16x128xf32>
    %c9_69 = arith.constant 9 : index
    %c0_70 = arith.constant 0 : index
    %c0_71 = arith.constant 0 : index
    %135 = vector.load %arg7[%c9_69, %c0_70, %c0_71] : memref<17x128x128xbf16, #tpu.memory_space<vmem>>, vector<1x128x128xbf16>
    %136 = vector.shape_cast %135 : vector<1x128x128xbf16> to vector<128x128xbf16>
    %137 = vector.shape_cast %134 : vector<2x16x128xf32> to vector<32x128xf32>
    %138 = arith.truncf %137 : vector<32x128xf32> to vector<32x128xbf16>
    %cst_72 = arith.constant dense<0.000000e+00> : vector<32x128xf32>
    %139 = tpu.matmul %138, %136, %cst_72 {dimension_numbers = #tpu.dot_dimension_numbers<[1], [0], [0], [1], [0, 0, 1, 1], [], []>} : vector<32x128xbf16>, vector<128x128xbf16>, vector<32x128xf32> -> vector<32x128xf32>
    %140 = vector.shape_cast %139 : vector<32x128xf32> to vector<2x16x128xf32>
    %c14 = arith.constant 14 : index
    %c0_73 = arith.constant 0 : index
    %141 = vector.load %arg8[%c14, %c0_73] : memref<23x128xf32, #tpu.memory_space<vmem>>, vector<1x128xf32>
    %142 = vector.shape_cast %141 : vector<1x128xf32> to vector<1x1x128xf32>
    %143 = vector.broadcast %142 : vector<1x1x128xf32> to vector<2x16x128xf32>
    %144 = arith.addf %140, %143 : vector<2x16x128xf32>
    %145 = math.tanh %144 : vector<2x16x128xf32>
    %cst_74 = arith.constant 2.000000e+00 : f32
    %146 = vector.broadcast %cst_74 : f32 to vector<2x16x1xf32>
    %147 = arith.mulf %146, %100 : vector<2x16x1xf32>
    %148 = vector.broadcast %147 : vector<2x16x1xf32> to vector<2x16x128xf32>
    %149 = arith.subf %145, %148 : vector<2x16x128xf32>
    %cst_75 = arith.constant dense<0xFF800000> : vector<2x128xf32>
    %150 = vector.multi_reduction <maximumf>, %149, %cst_75 [1] : vector<2x16x128xf32> to vector<2x128xf32>
    %c10_76 = arith.constant 10 : index
    %c0_77 = arith.constant 0 : index
    %c0_78 = arith.constant 0 : index
    %151 = vector.load %arg7[%c10_76, %c0_77, %c0_78] : memref<17x128x128xbf16, #tpu.memory_space<vmem>>, vector<1x128x128xbf16>
    %152 = vector.shape_cast %151 : vector<1x128x128xbf16> to vector<128x128xbf16>
    %153 = arith.truncf %150 : vector<2x128xf32> to vector<2x128xbf16>
    %cst_79 = arith.constant dense<0.000000e+00> : vector<2x128xf32>
    %154 = tpu.matmul %153, %152, %cst_79 {dimension_numbers = #tpu.dot_dimension_numbers<[1], [0], [0], [1], [0, 0, 1, 1], [], []>} : vector<2x128xbf16>, vector<128x128xbf16>, vector<2x128xf32> -> vector<2x128xf32>
    %c11_80 = arith.constant 11 : index
    %c0_81 = arith.constant 0 : index
    %c0_82 = arith.constant 0 : index
    %155 = vector.load %arg7[%c11_80, %c0_81, %c0_82] : memref<17x128x128xbf16, #tpu.memory_space<vmem>>, vector<1x128x128xbf16>
    %156 = vector.shape_cast %155 : vector<1x128x128xbf16> to vector<128x128xbf16>
    %157 = vector.shape_cast %145 : vector<2x16x128xf32> to vector<32x128xf32>
    %158 = arith.truncf %157 : vector<32x128xf32> to vector<32x128xbf16>
    %cst_83 = arith.constant dense<0.000000e+00> : vector<32x128xf32>
    %159 = tpu.matmul %158, %156, %cst_83 {dimension_numbers = #tpu.dot_dimension_numbers<[1], [0], [0], [1], [0, 0, 1, 1], [], []>} : vector<32x128xbf16>, vector<128x128xbf16>, vector<32x128xf32> -> vector<32x128xf32>
    %160 = vector.shape_cast %159 : vector<32x128xf32> to vector<2x16x128xf32>
    %161 = vector.shape_cast %154 : vector<2x128xf32> to vector<2x1x128xf32>
    %162 = vector.broadcast %161 : vector<2x1x128xf32> to vector<2x16x128xf32>
    %163 = arith.addf %160, %162 : vector<2x16x128xf32>
    %c15 = arith.constant 15 : index
    %c0_84 = arith.constant 0 : index
    %164 = vector.load %arg8[%c15, %c0_84] : memref<23x128xf32, #tpu.memory_space<vmem>>, vector<1x128xf32>
    %165 = vector.shape_cast %164 : vector<1x128xf32> to vector<1x1x128xf32>
    %166 = vector.broadcast %165 : vector<1x1x128xf32> to vector<2x16x128xf32>
    %167 = arith.addf %163, %166 : vector<2x16x128xf32>
    %168 = math.tanh %167 : vector<2x16x128xf32>
    %c12_85 = arith.constant 12 : index
    %c0_86 = arith.constant 0 : index
    %c0_87 = arith.constant 0 : index
    %169 = vector.load %arg7[%c12_85, %c0_86, %c0_87] : memref<17x128x128xbf16, #tpu.memory_space<vmem>>, vector<1x128x128xbf16>
    %170 = vector.shape_cast %169 : vector<1x128x128xbf16> to vector<128x128xbf16>
    %171 = vector.shape_cast %168 : vector<2x16x128xf32> to vector<32x128xf32>
    %172 = arith.truncf %171 : vector<32x128xf32> to vector<32x128xbf16>
    %cst_88 = arith.constant dense<0.000000e+00> : vector<32x128xf32>
    %173 = tpu.matmul %172, %170, %cst_88 {dimension_numbers = #tpu.dot_dimension_numbers<[1], [0], [0], [1], [0, 0, 1, 1], [], []>} : vector<32x128xbf16>, vector<128x128xbf16>, vector<32x128xf32> -> vector<32x128xf32>
    %174 = vector.shape_cast %173 : vector<32x128xf32> to vector<2x16x128xf32>
    %c16 = arith.constant 16 : index
    %c0_89 = arith.constant 0 : index
    %175 = vector.load %arg8[%c16, %c0_89] : memref<23x128xf32, #tpu.memory_space<vmem>>, vector<1x128xf32>
    %176 = vector.shape_cast %175 : vector<1x128xf32> to vector<1x1x128xf32>
    %177 = vector.broadcast %176 : vector<1x1x128xf32> to vector<2x16x128xf32>
    %178 = arith.addf %174, %177 : vector<2x16x128xf32>
    %179 = math.tanh %178 : vector<2x16x128xf32>
    %c13_90 = arith.constant 13 : index
    %c0_91 = arith.constant 0 : index
    %c0_92 = arith.constant 0 : index
    %180 = vector.load %arg7[%c13_90, %c0_91, %c0_92] : memref<17x128x128xbf16, #tpu.memory_space<vmem>>, vector<1x128x128xbf16>
    %181 = vector.shape_cast %180 : vector<1x128x128xbf16> to vector<128x128xbf16>
    %182 = vector.shape_cast %179 : vector<2x16x128xf32> to vector<32x128xf32>
    %183 = arith.truncf %182 : vector<32x128xf32> to vector<32x128xbf16>
    %cst_93 = arith.constant dense<0.000000e+00> : vector<32x128xf32>
    %184 = tpu.matmul %183, %181, %cst_93 {dimension_numbers = #tpu.dot_dimension_numbers<[1], [0], [0], [1], [0, 0, 1, 1], [], []>} : vector<32x128xbf16>, vector<128x128xbf16>, vector<32x128xf32> -> vector<32x128xf32>
    %185 = vector.shape_cast %184 : vector<32x128xf32> to vector<2x16x128xf32>
    %c17 = arith.constant 17 : index
    %c0_94 = arith.constant 0 : index
    %186 = vector.load %arg8[%c17, %c0_94] : memref<23x128xf32, #tpu.memory_space<vmem>>, vector<1x128xf32>
    %187 = vector.shape_cast %186 : vector<1x128xf32> to vector<1x1x128xf32>
    %188 = vector.broadcast %187 : vector<1x1x128xf32> to vector<2x16x128xf32>
    %189 = arith.addf %185, %188 : vector<2x16x128xf32>
    %190 = math.tanh %189 : vector<2x16x128xf32>
    %cst_95 = arith.constant 2.000000e+00 : f32
    %191 = vector.broadcast %cst_95 : f32 to vector<2x16x1xf32>
    %192 = arith.mulf %191, %100 : vector<2x16x1xf32>
    %193 = vector.broadcast %192 : vector<2x16x1xf32> to vector<2x16x128xf32>
    %194 = arith.subf %190, %193 : vector<2x16x128xf32>
    %cst_96 = arith.constant dense<0xFF800000> : vector<2x128xf32>
    %195 = vector.multi_reduction <maximumf>, %194, %cst_96 [1] : vector<2x16x128xf32> to vector<2x128xf32>
    %196 = vector.extract_strided_slice %195 {offsets = [0, 0], sizes = [2, 16], strides = [1, 1]} : vector<2x128xf32> to vector<2x16xf32>
    %c0_97 = arith.constant 0 : index
    %c0_98 = arith.constant 0 : index
    %c0_99 = arith.constant 0 : index
    %197 = vector.load %arg9[%c0_97, %c0_98, %c0_99] : memref<1x2x16xf32, #tpu.memory_space<vmem>>, vector<1x2x16xf32>
    %198 = vector.shape_cast %197 : vector<1x2x16xf32> to vector<2x16xf32>
    %199 = vector.shape_cast %196 : vector<2x16xf32> to vector<1x2x16xf32>
    tpu.vector_store %arg9[%c0_97, %c0_98, %c0_99], %199 {strides = array<i32>} : memref<1x2x16xf32, #tpu.memory_space<vmem>>, vector<1x2x16xf32>,
    %c15_100 = arith.constant 15 : index
    %c0_101 = arith.constant 0 : index
    %c0_102 = arith.constant 0 : index
    %200 = vector.load %arg7[%c15_100, %c0_101, %c0_102] : memref<17x128x128xbf16, #tpu.memory_space<vmem>>, vector<1x128x128xbf16>
    %201 = vector.shape_cast %200 : vector<1x128x128xbf16> to vector<128x128xbf16>
    %202 = arith.truncf %195 : vector<2x128xf32> to vector<2x128xbf16>
    %cst_103 = arith.constant dense<0.000000e+00> : vector<2x128xf32>
    %203 = tpu.matmul %202, %201, %cst_103 {dimension_numbers = #tpu.dot_dimension_numbers<[1], [0], [0], [1], [0, 0, 1, 1], [], []>} : vector<2x128xbf16>, vector<128x128xbf16>, vector<2x128xf32> -> vector<2x128xf32>
    %c14_104 = arith.constant 14 : index
    %c0_105 = arith.constant 0 : index
    %c0_106 = arith.constant 0 : index
    %204 = vector.load %arg7[%c14_104, %c0_105, %c0_106] : memref<17x128x128xbf16, #tpu.memory_space<vmem>>, vector<1x128x128xbf16>
    %205 = vector.shape_cast %204 : vector<1x128x128xbf16> to vector<128x128xbf16>
    %206 = vector.shape_cast %53 : vector<2x8x128xf32> to vector<16x128xf32>
    %207 = arith.truncf %206 : vector<16x128xf32> to vector<16x128xbf16>
    %cst_107 = arith.constant dense<0.000000e+00> : vector<16x128xf32>
    %208 = tpu.matmul %207, %205, %cst_107 {dimension_numbers = #tpu.dot_dimension_numbers<[1], [0], [0], [1], [0, 0, 1, 1], [], []>} : vector<16x128xbf16>, vector<128x128xbf16>, vector<16x128xf32> -> vector<16x128xf32>
    %209 = vector.shape_cast %208 : vector<16x128xf32> to vector<2x8x128xf32>
    %210 = vector.shape_cast %203 : vector<2x128xf32> to vector<2x1x128xf32>
    %211 = vector.broadcast %210 : vector<2x1x128xf32> to vector<2x8x128xf32>
    %212 = arith.addf %209, %211 : vector<2x8x128xf32>
    %c0_108 = arith.constant 0 : index
    %c0_109 = arith.constant 0 : index
    %c0_110 = arith.constant 0 : index
    %213 = vector.load %arg6[%c0_108, %c0_109, %c0_110] : memref<2x8x1xf32, #tpu.memory_space<vmem>>, vector<2x8x1xf32>
    %c19 = arith.constant 19 : index
    %c0_111 = arith.constant 0 : index
    %214 = vector.load %arg8[%c19, %c0_111] : memref<23x128xf32, #tpu.memory_space<vmem>>, vector<1x128xf32>
    %215 = vector.shape_cast %214 : vector<1x128xf32> to vector<1x1x128xf32>
    %216 = vector.broadcast %213 : vector<2x8x1xf32> to vector<2x8x128xf32>
    %217 = vector.broadcast %215 : vector<1x1x128xf32> to vector<2x8x128xf32>
    %218 = arith.mulf %216, %217 : vector<2x8x128xf32>
    %219 = arith.addf %212, %218 : vector<2x8x128xf32>
    %c18 = arith.constant 18 : index
    %c0_112 = arith.constant 0 : index
    %220 = vector.load %arg8[%c18, %c0_112] : memref<23x128xf32, #tpu.memory_space<vmem>>, vector<1x128xf32>
    %221 = vector.shape_cast %220 : vector<1x128xf32> to vector<1x1x128xf32>
    %222 = vector.broadcast %221 : vector<1x1x128xf32> to vector<2x8x128xf32>
    %223 = arith.addf %219, %222 : vector<2x8x128xf32>
    %cst_113 = arith.constant 0.000000e+00 : f32
    %224 = vector.broadcast %cst_113 : f32 to vector<2x8x128xf32>
    %225 = arith.maximumf %223, %224 : vector<2x8x128xf32>
    %c16_114 = arith.constant 16 : index
    %c0_115 = arith.constant 0 : index
    %c0_116 = arith.constant 0 : index
    %226 = vector.load %arg7[%c16_114, %c0_115, %c0_116] : memref<17x128x128xbf16, #tpu.memory_space<vmem>>, vector<1x128x128xbf16>
    %227 = vector.shape_cast %226 : vector<1x128x128xbf16> to vector<128x128xbf16>
    %228 = vector.shape_cast %225 : vector<2x8x128xf32> to vector<16x128xf32>
    %229 = arith.truncf %228 : vector<16x128xf32> to vector<16x128xbf16>
    %cst_117 = arith.constant dense<0.000000e+00> : vector<16x128xf32>
    %230 = tpu.matmul %229, %227, %cst_117 {dimension_numbers = #tpu.dot_dimension_numbers<[1], [0], [0], [1], [0, 0, 1, 1], [], []>} : vector<16x128xbf16>, vector<128x128xbf16>, vector<16x128xf32> -> vector<16x128xf32>
    %231 = vector.shape_cast %230 : vector<16x128xf32> to vector<2x8x128xf32>
    %c20 = arith.constant 20 : index
    %c0_118 = arith.constant 0 : index
    %232 = vector.load %arg8[%c20, %c0_118] : memref<23x128xf32, #tpu.memory_space<vmem>>, vector<1x128xf32>
    %233 = vector.shape_cast %232 : vector<1x128xf32> to vector<1x1x128xf32>
    %234 = vector.broadcast %233 : vector<1x1x128xf32> to vector<2x8x128xf32>
    %235 = arith.addf %231, %234 : vector<2x8x128xf32>
    %cst_119 = arith.constant 0.000000e+00 : f32
    %236 = vector.broadcast %cst_119 : f32 to vector<2x8x128xf32>
    %237 = arith.maximumf %235, %236 : vector<2x8x128xf32>
    %c21 = arith.constant 21 : index
    %c0_120 = arith.constant 0 : index
    %238 = vector.load %arg8[%c21, %c0_120] : memref<23x128xf32, #tpu.memory_space<vmem>>, vector<1x128xf32>
    %239 = vector.shape_cast %238 : vector<1x128xf32> to vector<1x1x128xf32>
    %240 = vector.broadcast %239 : vector<1x1x128xf32> to vector<2x8x128xf32>
    %241 = arith.mulf %237, %240 : vector<2x8x128xf32>
    %cst_121 = arith.constant dense<0.000000e+00> : vector<2x8xf32>
    %242 = vector.multi_reduction <add>, %241, %cst_121 [2] : vector<2x8x128xf32> to vector<2x8xf32>
    %c22 = arith.constant 22 : index
    %c0_122 = arith.constant 0 : index
    %243 = vector.load %arg8[%c22, %c0_122] : memref<23x128xf32, #tpu.memory_space<vmem>>, vector<1x1xf32>
    %244 = vector.broadcast %243 : vector<1x1xf32> to vector<2x8xf32>
    %245 = arith.addf %242, %244 : vector<2x8xf32>
    %c0_123 = arith.constant 0 : index
    %c0_124 = arith.constant 0 : index
    %c0_125 = arith.constant 0 : index
    %246 = vector.load %arg10[%c0_123, %c0_124, %c0_125] : memref<1x2x8xf32, #tpu.memory_space<vmem>>, vector<1x2x8xf32>
    %247 = vector.shape_cast %246 : vector<1x2x8xf32> to vector<2x8xf32>
    %248 = vector.shape_cast %245 : vector<2x8xf32> to vector<1x2x8xf32>
    tpu.vector_store %arg10[%c0_123, %c0_124, %c0_125], %248 {strides = array<i32>} : memref<1x2x8xf32, #tpu.memory_space<vmem>>, vector<1x2x8xf32>,
    return
  }
  func.func @transform_0(%arg0: i32) -> (i32, i32, i32) {
    %c0_i32 = arith.constant 0 : i32
    %c0_i32_0 = arith.constant 0 : i32
    %c0_i32_1 = arith.constant 0 : i32
    return %arg0, %c0_i32, %c0_i32_0 : i32, i32, i32
  }
  func.func @transform_1(%arg0: i32) -> (i32, i32, i32) {
    %c0_i32 = arith.constant 0 : i32
    %c0_i32_0 = arith.constant 0 : i32
    %c0_i32_1 = arith.constant 0 : i32
    return %arg0, %c0_i32, %c0_i32_0 : i32, i32, i32
  }
  func.func @transform_2(%arg0: i32) -> (i32, i32, i32) {
    %c0_i32 = arith.constant 0 : i32
    %c0_i32_0 = arith.constant 0 : i32
    %c0_i32_1 = arith.constant 0 : i32
    return %arg0, %c0_i32, %c0_i32_0 : i32, i32, i32
  }
  func.func @transform_3(%arg0: i32) -> (i32, i32, i32) {
    %c0_i32 = arith.constant 0 : i32
    %c0_i32_0 = arith.constant 0 : i32
    %c0_i32_1 = arith.constant 0 : i32
    return %arg0, %c0_i32, %c0_i32_0 : i32, i32, i32
  }
  func.func @transform_4(%arg0: i32) -> (i32, i32, i32) {
    %c0_i32 = arith.constant 0 : i32
    %c0_i32_0 = arith.constant 0 : i32
    %c0_i32_1 = arith.constant 0 : i32
    return %arg0, %c0_i32, %c0_i32_0 : i32, i32, i32
  }
  func.func @transform_5(%arg0: i32) -> (i32, i32, i32) {
    %c0_i32 = arith.constant 0 : i32
    %c0_i32_0 = arith.constant 0 : i32
    %c0_i32_1 = arith.constant 0 : i32
    return %arg0, %c0_i32, %c0_i32_0 : i32, i32, i32
  }
  func.func @transform_6(%arg0: i32) -> (i32, i32, i32) {
    %c0_i32 = arith.constant 0 : i32
    %c0_i32_0 = arith.constant 0 : i32
    %c0_i32_1 = arith.constant 0 : i32
    %c0_i32_2 = arith.constant 0 : i32
    return %c0_i32, %c0_i32_0, %c0_i32_1 : i32, i32, i32
  }
  func.func @transform_7(%arg0: i32) -> (i32, i32) {
    %c0_i32 = arith.constant 0 : i32
    %c0_i32_0 = arith.constant 0 : i32
    %c0_i32_1 = arith.constant 0 : i32
    return %c0_i32, %c0_i32_0 : i32, i32
  }
  func.func @transform_8(%arg0: i32) -> (i32, i32, i32) {
    %c0_i32 = arith.constant 0 : i32
    %c0_i32_0 = arith.constant 0 : i32
    %c0_i32_1 = arith.constant 0 : i32
    return %arg0, %c0_i32, %c0_i32_0 : i32, i32, i32
  }
  func.func @transform_9(%arg0: i32) -> (i32, i32, i32) {
    %c0_i32 = arith.constant 0 : i32
    %c0_i32_0 = arith.constant 0 : i32
    %c0_i32_1 = arith.constant 0 : i32
    return %arg0, %c0_i32, %c0_i32_0 : i32, i32, i32
  }
}

</mosaic_0001>

<llo_original>
// kernel: tpu_custom_call.1
$region0: #{tpu_custom_call.1}
  #allocation0 [shape = 'u32[]', space=smem, size = 0x4, offset = 0x4, fixed_abs, tag = 'smem constant byte address 0x4 - core index']
  #allocation1 [shape = 'u32[144,128]{1,0:T(1,128)}', space=vmem, size = 0x12000, scoped, tag = 'internal scratch']
  %s0 = inlined_call_operand.vmem [shape: f32[2,16,3], index: 0, kind: input, shape index: {}]
  %s1 = inlined_call_operand.vmem [shape: f32[2,16,1], index: 1, kind: input, shape index: {}]
  %s2 = inlined_call_operand.vmem [shape: f32[2,16,1], index: 2, kind: input, shape index: {}]
  %s3 = inlined_call_operand.vmem [shape: f32[2,16,1], index: 3, kind: input, shape index: {}]
  %s4 = inlined_call_operand.vmem [shape: f32[2,8,3], index: 4, kind: input, shape index: {}]
  %s5 = inlined_call_operand.vmem [shape: f32[2,8,1], index: 5, kind: input, shape index: {}]
  %s6 = inlined_call_operand.hbm [shape: bf16[17,128,128], index: 6, kind: input, shape index: {}]
  %s7 = inlined_call_operand.vmem [shape: f32[23,128], index: 7, kind: input, shape index: {}]
  %s8 = inlined_call_operand.hbm [shape: f32[1,2,16], index: 8, kind: output, shape index: {0}]
  %s9 = inlined_call_operand.hbm [shape: f32[1,2,8], index: 9, kind: output, shape index: {1}]
  %10 = xla_tuple %s8, %s9
  %s11 = sld [smem:[#allocation0]]
  $region54: #{tpu_custom_call.1} parent=0
    _
  %s13 = ssub.s32 1, %s11
  %s14 = scalar_select 0, %s13, %s11
  $region1: #{tpu_custom_call.1} parent=0
    #allocation2 [shape = 'u8[557056]{0}', space=vmem, size = 0x88000, scoped, tag = 'input window, operand 6, single buffered']
    #allocation3 [shape = 's32[1]{0}', space=sflag, size = 0x4, scoped, tag = 'scoped memory for tpu_custom_call.1']
    #allocation4 [shape = 's32[1]{0}', space=sflag, size = 0x4, scoped, tag = 'scoped memory for tpu_custom_call.1']
    #allocation5 [shape = 'u8[1024]{0}', space=vmem, size = 0x400, scoped, tag = 'output window, operand 0, single buffered']
    #allocation6 [shape = 'u8[1024]{0}', space=vmem, size = 0x400, scoped, tag = 'output window, operand 1, single buffered']
    #allocation7 [shape = 's32[1]{0}', space=sflag, size = 0x4, scoped, tag = 'scoped memory for tpu_custom_call.1']
    %15 = vsyncpa [#allocation3], 0
    %16 = vsyncpa [#allocation4], 0
    %17 = vsyncpa [#allocation7], 0
    // Predicated region
    $region2: #{tpu_custom_call.1} parent=1 // pred_check
      _
    $region3: #{tpu_custom_call.1} parent=1 // pred_check_branch
      %19 = sbr.rel (0) target = $region5
    $region4: #{tpu_custom_call.1} parent=1 // pred_region
      _
    $region5: #{tpu_custom_call.1} parent=1 // pred_fallthru
      _
    // Predicated region
    $region6: #{tpu_custom_call.1} parent=1 // pred_check
      _
    $region7: #{tpu_custom_call.1} parent=1 // pred_check_branch
      %21 = sbr.rel (0) target = $region9
    $region8: #{tpu_custom_call.1} parent=1 // pred_region
      _
    $region9: #{tpu_custom_call.1} parent=1 // pred_fallthru
      _
    // Predicated region
    $region10: #{tpu_custom_call.1} parent=1 // pred_check
      _
    $region11: #{tpu_custom_call.1} parent=1 // pred_check_branch
      %23 = sbr.rel (0) target = $region13
    $region12: #{tpu_custom_call.1} parent=1 // pred_region
      _
    $region13: #{tpu_custom_call.1} parent=1 // pred_fallthru
      _
    // Predicated region
    $region14: #{tpu_custom_call.1} parent=1 // pred_check
      _
    $region15: #{tpu_custom_call.1} parent=1 // pred_check_branch
      %25 = sbr.rel (0) target = $region17
    $region16: #{tpu_custom_call.1} parent=1 // pred_region
      _
    $region17: #{tpu_custom_call.1} parent=1 // pred_fallthru
      _
    // Predicated region
    $region18: #{tpu_custom_call.1} parent=1 // pred_check
      _
    $region19: #{tpu_custom_call.1} parent=1 // pred_check_branch
      %27 = sbr.rel (0) target = $region21
    $region20: #{tpu_custom_call.1} parent=1 // pred_region
      _
    $region21: #{tpu_custom_call.1} parent=1 // pred_fallthru
      _
    // Predicated region
    $region22: #{tpu_custom_call.1} parent=1 // pred_check
      _
    $region23: #{tpu_custom_call.1} parent=1 // pred_check_branch
      %29 = sbr.rel (0) target = $region25
    $region24: #{tpu_custom_call.1} parent=1 // pred_region
      _
    $region25: #{tpu_custom_call.1} parent=1 // pred_fallthru
      _
    // Predicated region
    $region26: #{tpu_custom_call.1} parent=1 // pred_check
      _
    $region27: #{tpu_custom_call.1} parent=1 // pred_check_branch
      %31 = sbr.rel (0) target = $region29
    $region28: #{tpu_custom_call.1} parent=1 // pred_region
      %s33 = ssub.s32 17408, 17408
      %34 = vsyncadd [#allocation3], %s33
      %s35 = sshll.u32 [#allocation2], 4
      %s36 = int_to_ptr.vmem [resolvable:$true] %s35
      %41 = dma.hbm_to_vmem [thread:$0]  %s6, 17408, %s36, [#allocation3], 64, 64, 4
    $region29: #{tpu_custom_call.1} parent=1 // pred_fallthru
      _
    // Predicated region
    $region30: #{tpu_custom_call.1} parent=1 // pred_check
      _
    $region31: #{tpu_custom_call.1} parent=1 // pred_check_branch
      %43 = sbr.rel (0) target = $region33
    $region32: #{tpu_custom_call.1} parent=1 // pred_region
      _
    $region33: #{tpu_custom_call.1} parent=1 // pred_fallthru
      _
    // Predicated region
    $region34: #{tpu_custom_call.1} parent=1 // pred_check
      _
    $region35: #{tpu_custom_call.1} parent=1 // pred_check_branch
      %45 = sbr.rel (0) target = $region37
    $region36: #{tpu_custom_call.1} parent=1 // pred_region
      %46 = dma.done [#allocation3], 17408
    $region37: #{tpu_custom_call.1} parent=1 // pred_fallthru
      _
    %v48 = vld [vmem:[%s0] sm:$0xff]
    %v49 = vld [vmem:[%s0 + $0x8] sm:$0xff]
    %v50 = vld [vmem:[%s0 + $0x10] sm:$0xff]
    %v51 = vld [vmem:[%s0 + $0x18] sm:$0xff]
    %v52 = vld [vmem:[%s4] sm:$0xff]
    %v53 = vld [vmem:[%s4 + $0x8] sm:$0xff]
    %v54 = vld [vmem:[%s7] sm:$0x7]
    %v55 = vpack.c.bf16 %v49, %v48
    %v56 = vpack.c.bf16 %v51, %v50
    %v57 = vpack.c.bf16 %v53, %v52
    %v58 = vpack.c.bf16 %v54, %v54
    %vm59 = vcmask 23552
    %v61 = vsel %vm59, %v55, 0
    %v64 = vsel %vm59, %v56, 0
    %v67 = vsel %vm59, %v57, 0
    %vm69 = vcmask 1040384
    %vm70 = vcmask 1041408
    %v71 = vsel %vm69, 4294967295, 65535
    %v72 = vsel %vm70, %v71, 0
    %v74 = vand.u32 %v58, %v72
    %76 = vmatprep.subr.bf16.mxu0 0
    %77 = vmatpush1.bf16.msra.mxu0 %v74
    %78 = vmatprep.subr.bf16.mxu0 0
    %79 = vmatpush1.bf16.msra.mxu0 0
    %80 = vmatprep.subr.bf16.mxu0 0
    %81 = vmatpush1.bf16.msra.mxu0 0
    %82 = vmatprep.subr.bf16.mxu0 0
    %83 = vmatpush1.bf16.msra.mxu0 0
    %84 = vmatprep.subr.bf16.mxu0 0
    %85 = vmatpush1.bf16.msra.mxu0 0
    %86 = vmatprep.subr.bf16.mxu0 0
    %87 = vmatpush1.bf16.msra.mxu0 0
    %88 = vmatprep.subr.bf16.mxu0 0
    %89 = vmatpush1.bf16.msra.mxu0 0
    %90 = vmatprep.subr.bf16.mxu0 0
    %91 = vmatpush1.bf16.msra.mxu0 0
    %92 = vmatprep.subr.bf16.mxu0 0
    %93 = vmatpush1.bf16.msra.mxu0 0
    %94 = vmatprep.subr.bf16.mxu0 0
    %95 = vmatpush1.bf16.msra.mxu0 0
    %96 = vmatprep.subr.bf16.mxu0 0
    %97 = vmatpush1.bf16.msra.mxu0 0
    %98 = vmatprep.subr.bf16.mxu0 0
    %99 = vmatpush1.bf16.msra.mxu0 0
    %100 = vmatprep.subr.bf16.mxu0 0
    %101 = vmatpush1.bf16.msra.mxu0 0
    %102 = vmatprep.subr.bf16.mxu0 0
    %103 = vmatpush1.bf16.msra.mxu0 0
    %104 = vmatprep.subr.bf16.mxu0 0
    %105 = vmatpush1.bf16.msra.mxu0 0
    %106 = vmatprep.subr.bf16.mxu0 0
    %107 = vmatpush1.bf16.msra.mxu0 0
    %108 = vmatprep.mubr.bf16.mxu0 0
    %109 = vmatmul.mubr.bf16.gmra.mrb[0].mxu0 %v61
    %v110 = vpop.f32.mrb[0].mxu0
    %v111 = vadd.f32 0.0, %v110
    %v112 = vpop.f32.mrb[0].mxu0
    %v113 = vpop.f32.mrb[0].mxu0
    %v114 = vadd.f32 0.0, %v113
    %v115 = vpop.f32.mrb[0].mxu0
    %116 = vmatprep.mubr.bf16.mxu0 0
    %117 = vmatmul.mubr.bf16.gmra.mrb[0].mxu0 %v64
    %v118 = vpop.f32.mrb[0].mxu0
    %v119 = vadd.f32 0.0, %v118
    %v120 = vpop.f32.mrb[0].mxu0
    %v121 = vpop.f32.mrb[0].mxu0
    %v122 = vadd.f32 0.0, %v121
    %v123 = vpop.f32.mrb[0].mxu0
    %124 = vmatprep.mubr.bf16.mxu0 0
    %125 = vmatmul.mubr.bf16.gmra.mrb[0].mxu0 %v67
    %v126 = vpop.f32.mrb[0].mxu0
    %v127 = vadd.f32 0.0, %v126
    %v128 = vpop.f32.mrb[0].mxu0
    %v129 = vpop.f32.mrb[0].mxu0
    %v130 = vadd.f32 0.0, %v129
    %v131 = vpop.f32.mrb[0].mxu0
    %132 = vdwg.mxu0
    %v133 = vld [vmem:[%s7 + $0x3] sm:$0x1]
    %v134 = vlaneseq
    %v135 = vshrl.u32 %v134, 7
    %v136 = vsub.s32 0, %v135
    %v137 = vrot.slane %v133, %v136
    %v138 = vadd.f32 %v111, %v137
    %v139 = vadd.f32 %v114, %v137
    %v140 = vadd.f32 %v119, %v137
    %v141 = vadd.f32 %v122, %v137
    %v142 = vadd.f32 %v127, %v137
    %v143 = vadd.f32 %v130, %v137
    %v144 = vmax.f32 %v138, 0.0
    %v145 = vmax.f32 %v139, 0.0
    %v146 = vmax.f32 %v140, 0.0
    %v147 = vmax.f32 %v141, 0.0
    %v148 = vmax.f32 %v142, 0.0
    %v149 = vmax.f32 %v143, 0.0
    %v150 = vsub.f32 0.0, %v111
    %v151 = vsub.f32 0.0, %v114
    %v152 = vsub.f32 0.0, %v119
    %v153 = vsub.f32 0.0, %v122
    %v154 = vsub.f32 0.0, %v127
    %v155 = vsub.f32 0.0, %v130
    %v156 = vadd.f32 %v150, %v137
    %v157 = vadd.f32 %v151, %v137
    %v158 = vadd.f32 %v152, %v137
    %v159 = vadd.f32 %v153, %v137
    %v160 = vadd.f32 %v154, %v137
    %v161 = vadd.f32 %v155, %v137
    %v162 = vmax.f32 %v156, 0.0
    %v163 = vmax.f32 %v157, 0.0
    %v164 = vmax.f32 %v158, 0.0
    %v165 = vmax.f32 %v159, 0.0
    %v166 = vmax.f32 %v160, 0.0
    %v167 = vmax.f32 %v161, 0.0
    %v168 = vld [vmem:[#allocation2] sm:$0xf]
    %v169 = vld [vmem:[#allocation2 + $0x4] sm:$0xf]
    %v170 = vld [vmem:[#allocation2 + $0x8] sm:$0xf]
    %v171 = vld [vmem:[#allocation2 + $0xc] sm:$0xf]
    %v172 = vld [vmem:[#allocation2 + $0x10] sm:$0xf]
    %v173 = vld [vmem:[#allocation2 + $0x14] sm:$0xf]
    %v174 = vld [vmem:[#allocation2 + $0x18] sm:$0xf]
    %v175 = vld [vmem:[#allocation2 + $0x1c] sm:$0xf]
    %v176 = vld [vmem:[#allocation2 + $0x20] sm:$0xf]
    %v177 = vld [vmem:[#allocation2 + $0x24] sm:$0xf]
    %v178 = vld [vmem:[#allocation2 + $0x28] sm:$0xf]
    %v179 = vld [vmem:[#allocation2 + $0x2c] sm:$0xf]
    %v180 = vld [vmem:[#allocation2 + $0x30] sm:$0xf]
    %v181 = vld [vmem:[#allocation2 + $0x34] sm:$0xf]
    %v182 = vld [vmem:[#allocation2 + $0x38] sm:$0xf]
    %v183 = vld [vmem:[#allocation2 + $0x3c] sm:$0xf]
    %v184 = vpack.c.bf16 %v145, %v144
    %v185 = vpack.c.bf16 %v147, %v146
    %v186 = vpack.c.bf16 %v149, %v148
    %v187 = vpack.c.bf16 %v163, %v162
    %v188 = vpack.c.bf16 %v165, %v164
    %v189 = vpack.c.bf16 %v167, %v166
    %v190 = vld [vmem:[%s7 + $0x4] sm:$0x1]
    %v191 = vlaneseq
    %v192 = vshrl.u32 %v191, 7
    %v193 = vsub.s32 0, %v192
    %v194 = vrot.slane %v190, %v193
    %v211 = vunpack.c.l.b16 %v168
    %v212 = vunpack.c.l.b16 %v169
    %v213 = vunpack.c.l.b16 %v170
    %v214 = vunpack.c.l.b16 %v171
    %v215 = vunpack.c.l.b16 %v172
    %v216 = vunpack.c.l.b16 %v173
    %v217 = vunpack.c.l.b16 %v174
    %v218 = vunpack.c.l.b16 %v175
    %v219 = vunpack.c.l.b16 %v176
    %v220 = vunpack.c.l.b16 %v177
    %v221 = vunpack.c.l.b16 %v178
    %v222 = vunpack.c.l.b16 %v179
    %v223 = vunpack.c.l.b16 %v180
    %v224 = vunpack.c.l.b16 %v181
    %v225 = vunpack.c.l.b16 %v182
    %v226 = vunpack.c.l.b16 %v183
    %v227 = vpack.c.b16 %v212, %v211
    %v228 = vpack.c.b16 %v214, %v213
    %v229 = vpack.c.b16 %v216, %v215
    %v230 = vpack.c.b16 %v218, %v217
    %v231 = vpack.c.b16 %v220, %v219
    %v232 = vpack.c.b16 %v222, %v221
    %v233 = vpack.c.b16 %v224, %v223
    %v234 = vpack.c.b16 %v226, %v225
    %243 = vmatprep.subr.bf16.mxu0 0
    %244 = vmatpush1.bf16.msra.mxu0 %v227
    %245 = vmatprep.subr.bf16.mxu0 0
    %246 = vmatpush1.bf16.msra.mxu0 %v228
    %247 = vmatprep.subr.bf16.mxu0 0
    %248 = vmatpush1.bf16.msra.mxu0 %v229
    %249 = vmatprep.subr.bf16.mxu0 0
    %250 = vmatpush1.bf16.msra.mxu0 %v230
    %251 = vmatprep.subr.bf16.mxu0 0
    %252 = vmatpush1.bf16.msra.mxu0 %v231
    %253 = vmatprep.subr.bf16.mxu0 0
    %254 = vmatpush1.bf16.msra.mxu0 %v232
    %255 = vmatprep.subr.bf16.mxu0 0
    %256 = vmatpush1.bf16.msra.mxu0 %v233
    %257 = vmatprep.subr.bf16.mxu0 0
    %258 = vmatpush1.bf16.msra.mxu0 %v234
    %259 = vmatprep.subr.bf16.mxu0 0
    %260 = vmatpush1.bf16.msra.mxu0 0
    %261 = vmatprep.subr.bf16.mxu0 0
    %262 = vmatpush1.bf16.msra.mxu0 0
    %263 = vmatprep.subr.bf16.mxu0 0
    %264 = vmatpush1.bf16.msra.mxu0 0
    %265 = vmatprep.subr.bf16.mxu0 0
    %266 = vmatpush1.bf16.msra.mxu0 0
    %267 = vmatprep.subr.bf16.mxu0 0
    %268 = vmatpush1.bf16.msra.mxu0 0
    %269 = vmatprep.subr.bf16.mxu0 0
    %270 = vmatpush1.bf16.msra.mxu0 0
    %271 = vmatprep.subr.bf16.mxu0 0
    %272 = vmatpush1.bf16.msra.mxu0 0
    %273 = vmatprep.subr.bf16.mxu0 0
    %274 = vmatpush1.bf16.msra.mxu0 0
    %275 = vmatprep.mubr.bf16.mxu0 0
    %276 = vmatmul.mubr.bf16.gmra.mrb[0].mxu0 %v184
    %v277 = vpop.f32.mrb[0].mxu0
    %v278 = vadd.f32 %v194, %v277
    %v279 = vpop.f32.mrb[0].mxu0
    %v280 = vpop.f32.mrb[0].mxu0
    %v281 = vadd.f32 %v194, %v280
    %v282 = vpop.f32.mrb[0].mxu0
    %283 = vmatprep.mubr.bf16.mxu0 0
    %284 = vmatmul.mubr.bf16.gmra.mrb[0].mxu0 %v185
    %v285 = vpop.f32.mrb[0].mxu0
    %v286 = vadd.f32 %v194, %v285
    %v287 = vpop.f32.mrb[0].mxu0
    %v288 = vpop.f32.mrb[0].mxu0
    %v289 = vadd.f32 %v194, %v288
    %v290 = vpop.f32.mrb[0].mxu0
    %291 = vmatprep.mubr.bf16.mxu0 0
    %292 = vmatmul.mubr.bf16.gmra.mrb[0].mxu0 %v186
    %v293 = vpop.f32.mrb[0].mxu0
    %v294 = vadd.f32 %v194, %v293
    %v295 = vpop.f32.mrb[0].mxu0
    %v296 = vpop.f32.mrb[0].mxu0
    %v297 = vadd.f32 %v194, %v296
    %v298 = vpop.f32.mrb[0].mxu0
    %299 = vmatprep.mubr.bf16.mxu0 0
    %300 = vmatmul.mubr.bf16.gmra.mrb[0].mxu0 %v187
    %v301 = vpop.f32.mrb[0].mxu0
    %v302 = vadd.f32 %v194, %v301
    %v303 = vpop.f32.mrb[0].mxu0
    %v304 = vpop.f32.mrb[0].mxu0
    %v305 = vadd.f32 %v194, %v304
    %v306 = vpop.f32.mrb[0].mxu0
    %307 = vmatprep.mubr.bf16.mxu0 0
    %308 = vmatmul.mubr.bf16.gmra.mrb[0].mxu0 %v188
    %v309 = vpop.f32.mrb[0].mxu0
    %v310 = vadd.f32 %v194, %v309
    %v311 = vpop.f32.mrb[0].mxu0
    %v312 = vpop.f32.mrb[0].mxu0
    %v313 = vadd.f32 %v194, %v312
    %v314 = vpop.f32.mrb[0].mxu0
    %315 = vmatprep.mubr.bf16.mxu0 0
    %316 = vmatmul.mubr.bf16.gmra.mrb[0].mxu0 %v189
    %v317 = vpop.f32.mrb[0].mxu0
    %v318 = vadd.f32 %v194, %v317
    %v319 = vpop.f32.mrb[0].mxu0
    %v320 = vpop.f32.mrb[0].mxu0
    %v321 = vadd.f32 %v194, %v320
    %v322 = vpop.f32.mrb[0].mxu0
    %323 = vdwg.mxu0
    %v324 = vmax.f32 %v278, 0.0
    %v325 = vmax.f32 %v281, 0.0
    %v326 = vmax.f32 %v286, 0.0
    %v327 = vmax.f32 %v289, 0.0
    %v328 = vmax.f32 %v294, 0.0
    %v329 = vmax.f32 %v297, 0.0
    %v330 = vmax.f32 %v302, 0.0
    %v331 = vmax.f32 %v305, 0.0
    %v332 = vmax.f32 %v310, 0.0
    %v333 = vmax.f32 %v313, 0.0
    %v334 = vmax.f32 %v318, 0.0
    %v335 = vmax.f32 %v321, 0.0
    %s336 = scalar_lea.vmem [#allocation2], 64
    %v337 = vld [vmem:[%s336] sm:$0xf]
    %v338 = vld [vmem:[%s336 + $0x4] sm:$0xf]
    %v339 = vld [vmem:[%s336 + $0x8] sm:$0xf]
    %v340 = vld [vmem:[%s336 + $0xc] sm:$0xf]
    %v341 = vld [vmem:[%s336 + $0x10] sm:$0xf]
    %v342 = vld [vmem:[%s336 + $0x14] sm:$0xf]
    %v343 = vld [vmem:[%s336 + $0x18] sm:$0xf]
    %v344 = vld [vmem:[%s336 + $0x1c] sm:$0xf]
    %v345 = vld [vmem:[%s336 + $0x20] sm:$0xf]
    %v346 = vld [vmem:[%s336 + $0x24] sm:$0xf]
    %v347 = vld [vmem:[%s336 + $0x28] sm:$0xf]
    %v348 = vld [vmem:[%s336 + $0x2c] sm:$0xf]
    %v349 = vld [vmem:[%s336 + $0x30] sm:$0xf]
    %v350 = vld [vmem:[%s336 + $0x34] sm:$0xf]
    %v351 = vld [vmem:[%s336 + $0x38] sm:$0xf]
    %v352 = vld [vmem:[%s336 + $0x3c] sm:$0xf]
    %v353 = vpack.c.bf16 %v325, %v324
    %v354 = vpack.c.bf16 %v327, %v326
    %v355 = vpack.c.bf16 %v329, %v328
    %v356 = vpack.c.bf16 %v331, %v330
    %v357 = vpack.c.bf16 %v333, %v332
    %v358 = vpack.c.bf16 %v335, %v334
    %v359 = vld [vmem:[%s7 + $0x5] sm:$0x1]
    %v360 = vlaneseq
    %v361 = vshrl.u32 %v360, 7
    %v362 = vsub.s32 0, %v361
    %v363 = vrot.slane %v359, %v362
    %v380 = vunpack.c.l.b16 %v337
    %v381 = vunpack.c.l.b16 %v338
    %v382 = vunpack.c.l.b16 %v339
    %v383 = vunpack.c.l.b16 %v340
    %v384 = vunpack.c.l.b16 %v341
    %v385 = vunpack.c.l.b16 %v342
    %v386 = vunpack.c.l.b16 %v343
    %v387 = vunpack.c.l.b16 %v344
    %v388 = vunpack.c.l.b16 %v345
    %v389 = vunpack.c.l.b16 %v346
    %v390 = vunpack.c.l.b16 %v347
    %v391 = vunpack.c.l.b16 %v348
    %v392 = vunpack.c.l.b16 %v349
    %v393 = vunpack.c.l.b16 %v350
    %v394 = vunpack.c.l.b16 %v351
    %v395 = vunpack.c.l.b16 %v352
    %v396 = vpack.c.b16 %v381, %v380
    %v397 = vpack.c.b16 %v383, %v382
    %v398 = vpack.c.b16 %v385, %v384
    %v399 = vpack.c.b16 %v387, %v386
    %v400 = vpack.c.b16 %v389, %v388
    %v401 = vpack.c.b16 %v391, %v390
    %v402 = vpack.c.b16 %v393, %v392
    %v403 = vpack.c.b16 %v395, %v394
    %412 = vmatprep.subr.bf16.mxu0 0
    %413 = vmatpush1.bf16.msra.mxu0 %v396
    %414 = vmatprep.subr.bf16.mxu0 0
    %415 = vmatpush1.bf16.msra.mxu0 %v397
    %416 = vmatprep.subr.bf16.mxu0 0
    %417 = vmatpush1.bf16.msra.mxu0 %v398
    %418 = vmatprep.subr.bf16.mxu0 0
    %419 = vmatpush1.bf16.msra.mxu0 %v399
    %420 = vmatprep.subr.bf16.mxu0 0
    %421 = vmatpush1.bf16.msra.mxu0 %v400
    %422 = vmatprep.subr.bf16.mxu0 0
    %423 = vmatpush1.bf16.msra.mxu0 %v401
    %424 = vmatprep.subr.bf16.mxu0 0
    %425 = vmatpush1.bf16.msra.mxu0 %v402
    %426 = vmatprep.subr.bf16.mxu0 0
    %427 = vmatpush1.bf16.msra.mxu0 %v403
    %428 = vmatprep.subr.bf16.mxu0 0
    %429 = vmatpush1.bf16.msra.mxu0 0
    %430 = vmatprep.subr.bf16.mxu0 0
    %431 = vmatpush1.bf16.msra.mxu0 0
    %432 = vmatprep.subr.bf16.mxu0 0
    %433 = vmatpush1.bf16.msra.mxu0 0
    %434 = vmatprep.subr.bf16.mxu0 0
    %435 = vmatpush1.bf16.msra.mxu0 0
    %436 = vmatprep.subr.bf16.mxu0 0
    %437 = vmatpush1.bf16.msra.mxu0 0
    %438 = vmatprep.subr.bf16.mxu0 0
    %439 = vmatpush1.bf16.msra.mxu0 0
    %440 = vmatprep.subr.bf16.mxu0 0
    %441 = vmatpush1.bf16.msra.mxu0 0
    %442 = vmatprep.subr.bf16.mxu0 0
    %443 = vmatpush1.bf16.msra.mxu0 0
    %444 = vmatprep.mubr.bf16.mxu0 0
    %445 = vmatmul.mubr.bf16.gmra.mrb[0].mxu0 %v353
    %v446 = vpop.f32.mrb[0].mxu0
    %v447 = vadd.f32 %v363, %v446
    %v448 = vpop.f32.mrb[0].mxu0
    %v449 = vpop.f32.mrb[0].mxu0
    %v450 = vadd.f32 %v363, %v449
    %v451 = vpop.f32.mrb[0].mxu0
    %452 = vmatprep.mubr.bf16.mxu0 0
    %453 = vmatmul.mubr.bf16.gmra.mrb[0].mxu0 %v354
    %v454 = vpop.f32.mrb[0].mxu0
    %v455 = vadd.f32 %v363, %v454
    %v456 = vpop.f32.mrb[0].mxu0
    %v457 = vpop.f32.mrb[0].mxu0
    %v458 = vadd.f32 %v363, %v457
    %v459 = vpop.f32.mrb[0].mxu0
    %460 = vmatprep.mubr.bf16.mxu0 0
    %461 = vmatmul.mubr.bf16.gmra.mrb[0].mxu0 %v355
    %v462 = vpop.f32.mrb[0].mxu0
    %v463 = vadd.f32 %v363, %v462
    %v464 = vpop.f32.mrb[0].mxu0
    %v465 = vpop.f32.mrb[0].mxu0
    %v466 = vadd.f32 %v363, %v465
    %v467 = vpop.f32.mrb[0].mxu0
    %468 = vmatprep.mubr.bf16.mxu0 0
    %469 = vmatmul.mubr.bf16.gmra.mrb[0].mxu0 %v356
    %v470 = vpop.f32.mrb[0].mxu0
    %v471 = vadd.f32 %v363, %v470
    %v472 = vpop.f32.mrb[0].mxu0
    %v473 = vpop.f32.mrb[0].mxu0
    %v474 = vadd.f32 %v363, %v473
    %v475 = vpop.f32.mrb[0].mxu0
    %476 = vmatprep.mubr.bf16.mxu0 0
    %477 = vmatmul.mubr.bf16.gmra.mrb[0].mxu0 %v357
    %v478 = vpop.f32.mrb[0].mxu0
    %v479 = vadd.f32 %v363, %v478
    %v480 = vpop.f32.mrb[0].mxu0
    %v481 = vpop.f32.mrb[0].mxu0
    %v482 = vadd.f32 %v363, %v481
    %v483 = vpop.f32.mrb[0].mxu0
    %484 = vmatprep.mubr.bf16.mxu0 0
    %485 = vmatmul.mubr.bf16.gmra.mrb[0].mxu0 %v358
    %v486 = vpop.f32.mrb[0].mxu0
    %v487 = vadd.f32 %v363, %v486
    %v488 = vpop.f32.mrb[0].mxu0
    %v489 = vpop.f32.mrb[0].mxu0
    %v490 = vadd.f32 %v363, %v489
    %v491 = vpop.f32.mrb[0].mxu0
    %492 = vdwg.mxu0
    %v493 = vmax.f32 %v447, 0.0
    %v494 = vmax.f32 %v450, 0.0
    %v495 = vmax.f32 %v455, 0.0
    %v496 = vmax.f32 %v458, 0.0
    %v497 = vmax.f32 %v463, 0.0
    %v498 = vmax.f32 %v466, 0.0
    %v499 = vmax.f32 %v471, 0.0
    %v500 = vmax.f32 %v474, 0.0
    %v501 = vmax.f32 %v479, 0.0
    %v502 = vmax.f32 %v482, 0.0
    %v503 = vmax.f32 %v487, 0.0
    %v504 = vmax.f32 %v490, 0.0
    %s505 = scalar_lea.vmem [#allocation2], 128
    %v506 = vld [vmem:[%s505] sm:$0xf]
    %v507 = vld [vmem:[%s505 + $0x4] sm:$0xf]
    %v508 = vld [vmem:[%s505 + $0x8] sm:$0xf]
    %v509 = vld [vmem:[%s505 + $0xc] sm:$0xf]
    %v510 = vld [vmem:[%s505 + $0x10] sm:$0xf]
    %v511 = vld [vmem:[%s505 + $0x14] sm:$0xf]
    %v512 = vld [vmem:[%s505 + $0x18] sm:$0xf]
    %v513 = vld [vmem:[%s505 + $0x1c] sm:$0xf]
    %v514 = vld [vmem:[%s505 + $0x20] sm:$0xf]
    %v515 = vld [vmem:[%s505 + $0x24] sm:$0xf]
    %v516 = vld [vmem:[%s505 + $0x28] sm:$0xf]
    %v517 = vld [vmem:[%s505 + $0x2c] sm:$0xf]
    %v518 = vld [vmem:[%s505 + $0x30] sm:$0xf]
    %v519 = vld [vmem:[%s505 + $0x34] sm:$0xf]
    %v520 = vld [vmem:[%s505 + $0x38] sm:$0xf]
    %v521 = vld [vmem:[%s505 + $0x3c] sm:$0xf]
    %v522 = vpack.c.bf16 %v494, %v493
    %v523 = vpack.c.bf16 %v496, %v495
    %v524 = vpack.c.bf16 %v498, %v497
    %v525 = vpack.c.bf16 %v500, %v499
    %v526 = vpack.c.bf16 %v502, %v501
    %v527 = vpack.c.bf16 %v504, %v503
    %v528 = vld [vmem:[%s7 + $0x6] sm:$0x1]
    %v529 = vlaneseq
    %v530 = vshrl.u32 %v529, 7
    %v531 = vsub.s32 0, %v530
    %v532 = vrot.slane %v528, %v531
    %v549 = vunpack.c.l.b16 %v506
    %v550 = vunpack.c.l.b16 %v507
    %v551 = vunpack.c.l.b16 %v508
    %v552 = vunpack.c.l.b16 %v509
    %v553 = vunpack.c.l.b16 %v510
    %v554 = vunpack.c.l.b16 %v511
    %v555 = vunpack.c.l.b16 %v512
    %v556 = vunpack.c.l.b16 %v513
    %v557 = vunpack.c.l.b16 %v514
    %v558 = vunpack.c.l.b16 %v515
    %v559 = vunpack.c.l.b16 %v516
    %v560 = vunpack.c.l.b16 %v517
    %v561 = vunpack.c.l.b16 %v518
    %v562 = vunpack.c.l.b16 %v519
    %v563 = vunpack.c.l.b16 %v520
    %v564 = vunpack.c.l.b16 %v521
    %v565 = vpack.c.b16 %v550, %v549
    %v566 = vpack.c.b16 %v552, %v551
    %v567 = vpack.c.b16 %v554, %v553
    %v568 = vpack.c.b16 %v556, %v555
    %v569 = vpack.c.b16 %v558, %v557
    %v570 = vpack.c.b16 %v560, %v559
    %v571 = vpack.c.b16 %v562, %v561
    %v572 = vpack.c.b16 %v564, %v563
    %581 = vmatprep.subr.bf16.mxu0 0
    %582 = vmatpush1.bf16.msra.mxu0 %v565
    %583 = vmatprep.subr.bf16.mxu0 0
    %584 = vmatpush1.bf16.msra.mxu0 %v566
    %585 = vmatprep.subr.bf16.mxu0 0
    %586 = vmatpush1.bf16.msra.mxu0 %v567
    %587 = vmatprep.subr.bf16.mxu0 0
    %588 = vmatpush1.bf16.msra.mxu0 %v568
    %589 = vmatprep.subr.bf16.mxu0 0
    %590 = vmatpush1.bf16.msra.mxu0 %v569
    %591 = vmatprep.subr.bf16.mxu0 0
    %592 = vmatpush1.bf16.msra.mxu0 %v570
    %593 = vmatprep.subr.bf16.mxu0 0
    %594 = vmatpush1.bf16.msra.mxu0 %v571
    %595 = vmatprep.subr.bf16.mxu0 0
    %596 = vmatpush1.bf16.msra.mxu0 %v572
    %597 = vmatprep.subr.bf16.mxu0 0
    %598 = vmatpush1.bf16.msra.mxu0 0
    %599 = vmatprep.subr.bf16.mxu0 0
    %600 = vmatpush1.bf16.msra.mxu0 0
    %601 = vmatprep.subr.bf16.mxu0 0
    %602 = vmatpush1.bf16.msra.mxu0 0
    %603 = vmatprep.subr.bf16.mxu0 0
    %604 = vmatpush1.bf16.msra.mxu0 0
    %605 = vmatprep.subr.bf16.mxu0 0
    %606 = vmatpush1.bf16.msra.mxu0 0
    %607 = vmatprep.subr.bf16.mxu0 0
    %608 = vmatpush1.bf16.msra.mxu0 0
    %609 = vmatprep.subr.bf16.mxu0 0
    %610 = vmatpush1.bf16.msra.mxu0 0
    %611 = vmatprep.subr.bf16.mxu0 0
    %612 = vmatpush1.bf16.msra.mxu0 0
    %613 = vmatprep.mubr.bf16.mxu0 0
    %614 = vmatmul.mubr.bf16.gmra.mrb[0].mxu0 %v522
    %v615 = vpop.f32.mrb[0].mxu0
    %v616 = vadd.f32 %v532, %v615
    %v617 = vpop.f32.mrb[0].mxu0
    %v618 = vpop.f32.mrb[0].mxu0
    %v619 = vadd.f32 %v532, %v618
    %v620 = vpop.f32.mrb[0].mxu0
    %621 = vmatprep.mubr.bf16.mxu0 0
    %622 = vmatmul.mubr.bf16.gmra.mrb[0].mxu0 %v523
    %v623 = vpop.f32.mrb[0].mxu0
    %v624 = vadd.f32 %v532, %v623
    %v625 = vpop.f32.mrb[0].mxu0
    %v626 = vpop.f32.mrb[0].mxu0
    %v627 = vadd.f32 %v532, %v626
    %v628 = vpop.f32.mrb[0].mxu0
    %629 = vmatprep.mubr.bf16.mxu0 0
    %630 = vmatmul.mubr.bf16.gmra.mrb[0].mxu0 %v524
    %v631 = vpop.f32.mrb[0].mxu0
    %v632 = vadd.f32 %v532, %v631
    %v633 = vpop.f32.mrb[0].mxu0
    %v634 = vpop.f32.mrb[0].mxu0
    %v635 = vadd.f32 %v532, %v634
    %v636 = vpop.f32.mrb[0].mxu0
    %637 = vmatprep.mubr.bf16.mxu0 0
    %638 = vmatmul.mubr.bf16.gmra.mrb[0].mxu0 %v525
    %v639 = vpop.f32.mrb[0].mxu0
    %v640 = vadd.f32 %v532, %v639
    %v641 = vpop.f32.mrb[0].mxu0
    %v642 = vpop.f32.mrb[0].mxu0
    %v643 = vadd.f32 %v532, %v642
    %v644 = vpop.f32.mrb[0].mxu0
    %645 = vmatprep.mubr.bf16.mxu0 0
    %646 = vmatmul.mubr.bf16.gmra.mrb[0].mxu0 %v526
    %v647 = vpop.f32.mrb[0].mxu0
    %v648 = vadd.f32 %v532, %v647
    %v649 = vpop.f32.mrb[0].mxu0
    %v650 = vpop.f32.mrb[0].mxu0
    %v651 = vadd.f32 %v532, %v650
    %v652 = vpop.f32.mrb[0].mxu0
    %653 = vmatprep.mubr.bf16.mxu0 0
    %654 = vmatmul.mubr.bf16.gmra.mrb[0].mxu0 %v527
    %v655 = vpop.f32.mrb[0].mxu0
    %v656 = vadd.f32 %v532, %v655
    %v657 = vpop.f32.mrb[0].mxu0
    %v658 = vpop.f32.mrb[0].mxu0
    %v659 = vadd.f32 %v532, %v658
    %v660 = vpop.f32.mrb[0].mxu0
    %661 = vdwg.mxu0
    %v662 = vmax.f32 %v616, 0.0
    %v663 = vmax.f32 %v619, 0.0
    %v664 = vmax.f32 %v624, 0.0
    %v665 = vmax.f32 %v627, 0.0
    %v666 = vmax.f32 %v632, 0.0
    %v667 = vmax.f32 %v635, 0.0
    %v668 = vmax.f32 %v640, 0.0
    %v669 = vmax.f32 %v643, 0.0
    %v670 = vmax.f32 %v648, 0.0
    %v671 = vmax.f32 %v651, 0.0
    %v672 = vmax.f32 %v656, 0.0
    %v673 = vmax.f32 %v659, 0.0
    %v674 = vadd.f32 %v662, %v668
    %v675 = vadd.f32 %v663, %v669
    %v676 = vadd.f32 %v664, %v670
    %v677 = vadd.f32 %v665, %v671
    %v678 = vadd.f32 %v666, %v672
    %v679 = vadd.f32 %v667, %v673
    %s680 = scalar_lea.vmem [#allocation2], 192
    %v681 = vld [vmem:[%s680] sm:$0xf]
    %v682 = vld [vmem:[%s680 + $0x4] sm:$0xf]
    %v683 = vld [vmem:[%s680 + $0x8] sm:$0xf]
    %v684 = vld [vmem:[%s680 + $0xc] sm:$0xf]
    %v685 = vld [vmem:[%s680 + $0x10] sm:$0xf]
    %v686 = vld [vmem:[%s680 + $0x14] sm:$0xf]
    %v687 = vld [vmem:[%s680 + $0x18] sm:$0xf]
    %v688 = vld [vmem:[%s680 + $0x1c] sm:$0xf]
    %v689 = vld [vmem:[%s680 + $0x20] sm:$0xf]
    %v690 = vld [vmem:[%s680 + $0x24] sm:$0xf]
    %v691 = vld [vmem:[%s680 + $0x28] sm:$0xf]
    %v692 = vld [vmem:[%s680 + $0x2c] sm:$0xf]
    %v693 = vld [vmem:[%s680 + $0x30] sm:$0xf]
    %v694 = vld [vmem:[%s680 + $0x34] sm:$0xf]
    %v695 = vld [vmem:[%s680 + $0x38] sm:$0xf]
    %v696 = vld [vmem:[%s680 + $0x3c] sm:$0xf]
    %v697 = vpack.c.bf16 %v675, %v674
    %v698 = vpack.c.bf16 %v677, %v676
    %v715 = vunpack.c.l.b16 %v681
    %v716 = vunpack.c.l.b16 %v682
    %v717 = vunpack.c.l.b16 %v683
    %v718 = vunpack.c.l.b16 %v684
    %v719 = vunpack.c.l.b16 %v685
    %v720 = vunpack.c.l.b16 %v686
    %v721 = vunpack.c.l.b16 %v687
    %v722 = vunpack.c.l.b16 %v688
    %v723 = vunpack.c.l.b16 %v689
    %v724 = vunpack.c.l.b16 %v690
    %v725 = vunpack.c.l.b16 %v691
    %v726 = vunpack.c.l.b16 %v692
    %v727 = vunpack.c.l.b16 %v693
    %v728 = vunpack.c.l.b16 %v694
    %v729 = vunpack.c.l.b16 %v695
    %v730 = vunpack.c.l.b16 %v696
    %v731 = vpack.c.b16 %v716, %v715
    %v732 = vpack.c.b16 %v718, %v717
    %v733 = vpack.c.b16 %v720, %v719
    %v734 = vpack.c.b16 %v722, %v721
    %v735 = vpack.c.b16 %v724, %v723
    %v736 = vpack.c.b16 %v726, %v725
    %v737 = vpack.c.b16 %v728, %v727
    %v738 = vpack.c.b16 %v730, %v729
    %747 = vmatprep.subr.bf16.mxu0 0
    %748 = vmatpush1.bf16.msra.mxu0 %v731
    %749 = vmatprep.subr.bf16.mxu0 0
    %750 = vmatpush1.bf16.msra.mxu0 %v732
    %751 = vmatprep.subr.bf16.mxu0 0
    %752 = vmatpush1.bf16.msra.mxu0 %v733
    %753 = vmatprep.subr.bf16.mxu0 0
    %754 = vmatpush1.bf16.msra.mxu0 %v734
    %755 = vmatprep.subr.bf16.mxu0 0
    %756 = vmatpush1.bf16.msra.mxu0 %v735
    %757 = vmatprep.subr.bf16.mxu0 0
    %758 = vmatpush1.bf16.msra.mxu0 %v736
    %759 = vmatprep.subr.bf16.mxu0 0
    %760 = vmatpush1.bf16.msra.mxu0 %v737
    %761 = vmatprep.subr.bf16.mxu0 0
    %762 = vmatpush1.bf16.msra.mxu0 %v738
    %763 = vmatprep.subr.bf16.mxu0 0
    %764 = vmatpush1.bf16.msra.mxu0 0
    %765 = vmatprep.subr.bf16.mxu0 0
    %766 = vmatpush1.bf16.msra.mxu0 0
    %767 = vmatprep.subr.bf16.mxu0 0
    %768 = vmatpush1.bf16.msra.mxu0 0
    %769 = vmatprep.subr.bf16.mxu0 0
    %770 = vmatpush1.bf16.msra.mxu0 0
    %771 = vmatprep.subr.bf16.mxu0 0
    %772 = vmatpush1.bf16.msra.mxu0 0
    %773 = vmatprep.subr.bf16.mxu0 0
    %774 = vmatpush1.bf16.msra.mxu0 0
    %775 = vmatprep.subr.bf16.mxu0 0
    %776 = vmatpush1.bf16.msra.mxu0 0
    %777 = vmatprep.subr.bf16.mxu0 0
    %778 = vmatpush1.bf16.msra.mxu0 0
    %779 = vmatprep.mubr.bf16.mxu0 0
    %780 = vmatmul.mubr.bf16.gmra.mrb[0].mxu0 %v697
    %v781 = vpop.f32.mrb[0].mxu0
    %v782 = vadd.f32 0.0, %v781
    %v783 = vpop.f32.mrb[0].mxu0
    %v784 = vpop.f32.mrb[0].mxu0
    %v785 = vadd.f32 0.0, %v784
    %v786 = vpop.f32.mrb[0].mxu0
    %787 = vmatprep.mubr.bf16.mxu0 0
    %788 = vmatmul.mubr.bf16.gmra.mrb[0].mxu0 %v698
    %v789 = vpop.f32.mrb[0].mxu0
    %v790 = vadd.f32 0.0, %v789
    %v791 = vpop.f32.mrb[0].mxu0
    %v792 = vpop.f32.mrb[0].mxu0
    %v793 = vadd.f32 0.0, %v792
    %v794 = vpop.f32.mrb[0].mxu0
    %795 = vdwg.mxu0
    %v796 = vld [vmem:[%s1] sm:$0xff]
    %v797 = vld [vmem:[%s1 + $0x8] sm:$0xff]
    %v798 = vld [vmem:[%s1 + $0x10] sm:$0xff]
    %v799 = vld [vmem:[%s1 + $0x18] sm:$0xff]
    %v800 = vld [vmem:[%s7 + $0x8] sm:$0x1]
    %802 = vset.pattern.permute.xlu0 0
    %803 = vperm.xlu0 %802, %v796
    %v804 = vpop.permute.xlu0 %803
    %807 = vset.pattern.permute.xlu0 0
    %808 = vperm.xlu0 %807, %v797
    %v809 = vpop.permute.xlu0 %808
    %812 = vset.pattern.permute.xlu0 0
    %813 = vperm.xlu0 %812, %v798
    %v814 = vpop.permute.xlu0 %813
    %817 = vset.pattern.permute.xlu0 0
    %818 = vperm.xlu0 %817, %v799
    %v819 = vpop.permute.xlu0 %818
    %v821 = vlaneseq
    %v822 = vshrl.u32 %v821, 7
    %v823 = vsub.s32 0, %v822
    %v824 = vrot.slane %v800, %v823
    %v825 = vmul.f32 %v804, %v824
    %v826 = vmul.f32 %v809, %v824
    %v827 = vmul.f32 %v814, %v824
    %v828 = vmul.f32 %v819, %v824
    %v829 = vadd.f32 %v782, %v825
    %v830 = vadd.f32 %v785, %v826
    %v831 = vadd.f32 %v790, %v827
    %v832 = vadd.f32 %v793, %v828
    %v833 = vld [vmem:[%s2] sm:$0xff]
    %v834 = vld [vmem:[%s2 + $0x8] sm:$0xff]
    %v835 = vld [vmem:[%s2 + $0x10] sm:$0xff]
    %v836 = vld [vmem:[%s2 + $0x18] sm:$0xff]
    %v837 = vld [vmem:[%s7 + $0x9] sm:$0x1]
    %839 = vset.pattern.permute.xlu0 0
    %840 = vperm.xlu0 %839, %v833
    %v841 = vpop.permute.xlu0 %840
    %844 = vset.pattern.permute.xlu0 0
    %845 = vperm.xlu0 %844, %v834
    %v846 = vpop.permute.xlu0 %845
    %849 = vset.pattern.permute.xlu0 0
    %850 = vperm.xlu0 %849, %v835
    %v851 = vpop.permute.xlu0 %850
    %854 = vset.pattern.permute.xlu0 0
    %855 = vperm.xlu0 %854, %v836
    %v856 = vpop.permute.xlu0 %855
    %v858 = vlaneseq
    %v859 = vshrl.u32 %v858, 7
    %v860 = vsub.s32 0, %v859
    %v861 = vrot.slane %v837, %v860
    %v862 = vmul.f32 %v841, %v861
    %v863 = vmul.f32 %v846, %v861
    %v864 = vmul.f32 %v851, %v861
    %v865 = vmul.f32 %v856, %v861
    %v866 = vadd.f32 %v829, %v862
    %v867 = vadd.f32 %v830, %v863
    %v868 = vadd.f32 %v831, %v864
    %v869 = vadd.f32 %v832, %v865
    %v870 = vld [vmem:[%s7 + $0x7] sm:$0x1]
    %v871 = vlaneseq
    %v872 = vshrl.u32 %v871, 7
    %v873 = vsub.s32 0, %v872
    %v874 = vrot.slane %v870, %v873
    %v875 = vadd.f32 %v866, %v874
    %v876 = vadd.f32 %v867, %v874
    %v877 = vadd.f32 %v868, %v874
    %v878 = vadd.f32 %v869, %v874
    %v879 = vtanh.pop %v875
    %v880 = vtanh.pop %v876
    %v881 = vtanh.pop %v877
    %v882 = vtanh.pop %v878
    %s883 = scalar_lea.vmem [#allocation2], 256
    %v884 = vld [vmem:[%s883] sm:$0xf]
    %v885 = vld [vmem:[%s883 + $0x4] sm:$0xf]
    %v886 = vld [vmem:[%s883 + $0x8] sm:$0xf]
    %v887 = vld [vmem:[%s883 + $0xc] sm:$0xf]
    %v888 = vld [vmem:[%s883 + $0x10] sm:$0xf]
    %v889 = vld [vmem:[%s883 + $0x14] sm:$0xf]
    %v890 = vld [vmem:[%s883 + $0x18] sm:$0xf]
    %v891 = vld [vmem:[%s883 + $0x1c] sm:$0xf]
    %v892 = vld [vmem:[%s883 + $0x20] sm:$0xf]
    %v893 = vld [vmem:[%s883 + $0x24] sm:$0xf]
    %v894 = vld [vmem:[%s883 + $0x28] sm:$0xf]
    %v895 = vld [vmem:[%s883 + $0x2c] sm:$0xf]
    %v896 = vld [vmem:[%s883 + $0x30] sm:$0xf]
    %v897 = vld [vmem:[%s883 + $0x34] sm:$0xf]
    %v898 = vld [vmem:[%s883 + $0x38] sm:$0xf]
    %v899 = vld [vmem:[%s883 + $0x3c] sm:$0xf]
    %v900 = vpack.c.bf16 %v880, %v879
    %v901 = vpack.c.bf16 %v882, %v881
    %v918 = vunpack.c.l.b16 %v884
    %v919 = vunpack.c.l.b16 %v885
    %v920 = vunpack.c.l.b16 %v886
    %v921 = vunpack.c.l.b16 %v887
    %v922 = vunpack.c.l.b16 %v888
    %v923 = vunpack.c.l.b16 %v889
    %v924 = vunpack.c.l.b16 %v890
    %v925 = vunpack.c.l.b16 %v891
    %v926 = vunpack.c.l.b16 %v892
    %v927 = vunpack.c.l.b16 %v893
    %v928 = vunpack.c.l.b16 %v894
    %v929 = vunpack.c.l.b16 %v895
    %v930 = vunpack.c.l.b16 %v896
    %v931 = vunpack.c.l.b16 %v897
    %v932 = vunpack.c.l.b16 %v898
    %v933 = vunpack.c.l.b16 %v899
    %v934 = vpack.c.b16 %v919, %v918
    %v935 = vpack.c.b16 %v921, %v920
    %v936 = vpack.c.b16 %v923, %v922
    %v937 = vpack.c.b16 %v925, %v924
    %v938 = vpack.c.b16 %v927, %v926
    %v939 = vpack.c.b16 %v929, %v928
    %v940 = vpack.c.b16 %v931, %v930
    %v941 = vpack.c.b16 %v933, %v932
    %950 = vmatprep.subr.bf16.mxu0 0
    %951 = vmatpush1.bf16.msra.mxu0 %v934
    %952 = vmatprep.subr.bf16.mxu0 0
    %953 = vmatpush1.bf16.msra.mxu0 %v935
    %954 = vmatprep.subr.bf16.mxu0 0
    %955 = vmatpush1.bf16.msra.mxu0 %v936
    %956 = vmatprep.subr.bf16.mxu0 0
    %957 = vmatpush1.bf16.msra.mxu0 %v937
    %958 = vmatprep.subr.bf16.mxu0 0
    %959 = vmatpush1.bf16.msra.mxu0 %v938
    %960 = vmatprep.subr.bf16.mxu0 0
    %961 = vmatpush1.bf16.msra.mxu0 %v939
    %962 = vmatprep.subr.bf16.mxu0 0
    %963 = vmatpush1.bf16.msra.mxu0 %v940
    %964 = vmatprep.subr.bf16.mxu0 0
    %965 = vmatpush1.bf16.msra.mxu0 %v941
    %966 = vmatprep.subr.bf16.mxu0 0
    %967 = vmatpush1.bf16.msra.mxu0 0
    %968 = vmatprep.subr.bf16.mxu0 0
    %969 = vmatpush1.bf16.msra.mxu0 0
    %970 = vmatprep.subr.bf16.mxu0 0
    %971 = vmatpush1.bf16.msra.mxu0 0
    %972 = vmatprep.subr.bf16.mxu0 0
    %973 = vmatpush1.bf16.msra.mxu0 0
    %974 = vmatprep.subr.bf16.mxu0 0
    %975 = vmatpush1.bf16.msra.mxu0 0
    %976 = vmatprep.subr.bf16.mxu0 0
    %977 = vmatpush1.bf16.msra.mxu0 0
    %978 = vmatprep.subr.bf16.mxu0 0
    %979 = vmatpush1.bf16.msra.mxu0 0
    %980 = vmatprep.subr.bf16.mxu0 0
    %981 = vmatpush1.bf16.msra.mxu0 0
    %982 = vmatprep.mubr.bf16.mxu0 0
    %983 = vmatmul.mubr.bf16.gmra.mrb[0].mxu0 %v900
    %v984 = vpop.f32.mrb[0].mxu0
    %v985 = vadd.f32 0.0, %v984
    %v986 = vpop.f32.mrb[0].mxu0
    %v987 = vpop.f32.mrb[0].mxu0
    %v988 = vadd.f32 0.0, %v987
    %v989 = vpop.f32.mrb[0].mxu0
    %990 = vmatprep.mubr.bf16.mxu0 0
    %991 = vmatmul.mubr.bf16.gmra.mrb[0].mxu0 %v901
    %v992 = vpop.f32.mrb[0].mxu0
    %v993 = vadd.f32 0.0, %v992
    %v994 = vpop.f32.mrb[0].mxu0
    %v995 = vpop.f32.mrb[0].mxu0
    %v996 = vadd.f32 0.0, %v995
    %v997 = vpop.f32.mrb[0].mxu0
    %998 = vdwg.mxu0
    %v999 = vld [vmem:[%s7 + $0xa] sm:$0x1]
    %v1000 = vlaneseq
    %v1001 = vshrl.u32 %v1000, 7
    %v1002 = vsub.s32 0, %v1001
    %v1003 = vrot.slane %v999, %v1002
    %v1004 = vadd.f32 %v985, %v1003
    %v1005 = vadd.f32 %v988, %v1003
    %v1006 = vadd.f32 %v993, %v1003
    %v1007 = vadd.f32 %v996, %v1003
    %v1008 = vtanh.pop %v1004
    %v1009 = vtanh.pop %v1005
    %v1010 = vtanh.pop %v1006
    %v1011 = vtanh.pop %v1007
    %s1012 = scalar_lea.vmem [#allocation2], 320
    %v1013 = vld [vmem:[%s1012] sm:$0xf]
    %v1014 = vld [vmem:[%s1012 + $0x4] sm:$0xf]
    %v1015 = vld [vmem:[%s1012 + $0x8] sm:$0xf]
    %v1016 = vld [vmem:[%s1012 + $0xc] sm:$0xf]
    %v1017 = vld [vmem:[%s1012 + $0x10] sm:$0xf]
    %v1018 = vld [vmem:[%s1012 + $0x14] sm:$0xf]
    %v1019 = vld [vmem:[%s1012 + $0x18] sm:$0xf]
    %v1020 = vld [vmem:[%s1012 + $0x1c] sm:$0xf]
    %v1021 = vld [vmem:[%s1012 + $0x20] sm:$0xf]
    %v1022 = vld [vmem:[%s1012 + $0x24] sm:$0xf]
    %v1023 = vld [vmem:[%s1012 + $0x28] sm:$0xf]
    %v1024 = vld [vmem:[%s1012 + $0x2c] sm:$0xf]
    %v1025 = vld [vmem:[%s1012 + $0x30] sm:$0xf]
    %v1026 = vld [vmem:[%s1012 + $0x34] sm:$0xf]
    %v1027 = vld [vmem:[%s1012 + $0x38] sm:$0xf]
    %v1028 = vld [vmem:[%s1012 + $0x3c] sm:$0xf]
    %v1029 = vpack.c.bf16 %v1009, %v1008
    %v1030 = vpack.c.bf16 %v1011, %v1010
    %v1047 = vunpack.c.l.b16 %v1013
    %v1048 = vunpack.c.l.b16 %v1014
    %v1049 = vunpack.c.l.b16 %v1015
    %v1050 = vunpack.c.l.b16 %v1016
    %v1051 = vunpack.c.l.b16 %v1017
    %v1052 = vunpack.c.l.b16 %v1018
    %v1053 = vunpack.c.l.b16 %v1019
    %v1054 = vunpack.c.l.b16 %v1020
    %v1055 = vunpack.c.l.b16 %v1021
    %v1056 = vunpack.c.l.b16 %v1022
    %v1057 = vunpack.c.l.b16 %v1023
    %v1058 = vunpack.c.l.b16 %v1024
    %v1059 = vunpack.c.l.b16 %v1025
    %v1060 = vunpack.c.l.b16 %v1026
    %v1061 = vunpack.c.l.b16 %v1027
    %v1062 = vunpack.c.l.b16 %v1028
    %v1063 = vpack.c.b16 %v1048, %v1047
    %v1064 = vpack.c.b16 %v1050, %v1049
    %v1065 = vpack.c.b16 %v1052, %v1051
    %v1066 = vpack.c.b16 %v1054, %v1053
    %v1067 = vpack.c.b16 %v1056, %v1055
    %v1068 = vpack.c.b16 %v1058, %v1057
    %v1069 = vpack.c.b16 %v1060, %v1059
    %v1070 = vpack.c.b16 %v1062, %v1061
    %1079 = vmatprep.subr.bf16.mxu0 0
    %1080 = vmatpush1.bf16.msra.mxu0 %v1063
    %1081 = vmatprep.subr.bf16.mxu0 0
    %1082 = vmatpush1.bf16.msra.mxu0 %v1064
    %1083 = vmatprep.subr.bf16.mxu0 0
    %1084 = vmatpush1.bf16.msra.mxu0 %v1065
    %1085 = vmatprep.subr.bf16.mxu0 0
    %1086 = vmatpush1.bf16.msra.mxu0 %v1066
    %1087 = vmatprep.subr.bf16.mxu0 0
    %1088 = vmatpush1.bf16.msra.mxu0 %v1067
    %1089 = vmatprep.subr.bf16.mxu0 0
    %1090 = vmatpush1.bf16.msra.mxu0 %v1068
    %1091 = vmatprep.subr.bf16.mxu0 0
    %1092 = vmatpush1.bf16.msra.mxu0 %v1069
    %1093 = vmatprep.subr.bf16.mxu0 0
    %1094 = vmatpush1.bf16.msra.mxu0 %v1070
    %1095 = vmatprep.subr.bf16.mxu0 0
    %1096 = vmatpush1.bf16.msra.mxu0 0
    %1097 = vmatprep.subr.bf16.mxu0 0
    %1098 = vmatpush1.bf16.msra.mxu0 0
    %1099 = vmatprep.subr.bf16.mxu0 0
    %1100 = vmatpush1.bf16.msra.mxu0 0
    %1101 = vmatprep.subr.bf16.mxu0 0
    %1102 = vmatpush1.bf16.msra.mxu0 0
    %1103 = vmatprep.subr.bf16.mxu0 0
    %1104 = vmatpush1.bf16.msra.mxu0 0
    %1105 = vmatprep.subr.bf16.mxu0 0
    %1106 = vmatpush1.bf16.msra.mxu0 0
    %1107 = vmatprep.subr.bf16.mxu0 0
    %1108 = vmatpush1.bf16.msra.mxu0 0
    %1109 = vmatprep.subr.bf16.mxu0 0
    %1110 = vmatpush1.bf16.msra.mxu0 0
    %1111 = vmatprep.mubr.bf16.mxu0 0
    %1112 = vmatmul.mubr.bf16.gmra.mrb[0].mxu0 %v1029
    %v1113 = vpop.f32.mrb[0].mxu0
    %v1114 = vadd.f32 0.0, %v1113
    %v1115 = vpop.f32.mrb[0].mxu0
    %v1116 = vpop.f32.mrb[0].mxu0
    %v1117 = vadd.f32 0.0, %v1116
    %v1118 = vpop.f32.mrb[0].mxu0
    %1119 = vmatprep.mubr.bf16.mxu0 0
    %1120 = vmatmul.mubr.bf16.gmra.mrb[0].mxu0 %v1030
    %v1121 = vpop.f32.mrb[0].mxu0
    %v1122 = vadd.f32 0.0, %v1121
    %v1123 = vpop.f32.mrb[0].mxu0
    %v1124 = vpop.f32.mrb[0].mxu0
    %v1125 = vadd.f32 0.0, %v1124
    %v1126 = vpop.f32.mrb[0].mxu0
    %1127 = vdwg.mxu0
    %v1128 = vld [vmem:[%s7 + $0xb] sm:$0x1]
    %v1129 = vlaneseq
    %v1130 = vshrl.u32 %v1129, 7
    %v1131 = vsub.s32 0, %v1130
    %v1132 = vrot.slane %v1128, %v1131
    %v1133 = vadd.f32 %v1114, %v1132
    %v1134 = vadd.f32 %v1117, %v1132
    %v1135 = vadd.f32 %v1122, %v1132
    %v1136 = vadd.f32 %v1125, %v1132
    %v1137 = vtanh.pop %v1133
    %v1138 = vtanh.pop %v1134
    %v1139 = vtanh.pop %v1135
    %v1140 = vtanh.pop %v1136
    %v1141 = vld [vmem:[%s3] sm:$0xff]
    %v1142 = vld [vmem:[%s3 + $0x8] sm:$0xff]
    %v1143 = vld [vmem:[%s3 + $0x10] sm:$0xff]
    %v1144 = vld [vmem:[%s3 + $0x18] sm:$0xff]
    %v1145 = vmul.f32 %v1141, 2.0
    %v1146 = vmul.f32 %v1142, 2.0
    %v1147 = vmul.f32 %v1143, 2.0
    %v1148 = vmul.f32 %v1144, 2.0
    %1150 = vset.pattern.permute.xlu0 0
    %1151 = vperm.xlu0 %1150, %v1145
    %v1152 = vpop.permute.xlu0 %1151
    %1155 = vset.pattern.permute.xlu0 0
    %1156 = vperm.xlu0 %1155, %v1146
    %v1157 = vpop.permute.xlu0 %1156
    %1160 = vset.pattern.permute.xlu0 0
    %1161 = vperm.xlu0 %1160, %v1147
    %v1162 = vpop.permute.xlu0 %1161
    %1165 = vset.pattern.permute.xlu0 0
    %1166 = vperm.xlu0 %1165, %v1148
    %v1167 = vpop.permute.xlu0 %1166
    %v1169 = vsub.f32 %v1137, %v1152
    %v1170 = vsub.f32 %v1138, %v1157
    %v1171 = vsub.f32 %v1139, %v1162
    %v1172 = vsub.f32 %v1140, %v1167
    %v1173 = vmax.f32 %v1169, %v1170
    %v1174 = vrot.slane %v1173, 4
    %v1175 = vmax.f32 %v1173, %v1174
    %v1176 = vrot.slane %v1175, 2
    %v1177 = vmax.f32 %v1175, %v1176
    %v1178 = vrot.slane %v1177, 1
    %v1179 = vmax.f32 %v1177, %v1178
    %v1180 = vmax.f32 %v1171, %v1172
    %v1181 = vrot.slane %v1180, 4
    %v1182 = vmax.f32 %v1180, %v1181
    %v1183 = vrot.slane %v1182, 2
    %v1184 = vmax.f32 %v1182, %v1183
    %v1185 = vrot.slane %v1184, 1
    %v1186 = vmax.f32 %v1184, %v1185
    %s1187 = scalar_lea.vmem [#allocation2], 384
    %v1188 = vld [vmem:[%s1187] sm:$0xf]
    %v1189 = vld [vmem:[%s1187 + $0x4] sm:$0xf]
    %v1190 = vld [vmem:[%s1187 + $0x8] sm:$0xf]
    %v1191 = vld [vmem:[%s1187 + $0xc] sm:$0xf]
    %v1192 = vld [vmem:[%s1187 + $0x10] sm:$0xf]
    %v1193 = vld [vmem:[%s1187 + $0x14] sm:$0xf]
    %v1194 = vld [vmem:[%s1187 + $0x18] sm:$0xf]
    %v1195 = vld [vmem:[%s1187 + $0x1c] sm:$0xf]
    %v1196 = vld [vmem:[%s1187 + $0x20] sm:$0xf]
    %v1197 = vld [vmem:[%s1187 + $0x24] sm:$0xf]
    %v1198 = vld [vmem:[%s1187 + $0x28] sm:$0xf]
    %v1199 = vld [vmem:[%s1187 + $0x2c] sm:$0xf]
    %v1200 = vld [vmem:[%s1187 + $0x30] sm:$0xf]
    %v1201 = vld [vmem:[%s1187 + $0x34] sm:$0xf]
    %v1202 = vld [vmem:[%s1187 + $0x38] sm:$0xf]
    %v1203 = vld [vmem:[%s1187 + $0x3c] sm:$0xf]
    %v1204 = vpack.c.bf16 %v1179, %v1179
    %v1205 = vpack.c.bf16 %v1186, %v1186
    %v1208 = vunpack.c.l.b16 %v1204
    %v1209 = vunpack.c.l.b16 %v1205
    %vm1210 = vcmask 1041409
    %v1211 = vsel %vm1210, %v1209, %v1208
    %v1212 = vpack.c.b16 %v1211, %v1211
    %v1230 = vunpack.c.l.b16 %v1188
    %v1231 = vunpack.c.l.b16 %v1189
    %v1232 = vunpack.c.l.b16 %v1190
    %v1233 = vunpack.c.l.b16 %v1191
    %v1234 = vunpack.c.l.b16 %v1192
    %v1235 = vunpack.c.l.b16 %v1193
    %v1236 = vunpack.c.l.b16 %v1194
    %v1237 = vunpack.c.l.b16 %v1195
    %v1238 = vunpack.c.l.b16 %v1196
    %v1239 = vunpack.c.l.b16 %v1197
    %v1240 = vunpack.c.l.b16 %v1198
    %v1241 = vunpack.c.l.b16 %v1199
    %v1242 = vunpack.c.l.b16 %v1200
    %v1243 = vunpack.c.l.b16 %v1201
    %v1244 = vunpack.c.l.b16 %v1202
    %v1245 = vunpack.c.l.b16 %v1203
    %v1246 = vpack.c.b16 %v1231, %v1230
    %v1247 = vpack.c.b16 %v1233, %v1232
    %v1248 = vpack.c.b16 %v1235, %v1234
    %v1249 = vpack.c.b16 %v1237, %v1236
    %v1250 = vpack.c.b16 %v1239, %v1238
    %v1251 = vpack.c.b16 %v1241, %v1240
    %v1252 = vpack.c.b16 %v1243, %v1242
    %v1253 = vpack.c.b16 %v1245, %v1244
    %1262 = vmatprep.subr.bf16.mxu0 0
    %1263 = vmatpush1.bf16.msra.mxu0 %v1246
    %1264 = vmatprep.subr.bf16.mxu0 0
    %1265 = vmatpush1.bf16.msra.mxu0 %v1247
    %1266 = vmatprep.subr.bf16.mxu0 0
    %1267 = vmatpush1.bf16.msra.mxu0 %v1248
    %1268 = vmatprep.subr.bf16.mxu0 0
    %1269 = vmatpush1.bf16.msra.mxu0 %v1249
    %1270 = vmatprep.subr.bf16.mxu0 0
    %1271 = vmatpush1.bf16.msra.mxu0 %v1250
    %1272 = vmatprep.subr.bf16.mxu0 0
    %1273 = vmatpush1.bf16.msra.mxu0 %v1251
    %1274 = vmatprep.subr.bf16.mxu0 0
    %1275 = vmatpush1.bf16.msra.mxu0 %v1252
    %1276 = vmatprep.subr.bf16.mxu0 0
    %1277 = vmatpush1.bf16.msra.mxu0 %v1253
    %1278 = vmatprep.subr.bf16.mxu0 0
    %1279 = vmatpush1.bf16.msra.mxu0 0
    %1280 = vmatprep.subr.bf16.mxu0 0
    %1281 = vmatpush1.bf16.msra.mxu0 0
    %1282 = vmatprep.subr.bf16.mxu0 0
    %1283 = vmatpush1.bf16.msra.mxu0 0
    %1284 = vmatprep.subr.bf16.mxu0 0
    %1285 = vmatpush1.bf16.msra.mxu0 0
    %1286 = vmatprep.subr.bf16.mxu0 0
    %1287 = vmatpush1.bf16.msra.mxu0 0
    %1288 = vmatprep.subr.bf16.mxu0 0
    %1289 = vmatpush1.bf16.msra.mxu0 0
    %1290 = vmatprep.subr.bf16.mxu0 0
    %1291 = vmatpush1.bf16.msra.mxu0 0
    %1292 = vmatprep.subr.bf16.mxu0 0
    %1293 = vmatpush1.bf16.msra.mxu0 0
    %1294 = vmatprep.mubr.bf16.mxu0 0
    %1295 = vmatmul.mubr.bf16.gmra.mrb[0].mxu0 %v1212
    %v1296 = vpop.f32.mrb[0].mxu0
    %v1297 = vadd.f32 0.0, %v1296
    %v1298 = vpop.f32.mrb[0].mxu0
    %v1299 = vpop.f32.mrb[0].mxu0
    %v1300 = vpop.f32.mrb[0].mxu0
    %1301 = vdwg.mxu0
    %s1302 = scalar_lea.vmem [#allocation2], 448
    %v1303 = vld [vmem:[%s1302] sm:$0xf]
    %v1304 = vld [vmem:[%s1302 + $0x4] sm:$0xf]
    %v1305 = vld [vmem:[%s1302 + $0x8] sm:$0xf]
    %v1306 = vld [vmem:[%s1302 + $0xc] sm:$0xf]
    %v1307 = vld [vmem:[%s1302 + $0x10] sm:$0xf]
    %v1308 = vld [vmem:[%s1302 + $0x14] sm:$0xf]
    %v1309 = vld [vmem:[%s1302 + $0x18] sm:$0xf]
    %v1310 = vld [vmem:[%s1302 + $0x1c] sm:$0xf]
    %v1311 = vld [vmem:[%s1302 + $0x20] sm:$0xf]
    %v1312 = vld [vmem:[%s1302 + $0x24] sm:$0xf]
    %v1313 = vld [vmem:[%s1302 + $0x28] sm:$0xf]
    %v1314 = vld [vmem:[%s1302 + $0x2c] sm:$0xf]
    %v1315 = vld [vmem:[%s1302 + $0x30] sm:$0xf]
    %v1316 = vld [vmem:[%s1302 + $0x34] sm:$0xf]
    %v1317 = vld [vmem:[%s1302 + $0x38] sm:$0xf]
    %v1318 = vld [vmem:[%s1302 + $0x3c] sm:$0xf]
    %v1319 = vpack.c.bf16 %v1138, %v1137
    %v1320 = vpack.c.bf16 %v1140, %v1139
    %v1337 = vunpack.c.l.b16 %v1303
    %v1338 = vunpack.c.l.b16 %v1304
    %v1339 = vunpack.c.l.b16 %v1305
    %v1340 = vunpack.c.l.b16 %v1306
    %v1341 = vunpack.c.l.b16 %v1307
    %v1342 = vunpack.c.l.b16 %v1308
    %v1343 = vunpack.c.l.b16 %v1309
    %v1344 = vunpack.c.l.b16 %v1310
    %v1345 = vunpack.c.l.b16 %v1311
    %v1346 = vunpack.c.l.b16 %v1312
    %v1347 = vunpack.c.l.b16 %v1313
    %v1348 = vunpack.c.l.b16 %v1314
    %v1349 = vunpack.c.l.b16 %v1315
    %v1350 = vunpack.c.l.b16 %v1316
    %v1351 = vunpack.c.l.b16 %v1317
    %v1352 = vunpack.c.l.b16 %v1318
    %v1353 = vpack.c.b16 %v1338, %v1337
    %v1354 = vpack.c.b16 %v1340, %v1339
    %v1355 = vpack.c.b16 %v1342, %v1341
    %v1356 = vpack.c.b16 %v1344, %v1343
    %v1357 = vpack.c.b16 %v1346, %v1345
    %v1358 = vpack.c.b16 %v1348, %v1347
    %v1359 = vpack.c.b16 %v1350, %v1349
    %v1360 = vpack.c.b16 %v1352, %v1351
    %1369 = vmatprep.subr.bf16.mxu0 0
    %1370 = vmatpush1.bf16.msra.mxu0 %v1353
    %1371 = vmatprep.subr.bf16.mxu0 0
    %1372 = vmatpush1.bf16.msra.mxu0 %v1354
    %1373 = vmatprep.subr.bf16.mxu0 0
    %1374 = vmatpush1.bf16.msra.mxu0 %v1355
    %1375 = vmatprep.subr.bf16.mxu0 0
    %1376 = vmatpush1.bf16.msra.mxu0 %v1356
    %1377 = vmatprep.subr.bf16.mxu0 0
    %1378 = vmatpush1.bf16.msra.mxu0 %v1357
    %1379 = vmatprep.subr.bf16.mxu0 0
    %1380 = vmatpush1.bf16.msra.mxu0 %v1358
    %1381 = vmatprep.subr.bf16.mxu0 0
    %1382 = vmatpush1.bf16.msra.mxu0 %v1359
    %1383 = vmatprep.subr.bf16.mxu0 0
    %1384 = vmatpush1.bf16.msra.mxu0 %v1360
    %1385 = vmatprep.subr.bf16.mxu0 0
    %1386 = vmatpush1.bf16.msra.mxu0 0
    %1387 = vmatprep.subr.bf16.mxu0 0
    %1388 = vmatpush1.bf16.msra.mxu0 0
    %1389 = vmatprep.subr.bf16.mxu0 0
    %1390 = vmatpush1.bf16.msra.mxu0 0
    %1391 = vmatprep.subr.bf16.mxu0 0
    %1392 = vmatpush1.bf16.msra.mxu0 0
    %1393 = vmatprep.subr.bf16.mxu0 0
    %1394 = vmatpush1.bf16.msra.mxu0 0
    %1395 = vmatprep.subr.bf16.mxu0 0
    %1396 = vmatpush1.bf16.msra.mxu0 0
    %1397 = vmatprep.subr.bf16.mxu0 0
    %1398 = vmatpush1.bf16.msra.mxu0 0
    %1399 = vmatprep.subr.bf16.mxu0 0
    %1400 = vmatpush1.bf16.msra.mxu0 0
    %1401 = vmatprep.mubr.bf16.mxu0 0
    %1402 = vmatmul.mubr.bf16.gmra.mrb[0].mxu0 %v1319
    %v1403 = vpop.f32.mrb[0].mxu0
    %v1404 = vadd.f32 0.0, %v1403
    %v1405 = vpop.f32.mrb[0].mxu0
    %v1406 = vpop.f32.mrb[0].mxu0
    %v1407 = vadd.f32 0.0, %v1406
    %v1408 = vpop.f32.mrb[0].mxu0
    %1409 = vmatprep.mubr.bf16.mxu0 0
    %1410 = vmatmul.mubr.bf16.gmra.mrb[0].mxu0 %v1320
    %v1411 = vpop.f32.mrb[0].mxu0
    %v1412 = vadd.f32 0.0, %v1411
    %v1413 = vpop.f32.mrb[0].mxu0
    %v1414 = vpop.f32.mrb[0].mxu0
    %v1415 = vadd.f32 0.0, %v1414
    %v1416 = vpop.f32.mrb[0].mxu0
    %1417 = vdwg.mxu0
    %v1420 = vunpack.c.l.s4 1966171168
    %v1421 = vunpack.c.0.s8 %v1420
    %v1422 = vlaneseq
    %v1423 = vshrl.u32 %v1422, 7
    %v1424 = vsub.s32 %v1421, %v1423
    %v1425 = vrot.slane %v1297, %v1424
    %v1426 = vcombine.high %v1425, %v1425
    %v1428 = vunpack.c.l.s4 1966171168
    %v1429 = vunpack.c.0.s8 %v1428
    %v1430 = vlaneseq
    %v1431 = vshrl.u32 %v1430, 7
    %v1432 = vsub.s32 %v1429, %v1431
    %v1433 = vrot.slane %v1425, %v1432
    %v1435 = vunpack.c.l.s4 1966171168
    %v1436 = vunpack.c.0.s8 %v1435
    %v1437 = vlaneseq
    %v1438 = vshrl.u32 %v1437, 7
    %v1439 = vsub.s32 %v1436, %v1438
    %v1440 = vrot.slane %v1426, %v1439
    %v1441 = vlaneseq
    %v1442 = vshrl.u32 %v1441, 7
    %v1443 = vsub.s32 0, %v1442
    %v1444 = vrot.slane %v1433, %v1443
    %v1445 = vlaneseq
    %v1446 = vshrl.u32 %v1445, 7
    %v1447 = vsub.s32 0, %v1446
    %v1448 = vrot.slane %v1440, %v1447
    %v1451 = vadd.f32 %v1404, %v1444
    %v1452 = vadd.f32 %v1407, %v1444
    %v1453 = vadd.f32 %v1412, %v1448
    %v1454 = vadd.f32 %v1415, %v1448
    %v1455 = vld [vmem:[%s7 + $0xc] sm:$0x1]
    %v1456 = vlaneseq
    %v1457 = vshrl.u32 %v1456, 7
    %v1458 = vsub.s32 0, %v1457
    %v1459 = vrot.slane %v1455, %v1458
    %v1460 = vadd.f32 %v1451, %v1459
    %v1461 = vadd.f32 %v1452, %v1459
    %v1462 = vadd.f32 %v1453, %v1459
    %v1463 = vadd.f32 %v1454, %v1459
    %v1464 = vtanh.pop %v1460
    %v1465 = vtanh.pop %v1461
    %v1466 = vtanh.pop %v1462
    %v1467 = vtanh.pop %v1463
    %s1468 = scalar_lea.vmem [#allocation2], 512
    %v1469 = vld [vmem:[%s1468] sm:$0xf]
    %v1470 = vld [vmem:[%s1468 + $0x4] sm:$0xf]
    %v1471 = vld [vmem:[%s1468 + $0x8] sm:$0xf]
    %v1472 = vld [vmem:[%s1468 + $0xc] sm:$0xf]
    %v1473 = vld [vmem:[%s1468 + $0x10] sm:$0xf]
    %v1474 = vld [vmem:[%s1468 + $0x14] sm:$0xf]
    %v1475 = vld [vmem:[%s1468 + $0x18] sm:$0xf]
    %v1476 = vld [vmem:[%s1468 + $0x1c] sm:$0xf]
    %v1477 = vld [vmem:[%s1468 + $0x20] sm:$0xf]
    %v1478 = vld [vmem:[%s1468 + $0x24] sm:$0xf]
    %v1479 = vld [vmem:[%s1468 + $0x28] sm:$0xf]
    %v1480 = vld [vmem:[%s1468 + $0x2c] sm:$0xf]
    %v1481 = vld [vmem:[%s1468 + $0x30] sm:$0xf]
    %v1482 = vld [vmem:[%s1468 + $0x34] sm:$0xf]
    %v1483 = vld [vmem:[%s1468 + $0x38] sm:$0xf]
    %v1484 = vld [vmem:[%s1468 + $0x3c] sm:$0xf]
    %v1485 = vpack.c.bf16 %v1465, %v1464
    %v1486 = vpack.c.bf16 %v1467, %v1466
    %v1503 = vunpack.c.l.b16 %v1469
    %v1504 = vunpack.c.l.b16 %v1470
    %v1505 = vunpack.c.l.b16 %v1471
    %v1506 = vunpack.c.l.b16 %v1472
    %v1507 = vunpack.c.l.b16 %v1473
    %v1508 = vunpack.c.l.b16 %v1474
    %v1509 = vunpack.c.l.b16 %v1475
    %v1510 = vunpack.c.l.b16 %v1476
    %v1511 = vunpack.c.l.b16 %v1477
    %v1512 = vunpack.c.l.b16 %v1478
    %v1513 = vunpack.c.l.b16 %v1479
    %v1514 = vunpack.c.l.b16 %v1480
    %v1515 = vunpack.c.l.b16 %v1481
    %v1516 = vunpack.c.l.b16 %v1482
    %v1517 = vunpack.c.l.b16 %v1483
    %v1518 = vunpack.c.l.b16 %v1484
    %v1519 = vpack.c.b16 %v1504, %v1503
    %v1520 = vpack.c.b16 %v1506, %v1505
    %v1521 = vpack.c.b16 %v1508, %v1507
    %v1522 = vpack.c.b16 %v1510, %v1509
    %v1523 = vpack.c.b16 %v1512, %v1511
    %v1524 = vpack.c.b16 %v1514, %v1513
    %v1525 = vpack.c.b16 %v1516, %v1515
    %v1526 = vpack.c.b16 %v1518, %v1517
    %1535 = vmatprep.subr.bf16.mxu0 0
    %1536 = vmatpush1.bf16.msra.mxu0 %v1519
    %1537 = vmatprep.subr.bf16.mxu0 0
    %1538 = vmatpush1.bf16.msra.mxu0 %v1520
    %1539 = vmatprep.subr.bf16.mxu0 0
    %1540 = vmatpush1.bf16.msra.mxu0 %v1521
    %1541 = vmatprep.subr.bf16.mxu0 0
    %1542 = vmatpush1.bf16.msra.mxu0 %v1522
    %1543 = vmatprep.subr.bf16.mxu0 0
    %1544 = vmatpush1.bf16.msra.mxu0 %v1523
    %1545 = vmatprep.subr.bf16.mxu0 0
    %1546 = vmatpush1.bf16.msra.mxu0 %v1524
    %1547 = vmatprep.subr.bf16.mxu0 0
    %1548 = vmatpush1.bf16.msra.mxu0 %v1525
    %1549 = vmatprep.subr.bf16.mxu0 0
    %1550 = vmatpush1.bf16.msra.mxu0 %v1526
    %1551 = vmatprep.subr.bf16.mxu0 0
    %1552 = vmatpush1.bf16.msra.mxu0 0
    %1553 = vmatprep.subr.bf16.mxu0 0
    %1554 = vmatpush1.bf16.msra.mxu0 0
    %1555 = vmatprep.subr.bf16.mxu0 0
    %1556 = vmatpush1.bf16.msra.mxu0 0
    %1557 = vmatprep.subr.bf16.mxu0 0
    %1558 = vmatpush1.bf16.msra.mxu0 0
    %1559 = vmatprep.subr.bf16.mxu0 0
    %1560 = vmatpush1.bf16.msra.mxu0 0
    %1561 = vmatprep.subr.bf16.mxu0 0
    %1562 = vmatpush1.bf16.msra.mxu0 0
    %1563 = vmatprep.subr.bf16.mxu0 0
    %1564 = vmatpush1.bf16.msra.mxu0 0
    %1565 = vmatprep.subr.bf16.mxu0 0
    %1566 = vmatpush1.bf16.msra.mxu0 0
    %1567 = vmatprep.mubr.bf16.mxu0 0
    %1568 = vmatmul.mubr.bf16.gmra.mrb[0].mxu0 %v1485
    %v1569 = vpop.f32.mrb[0].mxu0
    %v1570 = vadd.f32 0.0, %v1569
    %v1571 = vpop.f32.mrb[0].mxu0
    %v1572 = vpop.f32.mrb[0].mxu0
    %v1573 = vadd.f32 0.0, %v1572
    %v1574 = vpop.f32.mrb[0].mxu0
    %1575 = vmatprep.mubr.bf16.mxu0 0
    %1576 = vmatmul.mubr.bf16.gmra.mrb[0].mxu0 %v1486
    %v1577 = vpop.f32.mrb[0].mxu0
    %v1578 = vadd.f32 0.0, %v1577
    %v1579 = vpop.f32.mrb[0].mxu0
    %v1580 = vpop.f32.mrb[0].mxu0
    %v1581 = vadd.f32 0.0, %v1580
    %v1582 = vpop.f32.mrb[0].mxu0
    %1583 = vdwg.mxu0
    %v1584 = vld [vmem:[%s7 + $0xd] sm:$0x1]
    %v1585 = vlaneseq
    %v1586 = vshrl.u32 %v1585, 7
    %v1587 = vsub.s32 0, %v1586
    %v1588 = vrot.slane %v1584, %v1587
    %v1589 = vadd.f32 %v1570, %v1588
    %v1590 = vadd.f32 %v1573, %v1588
    %v1591 = vadd.f32 %v1578, %v1588
    %v1592 = vadd.f32 %v1581, %v1588
    %v1593 = vtanh.pop %v1589
    %v1594 = vtanh.pop %v1590
    %v1595 = vtanh.pop %v1591
    %v1596 = vtanh.pop %v1592
    %s1597 = scalar_lea.vmem [#allocation2], 576
    %v1598 = vld [vmem:[%s1597] sm:$0xf]
    %v1599 = vld [vmem:[%s1597 + $0x4] sm:$0xf]
    %v1600 = vld [vmem:[%s1597 + $0x8] sm:$0xf]
    %v1601 = vld [vmem:[%s1597 + $0xc] sm:$0xf]
    %v1602 = vld [vmem:[%s1597 + $0x10] sm:$0xf]
    %v1603 = vld [vmem:[%s1597 + $0x14] sm:$0xf]
    %v1604 = vld [vmem:[%s1597 + $0x18] sm:$0xf]
    %v1605 = vld [vmem:[%s1597 + $0x1c] sm:$0xf]
    %v1606 = vld [vmem:[%s1597 + $0x20] sm:$0xf]
    %v1607 = vld [vmem:[%s1597 + $0x24] sm:$0xf]
    %v1608 = vld [vmem:[%s1597 + $0x28] sm:$0xf]
    %v1609 = vld [vmem:[%s1597 + $0x2c] sm:$0xf]
    %v1610 = vld [vmem:[%s1597 + $0x30] sm:$0xf]
    %v1611 = vld [vmem:[%s1597 + $0x34] sm:$0xf]
    %v1612 = vld [vmem:[%s1597 + $0x38] sm:$0xf]
    %v1613 = vld [vmem:[%s1597 + $0x3c] sm:$0xf]
    %v1614 = vpack.c.bf16 %v1594, %v1593
    %v1615 = vpack.c.bf16 %v1596, %v1595
    %v1632 = vunpack.c.l.b16 %v1598
    %v1633 = vunpack.c.l.b16 %v1599
    %v1634 = vunpack.c.l.b16 %v1600
    %v1635 = vunpack.c.l.b16 %v1601
    %v1636 = vunpack.c.l.b16 %v1602
    %v1637 = vunpack.c.l.b16 %v1603
    %v1638 = vunpack.c.l.b16 %v1604
    %v1639 = vunpack.c.l.b16 %v1605
    %v1640 = vunpack.c.l.b16 %v1606
    %v1641 = vunpack.c.l.b16 %v1607
    %v1642 = vunpack.c.l.b16 %v1608
    %v1643 = vunpack.c.l.b16 %v1609
    %v1644 = vunpack.c.l.b16 %v1610
    %v1645 = vunpack.c.l.b16 %v1611
    %v1646 = vunpack.c.l.b16 %v1612
    %v1647 = vunpack.c.l.b16 %v1613
    %v1648 = vpack.c.b16 %v1633, %v1632
    %v1649 = vpack.c.b16 %v1635, %v1634
    %v1650 = vpack.c.b16 %v1637, %v1636
    %v1651 = vpack.c.b16 %v1639, %v1638
    %v1652 = vpack.c.b16 %v1641, %v1640
    %v1653 = vpack.c.b16 %v1643, %v1642
    %v1654 = vpack.c.b16 %v1645, %v1644
    %v1655 = vpack.c.b16 %v1647, %v1646
    %1664 = vmatprep.subr.bf16.mxu0 0
    %1665 = vmatpush1.bf16.msra.mxu0 %v1648
    %1666 = vmatprep.subr.bf16.mxu0 0
    %1667 = vmatpush1.bf16.msra.mxu0 %v1649
    %1668 = vmatprep.subr.bf16.mxu0 0
    %1669 = vmatpush1.bf16.msra.mxu0 %v1650
    %1670 = vmatprep.subr.bf16.mxu0 0
    %1671 = vmatpush1.bf16.msra.mxu0 %v1651
    %1672 = vmatprep.subr.bf16.mxu0 0
    %1673 = vmatpush1.bf16.msra.mxu0 %v1652
    %1674 = vmatprep.subr.bf16.mxu0 0
    %1675 = vmatpush1.bf16.msra.mxu0 %v1653
    %1676 = vmatprep.subr.bf16.mxu0 0
    %1677 = vmatpush1.bf16.msra.mxu0 %v1654
    %1678 = vmatprep.subr.bf16.mxu0 0
    %1679 = vmatpush1.bf16.msra.mxu0 %v1655
    %1680 = vmatprep.subr.bf16.mxu0 0
    %1681 = vmatpush1.bf16.msra.mxu0 0
    %1682 = vmatprep.subr.bf16.mxu0 0
    %1683 = vmatpush1.bf16.msra.mxu0 0
    %1684 = vmatprep.subr.bf16.mxu0 0
    %1685 = vmatpush1.bf16.msra.mxu0 0
    %1686 = vmatprep.subr.bf16.mxu0 0
    %1687 = vmatpush1.bf16.msra.mxu0 0
    %1688 = vmatprep.subr.bf16.mxu0 0
    %1689 = vmatpush1.bf16.msra.mxu0 0
    %1690 = vmatprep.subr.bf16.mxu0 0
    %1691 = vmatpush1.bf16.msra.mxu0 0
    %1692 = vmatprep.subr.bf16.mxu0 0
    %1693 = vmatpush1.bf16.msra.mxu0 0
    %1694 = vmatprep.subr.bf16.mxu0 0
    %1695 = vmatpush1.bf16.msra.mxu0 0
    %1696 = vmatprep.mubr.bf16.mxu0 0
    %1697 = vmatmul.mubr.bf16.gmra.mrb[0].mxu0 %v1614
    %v1698 = vpop.f32.mrb[0].mxu0
    %v1699 = vadd.f32 0.0, %v1698
    %v1700 = vpop.f32.mrb[0].mxu0
    %v1701 = vpop.f32.mrb[0].mxu0
    %v1702 = vadd.f32 0.0, %v1701
    %v1703 = vpop.f32.mrb[0].mxu0
    %1704 = vmatprep.mubr.bf16.mxu0 0
    %1705 = vmatmul.mubr.bf16.gmra.mrb[0].mxu0 %v1615
    %v1706 = vpop.f32.mrb[0].mxu0
    %v1707 = vadd.f32 0.0, %v1706
    %v1708 = vpop.f32.mrb[0].mxu0
    %v1709 = vpop.f32.mrb[0].mxu0
    %v1710 = vadd.f32 0.0, %v1709
    %v1711 = vpop.f32.mrb[0].mxu0
    %1712 = vdwg.mxu0
    %v1713 = vld [vmem:[%s7 + $0xe] sm:$0x1]
    %v1714 = vlaneseq
    %v1715 = vshrl.u32 %v1714, 7
    %v1716 = vsub.s32 0, %v1715
    %v1717 = vrot.slane %v1713, %v1716
    %v1718 = vadd.f32 %v1699, %v1717
    %v1719 = vadd.f32 %v1702, %v1717
    %v1720 = vadd.f32 %v1707, %v1717
    %v1721 = vadd.f32 %v1710, %v1717
    %v1722 = vtanh.pop %v1718
    %v1723 = vtanh.pop %v1719
    %v1724 = vtanh.pop %v1720
    %v1725 = vtanh.pop %v1721
    %v1726 = vsub.f32 %v1722, %v1152
    %v1727 = vsub.f32 %v1723, %v1157
    %v1728 = vsub.f32 %v1724, %v1162
    %v1729 = vsub.f32 %v1725, %v1167
    %v1730 = vmax.f32 %v1726, %v1727
    %v1731 = vrot.slane %v1730, 4
    %v1732 = vmax.f32 %v1730, %v1731
    %v1733 = vrot.slane %v1732, 2
    %v1734 = vmax.f32 %v1732, %v1733
    %v1735 = vrot.slane %v1734, 1
    %v1736 = vmax.f32 %v1734, %v1735
    %v1737 = vmax.f32 %v1728, %v1729
    %v1738 = vrot.slane %v1737, 4
    %v1739 = vmax.f32 %v1737, %v1738
    %v1740 = vrot.slane %v1739, 2
    %v1741 = vmax.f32 %v1739, %v1740
    %v1742 = vrot.slane %v1741, 1
    %v1743 = vmax.f32 %v1741, %v1742
    %s1744 = scalar_lea.vmem [#allocation2], 640
    %v1745 = vld [vmem:[%s1744] sm:$0xf]
    %v1746 = vld [vmem:[%s1744 + $0x4] sm:$0xf]
    %v1747 = vld [vmem:[%s1744 + $0x8] sm:$0xf]
    %v1748 = vld [vmem:[%s1744 + $0xc] sm:$0xf]
    %v1749 = vld [vmem:[%s1744 + $0x10] sm:$0xf]
    %v1750 = vld [vmem:[%s1744 + $0x14] sm:$0xf]
    %v1751 = vld [vmem:[%s1744 + $0x18] sm:$0xf]
    %v1752 = vld [vmem:[%s1744 + $0x1c] sm:$0xf]
    %v1753 = vld [vmem:[%s1744 + $0x20] sm:$0xf]
    %v1754 = vld [vmem:[%s1744 + $0x24] sm:$0xf]
    %v1755 = vld [vmem:[%s1744 + $0x28] sm:$0xf]
    %v1756 = vld [vmem:[%s1744 + $0x2c] sm:$0xf]
    %v1757 = vld [vmem:[%s1744 + $0x30] sm:$0xf]
    %v1758 = vld [vmem:[%s1744 + $0x34] sm:$0xf]
    %v1759 = vld [vmem:[%s1744 + $0x38] sm:$0xf]
    %v1760 = vld [vmem:[%s1744 + $0x3c] sm:$0xf]
    %v1761 = vpack.c.bf16 %v1736, %v1736
    %v1762 = vpack.c.bf16 %v1743, %v1743
    %v1765 = vunpack.c.l.b16 %v1761
    %v1766 = vunpack.c.l.b16 %v1762
    %v1767 = vsel %vm1210, %v1766, %v1765
    %v1768 = vpack.c.b16 %v1767, %v1767
    %v1786 = vunpack.c.l.b16 %v1745
    %v1787 = vunpack.c.l.b16 %v1746
    %v1788 = vunpack.c.l.b16 %v1747
    %v1789 = vunpack.c.l.b16 %v1748
    %v1790 = vunpack.c.l.b16 %v1749
    %v1791 = vunpack.c.l.b16 %v1750
    %v1792 = vunpack.c.l.b16 %v1751
    %v1793 = vunpack.c.l.b16 %v1752
    %v1794 = vunpack.c.l.b16 %v1753
    %v1795 = vunpack.c.l.b16 %v1754
    %v1796 = vunpack.c.l.b16 %v1755
    %v1797 = vunpack.c.l.b16 %v1756
    %v1798 = vunpack.c.l.b16 %v1757
    %v1799 = vunpack.c.l.b16 %v1758
    %v1800 = vunpack.c.l.b16 %v1759
    %v1801 = vunpack.c.l.b16 %v1760
    %v1802 = vpack.c.b16 %v1787, %v1786
    %v1803 = vpack.c.b16 %v1789, %v1788
    %v1804 = vpack.c.b16 %v1791, %v1790
    %v1805 = vpack.c.b16 %v1793, %v1792
    %v1806 = vpack.c.b16 %v1795, %v1794
    %v1807 = vpack.c.b16 %v1797, %v1796
    %v1808 = vpack.c.b16 %v1799, %v1798
    %v1809 = vpack.c.b16 %v1801, %v1800
    %1818 = vmatprep.subr.bf16.mxu0 0
    %1819 = vmatpush1.bf16.msra.mxu0 %v1802
    %1820 = vmatprep.subr.bf16.mxu0 0
    %1821 = vmatpush1.bf16.msra.mxu0 %v1803
    %1822 = vmatprep.subr.bf16.mxu0 0
    %1823 = vmatpush1.bf16.msra.mxu0 %v1804
    %1824 = vmatprep.subr.bf16.mxu0 0
    %1825 = vmatpush1.bf16.msra.mxu0 %v1805
    %1826 = vmatprep.subr.bf16.mxu0 0
    %1827 = vmatpush1.bf16.msra.mxu0 %v1806
    %1828 = vmatprep.subr.bf16.mxu0 0
    %1829 = vmatpush1.bf16.msra.mxu0 %v1807
    %1830 = vmatprep.subr.bf16.mxu0 0
    %1831 = vmatpush1.bf16.msra.mxu0 %v1808
    %1832 = vmatprep.subr.bf16.mxu0 0
    %1833 = vmatpush1.bf16.msra.mxu0 %v1809
    %1834 = vmatprep.subr.bf16.mxu0 0
    %1835 = vmatpush1.bf16.msra.mxu0 0
    %1836 = vmatprep.subr.bf16.mxu0 0
    %1837 = vmatpush1.bf16.msra.mxu0 0
    %1838 = vmatprep.subr.bf16.mxu0 0
    %1839 = vmatpush1.bf16.msra.mxu0 0
    %1840 = vmatprep.subr.bf16.mxu0 0
    %1841 = vmatpush1.bf16.msra.mxu0 0
    %1842 = vmatprep.subr.bf16.mxu0 0
    %1843 = vmatpush1.bf16.msra.mxu0 0
    %1844 = vmatprep.subr.bf16.mxu0 0
    %1845 = vmatpush1.bf16.msra.mxu0 0
    %1846 = vmatprep.subr.bf16.mxu0 0
    %1847 = vmatpush1.bf16.msra.mxu0 0
    %1848 = vmatprep.subr.bf16.mxu0 0
    %1849 = vmatpush1.bf16.msra.mxu0 0
    %1850 = vmatprep.mubr.bf16.mxu0 0
    %1851 = vmatmul.mubr.bf16.gmra.mrb[0].mxu0 %v1768
    %v1852 = vpop.f32.mrb[0].mxu0
    %v1853 = vadd.f32 0.0, %v1852
    %v1854 = vpop.f32.mrb[0].mxu0
    %v1855 = vpop.f32.mrb[0].mxu0
    %v1856 = vpop.f32.mrb[0].mxu0
    %1857 = vdwg.mxu0
    %s1858 = scalar_lea.vmem [#allocation2], 704
    %v1859 = vld [vmem:[%s1858] sm:$0xf]
    %v1860 = vld [vmem:[%s1858 + $0x4] sm:$0xf]
    %v1861 = vld [vmem:[%s1858 + $0x8] sm:$0xf]
    %v1862 = vld [vmem:[%s1858 + $0xc] sm:$0xf]
    %v1863 = vld [vmem:[%s1858 + $0x10] sm:$0xf]
    %v1864 = vld [vmem:[%s1858 + $0x14] sm:$0xf]
    %v1865 = vld [vmem:[%s1858 + $0x18] sm:$0xf]
    %v1866 = vld [vmem:[%s1858 + $0x1c] sm:$0xf]
    %v1867 = vld [vmem:[%s1858 + $0x20] sm:$0xf]
    %v1868 = vld [vmem:[%s1858 + $0x24] sm:$0xf]
    %v1869 = vld [vmem:[%s1858 + $0x28] sm:$0xf]
    %v1870 = vld [vmem:[%s1858 + $0x2c] sm:$0xf]
    %v1871 = vld [vmem:[%s1858 + $0x30] sm:$0xf]
    %v1872 = vld [vmem:[%s1858 + $0x34] sm:$0xf]
    %v1873 = vld [vmem:[%s1858 + $0x38] sm:$0xf]
    %v1874 = vld [vmem:[%s1858 + $0x3c] sm:$0xf]
    %v1875 = vpack.c.bf16 %v1723, %v1722
    %v1876 = vpack.c.bf16 %v1725, %v1724
    %v1893 = vunpack.c.l.b16 %v1859
    %v1894 = vunpack.c.l.b16 %v1860
    %v1895 = vunpack.c.l.b16 %v1861
    %v1896 = vunpack.c.l.b16 %v1862
    %v1897 = vunpack.c.l.b16 %v1863
    %v1898 = vunpack.c.l.b16 %v1864
    %v1899 = vunpack.c.l.b16 %v1865
    %v1900 = vunpack.c.l.b16 %v1866
    %v1901 = vunpack.c.l.b16 %v1867
    %v1902 = vunpack.c.l.b16 %v1868
    %v1903 = vunpack.c.l.b16 %v1869
    %v1904 = vunpack.c.l.b16 %v1870
    %v1905 = vunpack.c.l.b16 %v1871
    %v1906 = vunpack.c.l.b16 %v1872
    %v1907 = vunpack.c.l.b16 %v1873
    %v1908 = vunpack.c.l.b16 %v1874
    %v1909 = vpack.c.b16 %v1894, %v1893
    %v1910 = vpack.c.b16 %v1896, %v1895
    %v1911 = vpack.c.b16 %v1898, %v1897
    %v1912 = vpack.c.b16 %v1900, %v1899
    %v1913 = vpack.c.b16 %v1902, %v1901
    %v1914 = vpack.c.b16 %v1904, %v1903
    %v1915 = vpack.c.b16 %v1906, %v1905
    %v1916 = vpack.c.b16 %v1908, %v1907
    %1925 = vmatprep.subr.bf16.mxu0 0
    %1926 = vmatpush1.bf16.msra.mxu0 %v1909
    %1927 = vmatprep.subr.bf16.mxu0 0
    %1928 = vmatpush1.bf16.msra.mxu0 %v1910
    %1929 = vmatprep.subr.bf16.mxu0 0
    %1930 = vmatpush1.bf16.msra.mxu0 %v1911
    %1931 = vmatprep.subr.bf16.mxu0 0
    %1932 = vmatpush1.bf16.msra.mxu0 %v1912
    %1933 = vmatprep.subr.bf16.mxu0 0
    %1934 = vmatpush1.bf16.msra.mxu0 %v1913
    %1935 = vmatprep.subr.bf16.mxu0 0
    %1936 = vmatpush1.bf16.msra.mxu0 %v1914
    %1937 = vmatprep.subr.bf16.mxu0 0
    %1938 = vmatpush1.bf16.msra.mxu0 %v1915
    %1939 = vmatprep.subr.bf16.mxu0 0
    %1940 = vmatpush1.bf16.msra.mxu0 %v1916
    %1941 = vmatprep.subr.bf16.mxu0 0
    %1942 = vmatpush1.bf16.msra.mxu0 0
    %1943 = vmatprep.subr.bf16.mxu0 0
    %1944 = vmatpush1.bf16.msra.mxu0 0
    %1945 = vmatprep.subr.bf16.mxu0 0
    %1946 = vmatpush1.bf16.msra.mxu0 0
    %1947 = vmatprep.subr.bf16.mxu0 0
    %1948 = vmatpush1.bf16.msra.mxu0 0
    %1949 = vmatprep.subr.bf16.mxu0 0
    %1950 = vmatpush1.bf16.msra.mxu0 0
    %1951 = vmatprep.subr.bf16.mxu0 0
    %1952 = vmatpush1.bf16.msra.mxu0 0
    %1953 = vmatprep.subr.bf16.mxu0 0
    %1954 = vmatpush1.bf16.msra.mxu0 0
    %1955 = vmatprep.subr.bf16.mxu0 0
    %1956 = vmatpush1.bf16.msra.mxu0 0
    %1957 = vmatprep.mubr.bf16.mxu0 0
    %1958 = vmatmul.mubr.bf16.gmra.mrb[0].mxu0 %v1875
    %v1959 = vpop.f32.mrb[0].mxu0
    %v1960 = vadd.f32 0.0, %v1959
    %v1961 = vpop.f32.mrb[0].mxu0
    %v1962 = vpop.f32.mrb[0].mxu0
    %v1963 = vadd.f32 0.0, %v1962
    %v1964 = vpop.f32.mrb[0].mxu0
    %1965 = vmatprep.mubr.bf16.mxu0 0
    %1966 = vmatmul.mubr.bf16.gmra.mrb[0].mxu0 %v1876
    %v1967 = vpop.f32.mrb[0].mxu0
    %v1968 = vadd.f32 0.0, %v1967
    %v1969 = vpop.f32.mrb[0].mxu0
    %v1970 = vpop.f32.mrb[0].mxu0
    %v1971 = vadd.f32 0.0, %v1970
    %v1972 = vpop.f32.mrb[0].mxu0
    %1973 = vdwg.mxu0
    %v1976 = vunpack.c.l.s4 1966171168
    %v1977 = vunpack.c.0.s8 %v1976
    %v1978 = vlaneseq
    %v1979 = vshrl.u32 %v1978, 7
    %v1980 = vsub.s32 %v1977, %v1979
    %v1981 = vrot.slane %v1853, %v1980
    %v1982 = vcombine.high %v1981, %v1981
    %v1984 = vunpack.c.l.s4 1966171168
    %v1985 = vunpack.c.0.s8 %v1984
    %v1986 = vlaneseq
    %v1987 = vshrl.u32 %v1986, 7
    %v1988 = vsub.s32 %v1985, %v1987
    %v1989 = vrot.slane %v1981, %v1988
    %v1991 = vunpack.c.l.s4 1966171168
    %v1992 = vunpack.c.0.s8 %v1991
    %v1993 = vlaneseq
    %v1994 = vshrl.u32 %v1993, 7
    %v1995 = vsub.s32 %v1992, %v1994
    %v1996 = vrot.slane %v1982, %v1995
    %v1997 = vlaneseq
    %v1998 = vshrl.u32 %v1997, 7
    %v1999 = vsub.s32 0, %v1998
    %v2000 = vrot.slane %v1989, %v1999
    %v2001 = vlaneseq
    %v2002 = vshrl.u32 %v2001, 7
    %v2003 = vsub.s32 0, %v2002
    %v2004 = vrot.slane %v1996, %v2003
    %v2007 = vadd.f32 %v1960, %v2000
    %v2008 = vadd.f32 %v1963, %v2000
    %v2009 = vadd.f32 %v1968, %v2004
    %v2010 = vadd.f32 %v1971, %v2004
    %v2011 = vld [vmem:[%s7 + $0xf] sm:$0x1]
    %v2012 = vlaneseq
    %v2013 = vshrl.u32 %v2012, 7
    %v2014 = vsub.s32 0, %v2013
    %v2015 = vrot.slane %v2011, %v2014
    %v2016 = vadd.f32 %v2007, %v2015
    %v2017 = vadd.f32 %v2008, %v2015
    %v2018 = vadd.f32 %v2009, %v2015
    %v2019 = vadd.f32 %v2010, %v2015
    %v2020 = vtanh.pop %v2016
    %v2021 = vtanh.pop %v2017
    %v2022 = vtanh.pop %v2018
    %v2023 = vtanh.pop %v2019
    %s2024 = scalar_lea.vmem [#allocation2], 768
    %v2025 = vld [vmem:[%s2024] sm:$0xf]
    %v2026 = vld [vmem:[%s2024 + $0x4] sm:$0xf]
    %v2027 = vld [vmem:[%s2024 + $0x8] sm:$0xf]
    %v2028 = vld [vmem:[%s2024 + $0xc] sm:$0xf]
    %v2029 = vld [vmem:[%s2024 + $0x10] sm:$0xf]
    %v2030 = vld [vmem:[%s2024 + $0x14] sm:$0xf]
    %v2031 = vld [vmem:[%s2024 + $0x18] sm:$0xf]
    %v2032 = vld [vmem:[%s2024 + $0x1c] sm:$0xf]
    %v2033 = vld [vmem:[%s2024 + $0x20] sm:$0xf]
    %v2034 = vld [vmem:[%s2024 + $0x24] sm:$0xf]
    %v2035 = vld [vmem:[%s2024 + $0x28] sm:$0xf]
    %v2036 = vld [vmem:[%s2024 + $0x2c] sm:$0xf]
    %v2037 = vld [vmem:[%s2024 + $0x30] sm:$0xf]
    %v2038 = vld [vmem:[%s2024 + $0x34] sm:$0xf]
    %v2039 = vld [vmem:[%s2024 + $0x38] sm:$0xf]
    %v2040 = vld [vmem:[%s2024 + $0x3c] sm:$0xf]
    %v2041 = vpack.c.bf16 %v2021, %v2020
    %v2042 = vpack.c.bf16 %v2023, %v2022
    %v2059 = vunpack.c.l.b16 %v2025
    %v2060 = vunpack.c.l.b16 %v2026
    %v2061 = vunpack.c.l.b16 %v2027
    %v2062 = vunpack.c.l.b16 %v2028
    %v2063 = vunpack.c.l.b16 %v2029
    %v2064 = vunpack.c.l.b16 %v2030
    %v2065 = vunpack.c.l.b16 %v2031
    %v2066 = vunpack.c.l.b16 %v2032
    %v2067 = vunpack.c.l.b16 %v2033
    %v2068 = vunpack.c.l.b16 %v2034
    %v2069 = vunpack.c.l.b16 %v2035
    %v2070 = vunpack.c.l.b16 %v2036
    %v2071 = vunpack.c.l.b16 %v2037
    %v2072 = vunpack.c.l.b16 %v2038
    %v2073 = vunpack.c.l.b16 %v2039
    %v2074 = vunpack.c.l.b16 %v2040
    %v2075 = vpack.c.b16 %v2060, %v2059
    %v2076 = vpack.c.b16 %v2062, %v2061
    %v2077 = vpack.c.b16 %v2064, %v2063
    %v2078 = vpack.c.b16 %v2066, %v2065
    %v2079 = vpack.c.b16 %v2068, %v2067
    %v2080 = vpack.c.b16 %v2070, %v2069
    %v2081 = vpack.c.b16 %v2072, %v2071
    %v2082 = vpack.c.b16 %v2074, %v2073
    %2091 = vmatprep.subr.bf16.mxu0 0
    %2092 = vmatpush1.bf16.msra.mxu0 %v2075
    %2093 = vmatprep.subr.bf16.mxu0 0
    %2094 = vmatpush1.bf16.msra.mxu0 %v2076
    %2095 = vmatprep.subr.bf16.mxu0 0
    %2096 = vmatpush1.bf16.msra.mxu0 %v2077
    %2097 = vmatprep.subr.bf16.mxu0 0
    %2098 = vmatpush1.bf16.msra.mxu0 %v2078
    %2099 = vmatprep.subr.bf16.mxu0 0
    %2100 = vmatpush1.bf16.msra.mxu0 %v2079
    %2101 = vmatprep.subr.bf16.mxu0 0
    %2102 = vmatpush1.bf16.msra.mxu0 %v2080
    %2103 = vmatprep.subr.bf16.mxu0 0
    %2104 = vmatpush1.bf16.msra.mxu0 %v2081
    %2105 = vmatprep.subr.bf16.mxu0 0
    %2106 = vmatpush1.bf16.msra.mxu0 %v2082
    %2107 = vmatprep.subr.bf16.mxu0 0
    %2108 = vmatpush1.bf16.msra.mxu0 0
    %2109 = vmatprep.subr.bf16.mxu0 0
    %2110 = vmatpush1.bf16.msra.mxu0 0
    %2111 = vmatprep.subr.bf16.mxu0 0
    %2112 = vmatpush1.bf16.msra.mxu0 0
    %2113 = vmatprep.subr.bf16.mxu0 0
    %2114 = vmatpush1.bf16.msra.mxu0 0
    %2115 = vmatprep.subr.bf16.mxu0 0
    %2116 = vmatpush1.bf16.msra.mxu0 0
    %2117 = vmatprep.subr.bf16.mxu0 0
    %2118 = vmatpush1.bf16.msra.mxu0 0
    %2119 = vmatprep.subr.bf16.mxu0 0
    %2120 = vmatpush1.bf16.msra.mxu0 0
    %2121 = vmatprep.subr.bf16.mxu0 0
    %2122 = vmatpush1.bf16.msra.mxu0 0
    %2123 = vmatprep.mubr.bf16.mxu0 0
    %2124 = vmatmul.mubr.bf16.gmra.mrb[0].mxu0 %v2041
    %v2125 = vpop.f32.mrb[0].mxu0
    %v2126 = vadd.f32 0.0, %v2125
    %v2127 = vpop.f32.mrb[0].mxu0
    %v2128 = vpop.f32.mrb[0].mxu0
    %v2129 = vadd.f32 0.0, %v2128
    %v2130 = vpop.f32.mrb[0].mxu0
    %2131 = vmatprep.mubr.bf16.mxu0 0
    %2132 = vmatmul.mubr.bf16.gmra.mrb[0].mxu0 %v2042
    %v2133 = vpop.f32.mrb[0].mxu0
    %v2134 = vadd.f32 0.0, %v2133
    %v2135 = vpop.f32.mrb[0].mxu0
    %v2136 = vpop.f32.mrb[0].mxu0
    %v2137 = vadd.f32 0.0, %v2136
    %v2138 = vpop.f32.mrb[0].mxu0
    %2139 = vdwg.mxu0
    %v2140 = vld [vmem:[%s7 + $0x10] sm:$0x1]
    %v2141 = vlaneseq
    %v2142 = vshrl.u32 %v2141, 7
    %v2143 = vsub.s32 0, %v2142
    %v2144 = vrot.slane %v2140, %v2143
    %v2145 = vadd.f32 %v2126, %v2144
    %v2146 = vadd.f32 %v2129, %v2144
    %v2147 = vadd.f32 %v2134, %v2144
    %v2148 = vadd.f32 %v2137, %v2144
    %v2149 = vtanh.pop %v2145
    %v2150 = vtanh.pop %v2146
    %v2151 = vtanh.pop %v2147
    %v2152 = vtanh.pop %v2148
    %s2153 = scalar_lea.vmem [#allocation2], 832
    %v2154 = vld [vmem:[%s2153] sm:$0xf]
    %v2155 = vld [vmem:[%s2153 + $0x4] sm:$0xf]
    %v2156 = vld [vmem:[%s2153 + $0x8] sm:$0xf]
    %v2157 = vld [vmem:[%s2153 + $0xc] sm:$0xf]
    %v2158 = vld [vmem:[%s2153 + $0x10] sm:$0xf]
    %v2159 = vld [vmem:[%s2153 + $0x14] sm:$0xf]
    %v2160 = vld [vmem:[%s2153 + $0x18] sm:$0xf]
    %v2161 = vld [vmem:[%s2153 + $0x1c] sm:$0xf]
    %v2162 = vld [vmem:[%s2153 + $0x20] sm:$0xf]
    %v2163 = vld [vmem:[%s2153 + $0x24] sm:$0xf]
    %v2164 = vld [vmem:[%s2153 + $0x28] sm:$0xf]
    %v2165 = vld [vmem:[%s2153 + $0x2c] sm:$0xf]
    %v2166 = vld [vmem:[%s2153 + $0x30] sm:$0xf]
    %v2167 = vld [vmem:[%s2153 + $0x34] sm:$0xf]
    %v2168 = vld [vmem:[%s2153 + $0x38] sm:$0xf]
    %v2169 = vld [vmem:[%s2153 + $0x3c] sm:$0xf]
    %v2170 = vpack.c.bf16 %v2150, %v2149
    %v2171 = vpack.c.bf16 %v2152, %v2151
    %v2188 = vunpack.c.l.b16 %v2154
    %v2189 = vunpack.c.l.b16 %v2155
    %v2190 = vunpack.c.l.b16 %v2156
    %v2191 = vunpack.c.l.b16 %v2157
    %v2192 = vunpack.c.l.b16 %v2158
    %v2193 = vunpack.c.l.b16 %v2159
    %v2194 = vunpack.c.l.b16 %v2160
    %v2195 = vunpack.c.l.b16 %v2161
    %v2196 = vunpack.c.l.b16 %v2162
    %v2197 = vunpack.c.l.b16 %v2163
    %v2198 = vunpack.c.l.b16 %v2164
    %v2199 = vunpack.c.l.b16 %v2165
    %v2200 = vunpack.c.l.b16 %v2166
    %v2201 = vunpack.c.l.b16 %v2167
    %v2202 = vunpack.c.l.b16 %v2168
    %v2203 = vunpack.c.l.b16 %v2169
    %v2204 = vpack.c.b16 %v2189, %v2188
    %v2205 = vpack.c.b16 %v2191, %v2190
    %v2206 = vpack.c.b16 %v2193, %v2192
    %v2207 = vpack.c.b16 %v2195, %v2194
    %v2208 = vpack.c.b16 %v2197, %v2196
    %v2209 = vpack.c.b16 %v2199, %v2198
    %v2210 = vpack.c.b16 %v2201, %v2200
    %v2211 = vpack.c.b16 %v2203, %v2202
    %2220 = vmatprep.subr.bf16.mxu0 0
    %2221 = vmatpush1.bf16.msra.mxu0 %v2204
    %2222 = vmatprep.subr.bf16.mxu0 0
    %2223 = vmatpush1.bf16.msra.mxu0 %v2205
    %2224 = vmatprep.subr.bf16.mxu0 0
    %2225 = vmatpush1.bf16.msra.mxu0 %v2206
    %2226 = vmatprep.subr.bf16.mxu0 0
    %2227 = vmatpush1.bf16.msra.mxu0 %v2207
    %2228 = vmatprep.subr.bf16.mxu0 0
    %2229 = vmatpush1.bf16.msra.mxu0 %v2208
    %2230 = vmatprep.subr.bf16.mxu0 0
    %2231 = vmatpush1.bf16.msra.mxu0 %v2209
    %2232 = vmatprep.subr.bf16.mxu0 0
    %2233 = vmatpush1.bf16.msra.mxu0 %v2210
    %2234 = vmatprep.subr.bf16.mxu0 0
    %2235 = vmatpush1.bf16.msra.mxu0 %v2211
    %2236 = vmatprep.subr.bf16.mxu0 0
    %2237 = vmatpush1.bf16.msra.mxu0 0
    %2238 = vmatprep.subr.bf16.mxu0 0
    %2239 = vmatpush1.bf16.msra.mxu0 0
    %2240 = vmatprep.subr.bf16.mxu0 0
    %2241 = vmatpush1.bf16.msra.mxu0 0
    %2242 = vmatprep.subr.bf16.mxu0 0
    %2243 = vmatpush1.bf16.msra.mxu0 0
    %2244 = vmatprep.subr.bf16.mxu0 0
    %2245 = vmatpush1.bf16.msra.mxu0 0
    %2246 = vmatprep.subr.bf16.mxu0 0
    %2247 = vmatpush1.bf16.msra.mxu0 0
    %2248 = vmatprep.subr.bf16.mxu0 0
    %2249 = vmatpush1.bf16.msra.mxu0 0
    %2250 = vmatprep.subr.bf16.mxu0 0
    %2251 = vmatpush1.bf16.msra.mxu0 0
    %2252 = vmatprep.mubr.bf16.mxu0 0
    %2253 = vmatmul.mubr.bf16.gmra.mrb[0].mxu0 %v2170
    %v2254 = vpop.f32.mrb[0].mxu0
    %v2255 = vadd.f32 0.0, %v2254
    %v2256 = vpop.f32.mrb[0].mxu0
    %v2257 = vpop.f32.mrb[0].mxu0
    %v2258 = vadd.f32 0.0, %v2257
    %v2259 = vpop.f32.mrb[0].mxu0
    %2260 = vmatprep.mubr.bf16.mxu0 0
    %2261 = vmatmul.mubr.bf16.gmra.mrb[0].mxu0 %v2171
    %v2262 = vpop.f32.mrb[0].mxu0
    %v2263 = vadd.f32 0.0, %v2262
    %v2264 = vpop.f32.mrb[0].mxu0
    %v2265 = vpop.f32.mrb[0].mxu0
    %v2266 = vadd.f32 0.0, %v2265
    %v2267 = vpop.f32.mrb[0].mxu0
    %2268 = vdwg.mxu0
    %v2269 = vld [vmem:[%s7 + $0x11] sm:$0x1]
    %v2270 = vlaneseq
    %v2271 = vshrl.u32 %v2270, 7
    %v2272 = vsub.s32 0, %v2271
    %v2273 = vrot.slane %v2269, %v2272
    %v2274 = vadd.f32 %v2255, %v2273
    %v2275 = vadd.f32 %v2258, %v2273
    %v2276 = vadd.f32 %v2263, %v2273
    %v2277 = vadd.f32 %v2266, %v2273
    %v2278 = vtanh.pop %v2274
    %v2279 = vtanh.pop %v2275
    %v2280 = vtanh.pop %v2276
    %v2281 = vtanh.pop %v2277
    %v2282 = vsub.f32 %v2278, %v1152
    %v2283 = vsub.f32 %v2279, %v1157
    %v2284 = vsub.f32 %v2280, %v1162
    %v2285 = vsub.f32 %v2281, %v1167
    %v2286 = vmax.f32 %v2282, %v2283
    %v2287 = vrot.slane %v2286, 4
    %v2288 = vmax.f32 %v2286, %v2287
    %v2289 = vrot.slane %v2288, 2
    %v2290 = vmax.f32 %v2288, %v2289
    %v2291 = vrot.slane %v2290, 1
    %v2292 = vmax.f32 %v2290, %v2291
    %v2293 = vmax.f32 %v2284, %v2285
    %v2294 = vrot.slane %v2293, 4
    %v2295 = vmax.f32 %v2293, %v2294
    %v2296 = vrot.slane %v2295, 2
    %v2297 = vmax.f32 %v2295, %v2296
    %v2298 = vrot.slane %v2297, 1
    %v2299 = vmax.f32 %v2297, %v2298
    %v2302 = vsel %vm1210, %v2299, %v2292
    %vm2304 = vcmask 123904
    %2305 = vst.msk [vmem:[#allocation5] sm:$0x3] %vm2304, %v2302
    %s2306 = scalar_lea.vmem [#allocation2], 960
    %v2307 = vld [vmem:[%s2306] sm:$0xf]
    %v2308 = vld [vmem:[%s2306 + $0x4] sm:$0xf]
    %v2309 = vld [vmem:[%s2306 + $0x8] sm:$0xf]
    %v2310 = vld [vmem:[%s2306 + $0xc] sm:$0xf]
    %v2311 = vld [vmem:[%s2306 + $0x10] sm:$0xf]
    %v2312 = vld [vmem:[%s2306 + $0x14] sm:$0xf]
    %v2313 = vld [vmem:[%s2306 + $0x18] sm:$0xf]
    %v2314 = vld [vmem:[%s2306 + $0x1c] sm:$0xf]
    %v2315 = vld [vmem:[%s2306 + $0x20] sm:$0xf]
    %v2316 = vld [vmem:[%s2306 + $0x24] sm:$0xf]
    %v2317 = vld [vmem:[%s2306 + $0x28] sm:$0xf]
    %v2318 = vld [vmem:[%s2306 + $0x2c] sm:$0xf]
    %v2319 = vld [vmem:[%s2306 + $0x30] sm:$0xf]
    %v2320 = vld [vmem:[%s2306 + $0x34] sm:$0xf]
    %v2321 = vld [vmem:[%s2306 + $0x38] sm:$0xf]
    %v2322 = vld [vmem:[%s2306 + $0x3c] sm:$0xf]
    %v2323 = vpack.c.bf16 %v2292, %v2292
    %v2324 = vpack.c.bf16 %v2299, %v2299
    %v2327 = vunpack.c.l.b16 %v2323
    %v2328 = vunpack.c.l.b16 %v2324
    %v2329 = vsel %vm1210, %v2328, %v2327
    %v2330 = vpack.c.b16 %v2329, %v2329
    %v2348 = vunpack.c.l.b16 %v2307
    %v2349 = vunpack.c.l.b16 %v2308
    %v2350 = vunpack.c.l.b16 %v2309
    %v2351 = vunpack.c.l.b16 %v2310
    %v2352 = vunpack.c.l.b16 %v2311
    %v2353 = vunpack.c.l.b16 %v2312
    %v2354 = vunpack.c.l.b16 %v2313
    %v2355 = vunpack.c.l.b16 %v2314
    %v2356 = vunpack.c.l.b16 %v2315
    %v2357 = vunpack.c.l.b16 %v2316
    %v2358 = vunpack.c.l.b16 %v2317
    %v2359 = vunpack.c.l.b16 %v2318
    %v2360 = vunpack.c.l.b16 %v2319
    %v2361 = vunpack.c.l.b16 %v2320
    %v2362 = vunpack.c.l.b16 %v2321
    %v2363 = vunpack.c.l.b16 %v2322
    %v2364 = vpack.c.b16 %v2349, %v2348
    %v2365 = vpack.c.b16 %v2351, %v2350
    %v2366 = vpack.c.b16 %v2353, %v2352
    %v2367 = vpack.c.b16 %v2355, %v2354
    %v2368 = vpack.c.b16 %v2357, %v2356
    %v2369 = vpack.c.b16 %v2359, %v2358
    %v2370 = vpack.c.b16 %v2361, %v2360
    %v2371 = vpack.c.b16 %v2363, %v2362
    %2380 = vmatprep.subr.bf16.mxu0 0
    %2381 = vmatpush1.bf16.msra.mxu0 %v2364
    %2382 = vmatprep.subr.bf16.mxu0 0
    %2383 = vmatpush1.bf16.msra.mxu0 %v2365
    %2384 = vmatprep.subr.bf16.mxu0 0
    %2385 = vmatpush1.bf16.msra.mxu0 %v2366
    %2386 = vmatprep.subr.bf16.mxu0 0
    %2387 = vmatpush1.bf16.msra.mxu0 %v2367
    %2388 = vmatprep.subr.bf16.mxu0 0
    %2389 = vmatpush1.bf16.msra.mxu0 %v2368
    %2390 = vmatprep.subr.bf16.mxu0 0
    %2391 = vmatpush1.bf16.msra.mxu0 %v2369
    %2392 = vmatprep.subr.bf16.mxu0 0
    %2393 = vmatpush1.bf16.msra.mxu0 %v2370
    %2394 = vmatprep.subr.bf16.mxu0 0
    %2395 = vmatpush1.bf16.msra.mxu0 %v2371
    %2396 = vmatprep.subr.bf16.mxu0 0
    %2397 = vmatpush1.bf16.msra.mxu0 0
    %2398 = vmatprep.subr.bf16.mxu0 0
    %2399 = vmatpush1.bf16.msra.mxu0 0
    %2400 = vmatprep.subr.bf16.mxu0 0
    %2401 = vmatpush1.bf16.msra.mxu0 0
    %2402 = vmatprep.subr.bf16.mxu0 0
    %2403 = vmatpush1.bf16.msra.mxu0 0
    %2404 = vmatprep.subr.bf16.mxu0 0
    %2405 = vmatpush1.bf16.msra.mxu0 0
    %2406 = vmatprep.subr.bf16.mxu0 0
    %2407 = vmatpush1.bf16.msra.mxu0 0
    %2408 = vmatprep.subr.bf16.mxu0 0
    %2409 = vmatpush1.bf16.msra.mxu0 0
    %2410 = vmatprep.subr.bf16.mxu0 0
    %2411 = vmatpush1.bf16.msra.mxu0 0
    %2412 = vmatprep.mubr.bf16.mxu0 0
    %2413 = vmatmul.mubr.bf16.gmra.mrb[0].mxu0 %v2330
    %v2414 = vpop.f32.mrb[0].mxu0
    %v2415 = vadd.f32 0.0, %v2414
    %v2416 = vpop.f32.mrb[0].mxu0
    %v2417 = vpop.f32.mrb[0].mxu0
    %v2418 = vpop.f32.mrb[0].mxu0
    %2419 = vdwg.mxu0
    %s2420 = scalar_lea.vmem [#allocation2], 896
    %v2421 = vld [vmem:[%s2420] sm:$0xf]
    %v2422 = vld [vmem:[%s2420 + $0x4] sm:$0xf]
    %v2423 = vld [vmem:[%s2420 + $0x8] sm:$0xf]
    %v2424 = vld [vmem:[%s2420 + $0xc] sm:$0xf]
    %v2425 = vld [vmem:[%s2420 + $0x10] sm:$0xf]
    %v2426 = vld [vmem:[%s2420 + $0x14] sm:$0xf]
    %v2427 = vld [vmem:[%s2420 + $0x18] sm:$0xf]
    %v2428 = vld [vmem:[%s2420 + $0x1c] sm:$0xf]
    %v2429 = vld [vmem:[%s2420 + $0x20] sm:$0xf]
    %v2430 = vld [vmem:[%s2420 + $0x24] sm:$0xf]
    %v2431 = vld [vmem:[%s2420 + $0x28] sm:$0xf]
    %v2432 = vld [vmem:[%s2420 + $0x2c] sm:$0xf]
    %v2433 = vld [vmem:[%s2420 + $0x30] sm:$0xf]
    %v2434 = vld [vmem:[%s2420 + $0x34] sm:$0xf]
    %v2435 = vld [vmem:[%s2420 + $0x38] sm:$0xf]
    %v2436 = vld [vmem:[%s2420 + $0x3c] sm:$0xf]
    %v2437 = vpack.c.bf16 %v679, %v678
    %v2454 = vunpack.c.l.b16 %v2421
    %v2455 = vunpack.c.l.b16 %v2422
    %v2456 = vunpack.c.l.b16 %v2423
    %v2457 = vunpack.c.l.b16 %v2424
    %v2458 = vunpack.c.l.b16 %v2425
    %v2459 = vunpack.c.l.b16 %v2426
    %v2460 = vunpack.c.l.b16 %v2427
    %v2461 = vunpack.c.l.b16 %v2428
    %v2462 = vunpack.c.l.b16 %v2429
    %v2463 = vunpack.c.l.b16 %v2430
    %v2464 = vunpack.c.l.b16 %v2431
    %v2465 = vunpack.c.l.b16 %v2432
    %v2466 = vunpack.c.l.b16 %v2433
    %v2467 = vunpack.c.l.b16 %v2434
    %v2468 = vunpack.c.l.b16 %v2435
    %v2469 = vunpack.c.l.b16 %v2436
    %v2470 = vpack.c.b16 %v2455, %v2454
    %v2471 = vpack.c.b16 %v2457, %v2456
    %v2472 = vpack.c.b16 %v2459, %v2458
    %v2473 = vpack.c.b16 %v2461, %v2460
    %v2474 = vpack.c.b16 %v2463, %v2462
    %v2475 = vpack.c.b16 %v2465, %v2464
    %v2476 = vpack.c.b16 %v2467, %v2466
    %v2477 = vpack.c.b16 %v2469, %v2468
    %2486 = vmatprep.subr.bf16.mxu0 0
    %2487 = vmatpush1.bf16.msra.mxu0 %v2470
    %2488 = vmatprep.subr.bf16.mxu0 0
    %2489 = vmatpush1.bf16.msra.mxu0 %v2471
    %2490 = vmatprep.subr.bf16.mxu0 0
    %2491 = vmatpush1.bf16.msra.mxu0 %v2472
    %2492 = vmatprep.subr.bf16.mxu0 0
    %2493 = vmatpush1.bf16.msra.mxu0 %v2473
    %2494 = vmatprep.subr.bf16.mxu0 0
    %2495 = vmatpush1.bf16.msra.mxu0 %v2474
    %2496 = vmatprep.subr.bf16.mxu0 0
    %2497 = vmatpush1.bf16.msra.mxu0 %v2475
    %2498 = vmatprep.subr.bf16.mxu0 0
    %2499 = vmatpush1.bf16.msra.mxu0 %v2476
    %2500 = vmatprep.subr.bf16.mxu0 0
    %2501 = vmatpush1.bf16.msra.mxu0 %v2477
    %2502 = vmatprep.subr.bf16.mxu0 0
    %2503 = vmatpush1.bf16.msra.mxu0 0
    %2504 = vmatprep.subr.bf16.mxu0 0
    %2505 = vmatpush1.bf16.msra.mxu0 0
    %2506 = vmatprep.subr.bf16.mxu0 0
    %2507 = vmatpush1.bf16.msra.mxu0 0
    %2508 = vmatprep.subr.bf16.mxu0 0
    %2509 = vmatpush1.bf16.msra.mxu0 0
    %2510 = vmatprep.subr.bf16.mxu0 0
    %2511 = vmatpush1.bf16.msra.mxu0 0
    %2512 = vmatprep.subr.bf16.mxu0 0
    %2513 = vmatpush1.bf16.msra.mxu0 0
    %2514 = vmatprep.subr.bf16.mxu0 0
    %2515 = vmatpush1.bf16.msra.mxu0 0
    %2516 = vmatprep.subr.bf16.mxu0 0
    %2517 = vmatpush1.bf16.msra.mxu0 0
    %2518 = vmatprep.mubr.bf16.mxu0 0
    %2519 = vmatmul.mubr.bf16.gmra.mrb[0].mxu0 %v2437
    %v2520 = vpop.f32.mrb[0].mxu0
    %v2521 = vadd.f32 0.0, %v2520
    %v2522 = vpop.f32.mrb[0].mxu0
    %v2523 = vpop.f32.mrb[0].mxu0
    %v2524 = vadd.f32 0.0, %v2523
    %v2525 = vpop.f32.mrb[0].mxu0
    %2526 = vdwg.mxu0
    %v2529 = vunpack.c.l.s4 1966171168
    %v2530 = vunpack.c.0.s8 %v2529
    %v2531 = vlaneseq
    %v2532 = vshrl.u32 %v2531, 7
    %v2533 = vsub.s32 %v2530, %v2532
    %v2534 = vrot.slane %v2415, %v2533
    %v2535 = vcombine.high %v2534, %v2534
    %v2537 = vunpack.c.l.s4 1966171168
    %v2538 = vunpack.c.0.s8 %v2537
    %v2539 = vlaneseq
    %v2540 = vshrl.u32 %v2539, 7
    %v2541 = vsub.s32 %v2538, %v2540
    %v2542 = vrot.slane %v2534, %v2541
    %v2544 = vunpack.c.l.s4 1966171168
    %v2545 = vunpack.c.0.s8 %v2544
    %v2546 = vlaneseq
    %v2547 = vshrl.u32 %v2546, 7
    %v2548 = vsub.s32 %v2545, %v2547
    %v2549 = vrot.slane %v2535, %v2548
    %v2550 = vlaneseq
    %v2551 = vshrl.u32 %v2550, 7
    %v2552 = vsub.s32 0, %v2551
    %v2553 = vrot.slane %v2542, %v2552
    %v2554 = vlaneseq
    %v2555 = vshrl.u32 %v2554, 7
    %v2556 = vsub.s32 0, %v2555
    %v2557 = vrot.slane %v2549, %v2556
    %v2560 = vadd.f32 %v2521, %v2553
    %v2561 = vadd.f32 %v2524, %v2557
    %v2562 = vld [vmem:[%s5] sm:$0xff]
    %v2563 = vld [vmem:[%s5 + $0x8] sm:$0xff]
    %v2564 = vld [vmem:[%s7 + $0x13] sm:$0x1]
    %2566 = vset.pattern.permute.xlu0 0
    %2567 = vperm.xlu0 %2566, %v2562
    %v2568 = vpop.permute.xlu0 %2567
    %2571 = vset.pattern.permute.xlu0 0
    %2572 = vperm.xlu0 %2571, %v2563
    %v2573 = vpop.permute.xlu0 %2572
    %v2575 = vlaneseq
    %v2576 = vshrl.u32 %v2575, 7
    %v2577 = vsub.s32 0, %v2576
    %v2578 = vrot.slane %v2564, %v2577
    %v2579 = vmul.f32 %v2568, %v2578
    %v2580 = vmul.f32 %v2573, %v2578
    %v2581 = vadd.f32 %v2560, %v2579
    %v2582 = vadd.f32 %v2561, %v2580
    %v2583 = vld [vmem:[%s7 + $0x12] sm:$0x1]
    %v2584 = vlaneseq
    %v2585 = vshrl.u32 %v2584, 7
    %v2586 = vsub.s32 0, %v2585
    %v2587 = vrot.slane %v2583, %v2586
    %v2588 = vadd.f32 %v2581, %v2587
    %v2589 = vadd.f32 %v2582, %v2587
    %v2590 = vmax.f32 %v2588, 0.0
    %v2591 = vmax.f32 %v2589, 0.0
    %s2592 = scalar_lea.vmem [#allocation2], 1024
    %v2593 = vld [vmem:[%s2592] sm:$0xf]
    %v2594 = vld [vmem:[%s2592 + $0x4] sm:$0xf]
    %v2595 = vld [vmem:[%s2592 + $0x8] sm:$0xf]
    %v2596 = vld [vmem:[%s2592 + $0xc] sm:$0xf]
    %v2597 = vld [vmem:[%s2592 + $0x10] sm:$0xf]
    %v2598 = vld [vmem:[%s2592 + $0x14] sm:$0xf]
    %v2599 = vld [vmem:[%s2592 + $0x18] sm:$0xf]
    %v2600 = vld [vmem:[%s2592 + $0x1c] sm:$0xf]
    %v2601 = vld [vmem:[%s2592 + $0x20] sm:$0xf]
    %v2602 = vld [vmem:[%s2592 + $0x24] sm:$0xf]
    %v2603 = vld [vmem:[%s2592 + $0x28] sm:$0xf]
    %v2604 = vld [vmem:[%s2592 + $0x2c] sm:$0xf]
    %v2605 = vld [vmem:[%s2592 + $0x30] sm:$0xf]
    %v2606 = vld [vmem:[%s2592 + $0x34] sm:$0xf]
    %v2607 = vld [vmem:[%s2592 + $0x38] sm:$0xf]
    %v2608 = vld [vmem:[%s2592 + $0x3c] sm:$0xf]
    %v2609 = vpack.c.bf16 %v2591, %v2590
    %v2626 = vunpack.c.l.b16 %v2593
    %v2627 = vunpack.c.l.b16 %v2594
    %v2628 = vunpack.c.l.b16 %v2595
    %v2629 = vunpack.c.l.b16 %v2596
    %v2630 = vunpack.c.l.b16 %v2597
    %v2631 = vunpack.c.l.b16 %v2598
    %v2632 = vunpack.c.l.b16 %v2599
    %v2633 = vunpack.c.l.b16 %v2600
    %v2634 = vunpack.c.l.b16 %v2601
    %v2635 = vunpack.c.l.b16 %v2602
    %v2636 = vunpack.c.l.b16 %v2603
    %v2637 = vunpack.c.l.b16 %v2604
    %v2638 = vunpack.c.l.b16 %v2605
    %v2639 = vunpack.c.l.b16 %v2606
    %v2640 = vunpack.c.l.b16 %v2607
    %v2641 = vunpack.c.l.b16 %v2608
    %v2642 = vpack.c.b16 %v2627, %v2626
    %v2643 = vpack.c.b16 %v2629, %v2628
    %v2644 = vpack.c.b16 %v2631, %v2630
    %v2645 = vpack.c.b16 %v2633, %v2632
    %v2646 = vpack.c.b16 %v2635, %v2634
    %v2647 = vpack.c.b16 %v2637, %v2636
    %v2648 = vpack.c.b16 %v2639, %v2638
    %v2649 = vpack.c.b16 %v2641, %v2640
    %2658 = vmatprep.subr.bf16.mxu0 0
    %2659 = vmatpush1.bf16.msra.mxu0 %v2642
    %2660 = vmatprep.subr.bf16.mxu0 0
    %2661 = vmatpush1.bf16.msra.mxu0 %v2643
    %2662 = vmatprep.subr.bf16.mxu0 0
    %2663 = vmatpush1.bf16.msra.mxu0 %v2644
    %2664 = vmatprep.subr.bf16.mxu0 0
    %2665 = vmatpush1.bf16.msra.mxu0 %v2645
    %2666 = vmatprep.subr.bf16.mxu0 0
    %2667 = vmatpush1.bf16.msra.mxu0 %v2646
    %2668 = vmatprep.subr.bf16.mxu0 0
    %2669 = vmatpush1.bf16.msra.mxu0 %v2647
    %2670 = vmatprep.subr.bf16.mxu0 0
    %2671 = vmatpush1.bf16.msra.mxu0 %v2648
    %2672 = vmatprep.subr.bf16.mxu0 0
    %2673 = vmatpush1.bf16.msra.mxu0 %v2649
    %2674 = vmatprep.subr.bf16.mxu0 0
    %2675 = vmatpush1.bf16.msra.mxu0 0
    %2676 = vmatprep.subr.bf16.mxu0 0
    %2677 = vmatpush1.bf16.msra.mxu0 0
    %2678 = vmatprep.subr.bf16.mxu0 0
    %2679 = vmatpush1.bf16.msra.mxu0 0
    %2680 = vmatprep.subr.bf16.mxu0 0
    %2681 = vmatpush1.bf16.msra.mxu0 0
    %2682 = vmatprep.subr.bf16.mxu0 0
    %2683 = vmatpush1.bf16.msra.mxu0 0
    %2684 = vmatprep.subr.bf16.mxu0 0
    %2685 = vmatpush1.bf16.msra.mxu0 0
    %2686 = vmatprep.subr.bf16.mxu0 0
    %2687 = vmatpush1.bf16.msra.mxu0 0
    %2688 = vmatprep.subr.bf16.mxu0 0
    %2689 = vmatpush1.bf16.msra.mxu0 0
    %2690 = vmatprep.mubr.bf16.mxu0 0
    %2691 = vmatmul.mubr.bf16.gmra.mrb[0].mxu0 %v2609
    %v2692 = vpop.f32.mrb[0].mxu0
    %v2693 = vadd.f32 0.0, %v2692
    %v2694 = vpop.f32.mrb[0].mxu0
    %v2695 = vpop.f32.mrb[0].mxu0
    %v2696 = vadd.f32 0.0, %v2695
    %v2697 = vpop.f32.mrb[0].mxu0
    %2698 = vdwg.mxu0
    %v2699 = vld [vmem:[%s7 + $0x14] sm:$0x1]
    %v2700 = vlaneseq
    %v2701 = vshrl.u32 %v2700, 7
    %v2702 = vsub.s32 0, %v2701
    %v2703 = vrot.slane %v2699, %v2702
    %v2704 = vadd.f32 %v2693, %v2703
    %v2705 = vadd.f32 %v2696, %v2703
    %v2706 = vmax.f32 %v2704, 0.0
    %v2707 = vmax.f32 %v2705, 0.0
    %v2708 = vld [vmem:[%s7 + $0x15] sm:$0x1]
    %v2709 = vlaneseq
    %v2710 = vshrl.u32 %v2709, 7
    %v2711 = vsub.s32 0, %v2710
    %v2712 = vrot.slane %v2708, %v2711
    %v2713 = vmul.f32 %v2706, %v2712
    %v2714 = vmul.f32 %v2707, %v2712
    %2715 = vadd.xlane.f32.xlu0 %v2713
    %v2716 = vpop.xlane.xlu0 %2715
    %2717 = vadd.xlane.f32.xlu0 %v2714
    %v2718 = vpop.xlane.xlu0 %2717
    %v2719 = vld [vmem:[%s7 + $0x16] sm:$0x1]
    %s2721 = vtos %v2719
    %v2722 = vstv %s2721
    %v2724 = vadd.f32 %v2716, %v2722
    %v2725 = vadd.f32 %v2718, %v2722
    %v2728 = vlaneseq
    %v2729 = vand.u32 %v2728, 127
    %v2730 = vlaneseq
    %v2731 = vshrl.u32 %v2730, 7
    %v2732 = vsub.s32 %v2729, %v2731
    %v2733 = vrot.slane %v2724, %v2732
    %v2734 = vlaneseq
    %v2735 = vshrl.u32 %v2734, 7
    %v2736 = vsub.s32 %v2729, %v2735
    %v2737 = vrot.slane %v2725, %v2736
    %v2738 = vsel %vm1210, %v2737, %v2733
    %vm2740 = vcmask 58368
    %2741 = vst.msk [vmem:[#allocation6] sm:$0x3] %vm2740, %v2738
    // Predicated region
    $region38: #{tpu_custom_call.1} parent=1 // pred_check
      _
    $region39: #{tpu_custom_call.1} parent=1 // pred_check_branch
      %2743 = sbr.rel (0) target = $region41
    $region40: #{tpu_custom_call.1} parent=1 // pred_region
      %s2745 = ssub.s32 32, 32
      %2746 = vsyncadd [#allocation4], %s2745
      %s2748 = sshll.u32 [#allocation5], 4
      %s2749 = int_to_ptr.vmem [resolvable:$true] %s2748
      %2751 = dma.vmem_to_hbm [thread:$0]  %s2749, 32, %s8, [#allocation4]
    $region41: #{tpu_custom_call.1} parent=1 // pred_fallthru
      _
    // Predicated region
    $region42: #{tpu_custom_call.1} parent=1 // pred_check
      _
    $region43: #{tpu_custom_call.1} parent=1 // pred_check_branch
      %2753 = sbr.rel (0) target = $region45
    $region44: #{tpu_custom_call.1} parent=1 // pred_region
      %s2755 = ssub.s32 32, 32
      %2756 = vsyncadd [#allocation7], %s2755
      %s2758 = sshll.u32 [#allocation6], 4
      %s2759 = int_to_ptr.vmem [resolvable:$true] %s2758
      %2761 = dma.vmem_to_hbm [thread:$0]  %s2759, 32, %s9, [#allocation7]
    $region45: #{tpu_custom_call.1} parent=1 // pred_fallthru
      _
    // Predicated region
    $region46: #{tpu_custom_call.1} parent=1 // pred_check
      _
    $region47: #{tpu_custom_call.1} parent=1 // pred_check_branch
      %2763 = sbr.rel (0) target = $region49
    $region48: #{tpu_custom_call.1} parent=1 // pred_region
      %2764 = dma.done [#allocation4], 32
    $region49: #{tpu_custom_call.1} parent=1 // pred_fallthru
      _
    // Predicated region
    $region50: #{tpu_custom_call.1} parent=1 // pred_check
      _
    $region51: #{tpu_custom_call.1} parent=1 // pred_check_branch
      %2766 = sbr.rel (0) target = $region53
    $region52: #{tpu_custom_call.1} parent=1 // pred_region
      %2767 = dma.done [#allocation7], 32
    $region53: #{tpu_custom_call.1} parent=1 // pred_fallthru
      _
    %2768 = vsyncpa [#allocation3], 1
    %2769 = vsyncpa [#allocation4], 1
    %2770 = vsyncpa [#allocation7], 1

</llo_original>
